<compile_context>
chip_gen: v6e
topology: v6e:2x2x1
jax: 0.10.0
libtpu: 0.0.40
codegen_flags: <defaults>
</compile_context>

<pallas_src>
import functools

import jax
import jax.numpy as jnp
from jax.experimental import pallas as pl
from jax.experimental.pallas import tpu as pltpu

_EPS = 1e-5


def _bottleneck_kernel(x_ref, w1_ref, b1_ref, w2_ref, b2_ref, w3_ref, b3_ref,
                       out_ref, *, H, Wp):
    """One (batch image n, row tile t) grid step.

    x_ref  : (1, (H+2)*Wp, Cin) bf16  zero-padded image, spatial dims flattened
                                      (1px halo; width padded to Wp, mult of 8)
    w1_ref : (Cin, P)      bf16  conv1 1x1 weight, BN1 scale folded in
    b1_ref : (1, P)        f32   BN1 bias
    w2_ref : (9*P, P)      bf16  conv2 3x3 weight as im2col matrix, BN2 folded
    b2_ref : (1, P)        f32   BN2 bias
    w3_ref : (P, Cout)     bf16  conv3 1x1 weight, BN3 scale folded in
    b3_ref : (1, Cout)     f32   BN3 bias
    out_ref: (1, TH, W, Cout) f32
    """
    t = pl.program_id(1)
    TH, W, Cout = out_ref.shape[1], out_ref.shape[2], out_ref.shape[3]
    Cin = x_ref.shape[2]
    P = w1_ref.shape[1]
    rows = TH + 2                                  # padded rows this tile needs

    # Flattened-spatial window: padded rows [t*TH, t*TH + TH + 2).
    # Start offset is a multiple of TH*Wp (Wp mult of 8) -> aligned ref load.
    start = pl.multiple_of(t * TH * Wp, 8)
    xw = x_ref[0, pl.ds(start, rows * Wp)]         # (rows*Wp, Cin) bf16

    # ---- conv1 (1x1) + bn1 + relu : one MXU matmul --------------------------
    h1 = jnp.dot(xw, w1_ref[...], preferred_element_type=jnp.float32)
    h1 = jnp.maximum(h1 + b1_ref[...], 0.0).reshape(rows, Wp, P)

    # Zero h1 on the spatial halo (padded x is zero there, but BN bias + ReLU
    # would otherwise leak into the 3x3 taps).
    r_id = jax.lax.broadcasted_iota(jnp.int32, (rows, Wp, P), 0) + t * TH
    c_id = jax.lax.broadcasted_iota(jnp.int32, (rows, Wp, P), 1)
    interior = (r_id >= 1) & (r_id <= H) & (c_id >= 1) & (c_id <= W)
    h1 = jnp.where(interior, h1, 0.0)

    # ---- conv2 (3x3, pad=1) + bn2 + relu : single im2col matmul, K = 9*P ----
    taps = []
    for dy in range(3):                            # static unroll: 9 slices,
        for dx in range(3):                        # dy on the (free) leading dim
            tap = h1[dy:dy + TH, dx:dx + W, :].reshape(TH * W, P)
            taps.append(tap.astype(jnp.bfloat16))  # cast at aligned (TH*W, P)
    col = jnp.concatenate(taps, axis=-1)           # (TH*W, 9*P) bf16
    h2 = jnp.dot(col, w2_ref[...], preferred_element_type=jnp.float32)
    h2 = jnp.maximum(h2 + b2_ref[...], 0.0).astype(jnp.bfloat16)

    # ---- conv3 (1x1) + bn3 + identity residual + relu ------------------------
    h3 = jnp.dot(h2, w3_ref[...], preferred_element_type=jnp.float32)
    h3 = h3 + b3_ref[...]
    res = xw.reshape(rows, Wp, Cin)[1:TH + 1, 1:W + 1, :]
    res = res.astype(jnp.float32).reshape(TH * W, Cin)
    out = jnp.maximum(h3 + res, 0.0)
    out_ref[0] = out.reshape(TH, W, Cout).astype(out_ref.dtype)


def _pick_row_tile(H, W, Wp, Cin, P, Cout, budget_bytes=12 << 20):
    """Largest divisor of H whose per-step working set fits the VMEM budget."""
    best = 1
    for th in range(1, H + 1):
        if H % th:
            continue
        rows = th + 2
        work = (rows * Wp * Cin * 2        # x window (bf16)
                + rows * Wp * P * 4        # h1 (f32)
                + th * W * 9 * P * 2       # im2col matrix (bf16)
                + th * W * P * 4           # h2 (f32 before cast)
                + 3 * th * W * Cout * 4)   # h3 + double-buffered out tile (f32)
        if work <= budget_bytes:
            best = th
    return best


def bottleneck_pallas(x_nchw, kernel_params, *, row_tile=None):
    """Bottleneck forward. x_nchw: (N, Cin, H, W) f32 (PyTorch layout)."""
    w1f, b1, w2f, b2, w3f, b3 = kernel_params
    N, Cin, H, W = x_nchw.shape
    P = w1f.shape[1]
    Cout = w3f.shape[1]
    assert Cout == Cin, "identity residual requires inplanes == planes * 4"
    # TODO(synk): stride>1 / dilation>1 / downsample path not implemented.

    Wp = ((W + 2 + 7) // 8) * 8                    # halo + sublane alignment
    if row_tile is None:
        row_tile = _pick_row_tile(H, W, Wp, Cin, P, Cout)
    TH = row_tile if H % row_tile == 0 else H      # spatial row tile

    # NCHW -> NHWC, bf16 matmul operands, zero spatial halo, flatten spatial.
    x = jnp.transpose(x_nchw, (0, 2, 3, 1)).astype(jnp.bfloat16)
    x_pad = jnp.zeros((N, H + 2, Wp, Cin), jnp.bfloat16)
    x_pad = x_pad.at[:, 1:H + 1, 1:W + 1, :].set(x)
    x_pad = x_pad.reshape(N, (H + 2) * Wp, Cin)

    grid = (N, H // TH)

    # VMEM budget for the chosen tiles (double-buffered blocks + weights) with
    # headroom for in-kernel temporaries; CostEstimate for the XLA scheduler.
    x_blk = (H + 2) * Wp * Cin * 2
    out_blk = TH * W * Cout * 4
    w_bytes = 2 * (w1f.size + w2f.size + w3f.size) + 4 * (b1.size + b2.size + b3.size)
    vmem_limit = int(min(2 * (x_blk + out_blk) + 2 * w_bytes + (16 << 20), 64 << 20))
    cost = pl.CostEstimate(
        flops=2 * N * H * W * (Cin * P + 9 * P * P + P * Cout),
        transcendentals=0,
        bytes_accessed=int(N * (H + 2) * Wp * Cin * 2 + N * H * W * Cout * 4 + w_bytes),
    )

    out = pl.pallas_call(
        functools.partial(_bottleneck_kernel, H=H, Wp=Wp),
        out_shape=jax.ShapeDtypeStruct((N, H, W, Cout), jnp.float32),
        grid=grid,
        in_specs=[
            pl.BlockSpec((1, (H + 2) * Wp, Cin), lambda n, t: (n, 0, 0)),
            pl.BlockSpec((Cin, P),               lambda n, t: (0, 0)),
            pl.BlockSpec((1, P),                 lambda n, t: (0, 0)),
            pl.BlockSpec((9 * P, P),             lambda n, t: (0, 0)),
            pl.BlockSpec((1, P),                 lambda n, t: (0, 0)),
            pl.BlockSpec((P, Cout),              lambda n, t: (0, 0)),
            pl.BlockSpec((1, Cout),              lambda n, t: (0, 0)),
        ],
        out_specs=pl.BlockSpec((1, TH, W, Cout), lambda n, t: (n, t, 0, 0)),
        compiler_params=pltpu.CompilerParams(
            dimension_semantics=("parallel", "parallel"),
            vmem_limit_bytes=vmem_limit),
        cost_estimate=cost,
    )(x_pad, w1f, b1, w2f, b2, w3f, b3)

    return jnp.transpose(out, (0, 3, 1, 2))        # NHWC -> NCHW


def init_params(key, inplanes, planes):
    """Deterministic synthetic module parameters (conv weights + inference-mode
    BatchNorm statistics)."""
    ks = jax.random.split(key, 15)

    def bn_params(kg, kb, km, kv, c):
        gamma = jax.random.uniform(kg, (c,), minval=0.5, maxval=1.5)
        beta = 0.1 * jax.random.normal(kb, (c,))
        mean = 0.1 * jax.random.normal(km, (c,))
        var = jax.random.uniform(kv, (c,), minval=0.5, maxval=1.5)
        return (gamma.astype(jnp.float32), beta.astype(jnp.float32),
                mean.astype(jnp.float32), var.astype(jnp.float32))

    return dict(
        w1=0.05 * jax.random.normal(ks[0], (inplanes, planes), jnp.float32),
        w2=0.05 * jax.random.normal(ks[1], (3, 3, planes, planes), jnp.float32),  # HWIO
        w3=0.05 * jax.random.normal(ks[2], (planes, planes * 4), jnp.float32),
        bn1=bn_params(ks[3], ks[4], ks[5], ks[6], planes),
        bn2=bn_params(ks[7], ks[8], ks[9], ks[10], planes),
        bn3=bn_params(ks[11], ks[12], ks[13], ks[14], planes * 4),
    )


def fold_params(p):
    """Fold inference-mode BN into the conv weights (per output channel);
    keep a per-channel f32 bias. Matmul weights are cast to bf16."""
    def scale_bias(stats):
        gamma, beta, mean, var = stats
        s = gamma / jnp.sqrt(var + _EPS)
        return s, (beta - mean * s).astype(jnp.float32)

    s1, b1 = scale_bias(p["bn1"])
    s2, b2 = scale_bias(p["bn2"])
    s3, b3 = scale_bias(p["bn3"])
    P = p["w1"].shape[1]
    w1f = (p["w1"] * s1[None, :]).astype(jnp.bfloat16)
    w2f = (p["w2"] * s2[None, None, None, :]).reshape(9 * P, P).astype(jnp.bfloat16)
    w3f = (p["w3"] * s3[None, :]).astype(jnp.bfloat16)
    return (w1f, b1.reshape(1, -1), w2f, b2.reshape(1, -1), w3f, b3.reshape(1, -1))


def bottleneck_ref(x_nchw, p):
    """Pure-JAX f32 reference (XLA convs) mirroring the PyTorch forward."""
    def bn(h, stats):
        gamma, beta, mean, var = stats
        return (h - mean) / jnp.sqrt(var + _EPS) * gamma + beta

    x = jnp.transpose(x_nchw, (0, 2, 3, 1))
    h = jnp.maximum(bn(jnp.einsum('nhwc,cp->nhwp', x, p["w1"]), p["bn1"]), 0.0)
    h = jax.lax.conv_general_dilated(
        h, p["w2"], window_strides=(1, 1), padding=((1, 1), (1, 1)),
        dimension_numbers=('NHWC', 'HWIO', 'NHWC'))
    h = jnp.maximum(bn(h, p["bn2"]), 0.0)
    h = bn(jnp.einsum('nhwp,pc->nhwc', h, p["w3"]), p["bn3"])
    out = jnp.maximum(h + x, 0.0)
    return jnp.transpose(out, (0, 3, 1, 2))


if __name__ == "__main__":
    key = jax.random.PRNGKey(0)
    k_x, k_p = jax.random.split(key)

    # Small ResNet-style identity Bottleneck: planes=128, inplanes=512, 16x16.
    # planes being a multiple of 128 keeps every matmul lane dim MXU-aligned.
    N, planes, H, W = 2, 128, 16, 16
    inplanes = planes * 4
    x = jax.random.normal(k_x, (N, inplanes, H, W), jnp.float32)   # PyTorch NCHW

    params = init_params(k_p, inplanes, planes)
    kparams = fold_params(params)

    y = jax.block_until_ready(bottleneck_pallas(x, kparams))       # auto row tile
    assert y.shape == (N, inplanes, H, W)

    y_ref = bottleneck_ref(x, params)
    # bf16 matmul operands (f32 accumulation) vs a pure-f32 reference =>
    # loosened tolerance relative to an all-f32 check.
    if not bool(jnp.allclose(y, y_ref, rtol=2e-2, atol=6e-2)):
        max_err = float(jnp.max(jnp.abs(y - y_ref)))
        raise AssertionError(
            f"Pallas kernel mismatch vs reference: max abs err {max_err}")

    print("KERNEL_OK")
</pallas_src>

<mosaic_0001>
module attributes {stable_mosaic.version = 11 : i64} {
  func.func @_bottleneck_kernel(%arg0: i32, %arg1: i32, %arg2: memref<1x432x512xbf16, #tpu.memory_space<vmem>>, %arg3: memref<512x128xbf16, #tpu.memory_space<vmem>>, %arg4: memref<1x128xf32, #tpu.memory_space<vmem>>, %arg5: memref<1152x128xbf16, #tpu.memory_space<vmem>>, %arg6: memref<1x128xf32, #tpu.memory_space<vmem>>, %arg7: memref<128x512xbf16, #tpu.memory_space<vmem>>, %arg8: memref<1x512xf32, #tpu.memory_space<vmem>>, %arg9: memref<1x16x16x512xf32, #tpu.memory_space<vmem>>) attributes {dimension_semantics = [#tpu.dimension_semantics<parallel>, #tpu.dimension_semantics<parallel>], iteration_bounds = array<i64: 2, 1>, scalar_prefetch = 0 : i64, scratch_operands = 0 : i64, tpu.core_type = #tpu.core_type<tc>, window_params = [{transform_indices = @transform_0, window_bounds = array<i64: 1, 432, 512>}, {pipeline_mode = #tpu.pipeline_mode<synchronous>, transform_indices = @transform_1, window_bounds = array<i64: 512, 128>}, {pipeline_mode = #tpu.pipeline_mode<synchronous>, transform_indices = @transform_2, window_bounds = array<i64: 1, 128>}, {pipeline_mode = #tpu.pipeline_mode<synchronous>, transform_indices = @transform_3, window_bounds = array<i64: 1152, 128>}, {pipeline_mode = #tpu.pipeline_mode<synchronous>, transform_indices = @transform_4, window_bounds = array<i64: 1, 128>}, {pipeline_mode = #tpu.pipeline_mode<synchronous>, transform_indices = @transform_5, window_bounds = array<i64: 128, 512>}, {pipeline_mode = #tpu.pipeline_mode<synchronous>, transform_indices = @transform_6, window_bounds = array<i64: 1, 512>}, {transform_indices = @transform_7, window_bounds = array<i64: 1, 16, 16, 512>}]} {
    %c16_i32 = arith.constant 16 : i32
    %0 = arith.muli %arg1, %c16_i32 : i32
    %c24_i32 = arith.constant 24 : i32
    %1 = arith.muli %0, %c24_i32 : i32
    %2 = tpu.assume_multiple %1, 8 : i32
    %c0 = arith.constant 0 : index
    %3 = arith.index_cast %2 : i32 to index
    %c0_0 = arith.constant 0 : index
    %4 = vector.load %arg2[%c0, %3, %c0_0] : memref<1x432x512xbf16, #tpu.memory_space<vmem>>, vector<1x432x512xbf16>
    %5 = vector.shape_cast %4 : vector<1x432x512xbf16> to vector<432x512xbf16>
    %c0_1 = arith.constant 0 : index
    %c0_2 = arith.constant 0 : index
    %6 = vector.load %arg3[%c0_1, %c0_2] : memref<512x128xbf16, #tpu.memory_space<vmem>>, vector<512x128xbf16>
    %cst = arith.constant dense<0.000000e+00> : vector<432x128xf32>
    %7 = tpu.matmul %5, %6, %cst {dimension_numbers = #tpu.dot_dimension_numbers<[1], [0], [0], [1], [0, 0, 1, 1], [], []>} : vector<432x512xbf16>, vector<512x128xbf16>, vector<432x128xf32> -> vector<432x128xf32>
    %c0_3 = arith.constant 0 : index
    %c0_4 = arith.constant 0 : index
    %8 = vector.load %arg4[%c0_3, %c0_4] : memref<1x128xf32, #tpu.memory_space<vmem>>, vector<1x128xf32>
    %9 = vector.broadcast %8 : vector<1x128xf32> to vector<432x128xf32>
    %10 = arith.addf %7, %9 : vector<432x128xf32>
    %cst_5 = arith.constant 0.000000e+00 : f32
    %11 = vector.broadcast %cst_5 : f32 to vector<432x128xf32>
    %12 = arith.maximumf %10, %11 : vector<432x128xf32>
    %13 = vector.shape_cast %12 : vector<432x128xf32> to vector<18x24x128xf32>
    %14 = tpu.iota {dimensions = array<i32: 0>} : vector<18x24x128xi32>
    %c16_i32_6 = arith.constant 16 : i32
    %15 = arith.muli %arg1, %c16_i32_6 : i32
    %16 = vector.broadcast %15 : i32 to vector<18x24x128xi32>
    %17 = arith.addi %14, %16 : vector<18x24x128xi32>
    %18 = tpu.iota {dimensions = array<i32: 1>} : vector<18x24x128xi32>
    %c1_i32 = arith.constant 1 : i32
    %19 = vector.broadcast %c1_i32 : i32 to vector<18x24x128xi32>
    %20 = arith.cmpi sge, %17, %19 : vector<18x24x128xi32>
    %c16_i32_7 = arith.constant 16 : i32
    %21 = vector.broadcast %c16_i32_7 : i32 to vector<18x24x128xi32>
    %22 = arith.cmpi sle, %17, %21 : vector<18x24x128xi32>
    %23 = arith.andi %20, %22 : vector<18x24x128xi1>
    %c1_i32_8 = arith.constant 1 : i32
    %24 = vector.broadcast %c1_i32_8 : i32 to vector<18x24x128xi32>
    %25 = arith.cmpi sge, %18, %24 : vector<18x24x128xi32>
    %26 = arith.andi %23, %25 : vector<18x24x128xi1>
    %c16_i32_9 = arith.constant 16 : i32
    %27 = vector.broadcast %c16_i32_9 : i32 to vector<18x24x128xi32>
    %28 = arith.cmpi sle, %18, %27 : vector<18x24x128xi32>
    %29 = arith.andi %26, %28 : vector<18x24x128xi1>
    %cst_10 = arith.constant 0.000000e+00 : f32
    %30 = vector.broadcast %cst_10 : f32 to vector<18x24x128xf32>
    %31 = arith.select %29, %13, %30 : vector<18x24x128xi1>, vector<18x24x128xf32>
    %32 = vector.extract_strided_slice %31 {offsets = [0, 0, 0], sizes = [16, 16, 128], strides = [1, 1, 1]} : vector<18x24x128xf32> to vector<16x16x128xf32>
    %33 = vector.shape_cast %32 : vector<16x16x128xf32> to vector<256x128xf32>
    %34 = arith.truncf %33 : vector<256x128xf32> to vector<256x128xbf16>
    %35 = vector.extract_strided_slice %31 {offsets = [0, 1, 0], sizes = [16, 16, 128], strides = [1, 1, 1]} : vector<18x24x128xf32> to vector<16x16x128xf32>
    %36 = vector.shape_cast %35 : vector<16x16x128xf32> to vector<256x128xf32>
    %37 = arith.truncf %36 : vector<256x128xf32> to vector<256x128xbf16>
    %38 = vector.extract_strided_slice %31 {offsets = [0, 2, 0], sizes = [16, 16, 128], strides = [1, 1, 1]} : vector<18x24x128xf32> to vector<16x16x128xf32>
    %39 = vector.shape_cast %38 : vector<16x16x128xf32> to vector<256x128xf32>
    %40 = arith.truncf %39 : vector<256x128xf32> to vector<256x128xbf16>
    %41 = vector.extract_strided_slice %31 {offsets = [1, 0, 0], sizes = [16, 16, 128], strides = [1, 1, 1]} : vector<18x24x128xf32> to vector<16x16x128xf32>
    %42 = vector.shape_cast %41 : vector<16x16x128xf32> to vector<256x128xf32>
    %43 = arith.truncf %42 : vector<256x128xf32> to vector<256x128xbf16>
    %44 = vector.extract_strided_slice %31 {offsets = [1, 1, 0], sizes = [16, 16, 128], strides = [1, 1, 1]} : vector<18x24x128xf32> to vector<16x16x128xf32>
    %45 = vector.shape_cast %44 : vector<16x16x128xf32> to vector<256x128xf32>
    %46 = arith.truncf %45 : vector<256x128xf32> to vector<256x128xbf16>
    %47 = vector.extract_strided_slice %31 {offsets = [1, 2, 0], sizes = [16, 16, 128], strides = [1, 1, 1]} : vector<18x24x128xf32> to vector<16x16x128xf32>
    %48 = vector.shape_cast %47 : vector<16x16x128xf32> to vector<256x128xf32>
    %49 = arith.truncf %48 : vector<256x128xf32> to vector<256x128xbf16>
    %50 = vector.extract_strided_slice %31 {offsets = [2, 0, 0], sizes = [16, 16, 128], strides = [1, 1, 1]} : vector<18x24x128xf32> to vector<16x16x128xf32>
    %51 = vector.shape_cast %50 : vector<16x16x128xf32> to vector<256x128xf32>
    %52 = arith.truncf %51 : vector<256x128xf32> to vector<256x128xbf16>
    %53 = vector.extract_strided_slice %31 {offsets = [2, 1, 0], sizes = [16, 16, 128], strides = [1, 1, 1]} : vector<18x24x128xf32> to vector<16x16x128xf32>
    %54 = vector.shape_cast %53 : vector<16x16x128xf32> to vector<256x128xf32>
    %55 = arith.truncf %54 : vector<256x128xf32> to vector<256x128xbf16>
    %56 = vector.extract_strided_slice %31 {offsets = [2, 2, 0], sizes = [16, 16, 128], strides = [1, 1, 1]} : vector<18x24x128xf32> to vector<16x16x128xf32>
    %57 = vector.shape_cast %56 : vector<16x16x128xf32> to vector<256x128xf32>
    %58 = arith.truncf %57 : vector<256x128xf32> to vector<256x128xbf16>
    %59 = tpu.concatenate %34, %37, %40, %43, %46, %49, %52, %55, %58 in 1 : vector<256x128xbf16>, vector<256x128xbf16>, vector<256x128xbf16>, vector<256x128xbf16>, vector<256x128xbf16>, vector<256x128xbf16>, vector<256x128xbf16>, vector<256x128xbf16>, vector<256x128xbf16> -> vector<256x1152xbf16>
    %c0_11 = arith.constant 0 : index
    %c0_12 = arith.constant 0 : index
    %60 = vector.load %arg5[%c0_11, %c0_12] : memref<1152x128xbf16, #tpu.memory_space<vmem>>, vector<1152x128xbf16>
    %cst_13 = arith.constant dense<0.000000e+00> : vector<256x128xf32>
    %61 = tpu.matmul %59, %60, %cst_13 {dimension_numbers = #tpu.dot_dimension_numbers<[1], [0], [0], [1], [0, 0, 1, 1], [], []>} : vector<256x1152xbf16>, vector<1152x128xbf16>, vector<256x128xf32> -> vector<256x128xf32>
    %c0_14 = arith.constant 0 : index
    %c0_15 = arith.constant 0 : index
    %62 = vector.load %arg6[%c0_14, %c0_15] : memref<1x128xf32, #tpu.memory_space<vmem>>, vector<1x128xf32>
    %63 = vector.broadcast %62 : vector<1x128xf32> to vector<256x128xf32>
    %64 = arith.addf %61, %63 : vector<256x128xf32>
    %cst_16 = arith.constant 0.000000e+00 : f32
    %65 = vector.broadcast %cst_16 : f32 to vector<256x128xf32>
    %66 = arith.maximumf %64, %65 : vector<256x128xf32>
    %67 = arith.truncf %66 : vector<256x128xf32> to vector<256x128xbf16>
    %c0_17 = arith.constant 0 : index
    %c0_18 = arith.constant 0 : index
    %68 = vector.load %arg7[%c0_17, %c0_18] : memref<128x512xbf16, #tpu.memory_space<vmem>>, vector<128x512xbf16>
    %cst_19 = arith.constant dense<0.000000e+00> : vector<256x512xf32>
    %69 = tpu.matmul %67, %68, %cst_19 {dimension_numbers = #tpu.dot_dimension_numbers<[1], [0], [0], [1], [0, 0, 1, 1], [], []>} : vector<256x128xbf16>, vector<128x512xbf16>, vector<256x512xf32> -> vector<256x512xf32>
    %c0_20 = arith.constant 0 : index
    %c0_21 = arith.constant 0 : index
    %70 = vector.load %arg8[%c0_20, %c0_21] : memref<1x512xf32, #tpu.memory_space<vmem>>, vector<1x512xf32>
    %71 = vector.broadcast %70 : vector<1x512xf32> to vector<256x512xf32>
    %72 = arith.addf %69, %71 : vector<256x512xf32>
    %73 = vector.shape_cast %5 : vector<432x512xbf16> to vector<18x24x512xbf16>
    %74 = vector.extract_strided_slice %73 {offsets = [1, 1, 0], sizes = [16, 16, 512], strides = [1, 1, 1]} : vector<18x24x512xbf16> to vector<16x16x512xbf16>
    %75 = arith.extf %74 : vector<16x16x512xbf16> to vector<16x16x512xf32>
    %76 = vector.shape_cast %75 : vector<16x16x512xf32> to vector<256x512xf32>
    %77 = arith.addf %72, %76 : vector<256x512xf32>
    %cst_22 = arith.constant 0.000000e+00 : f32
    %78 = vector.broadcast %cst_22 : f32 to vector<256x512xf32>
    %79 = arith.maximumf %77, %78 : vector<256x512xf32>
    %80 = vector.shape_cast %79 : vector<256x512xf32> to vector<16x16x512xf32>
    %c0_23 = arith.constant 0 : index
    %c0_24 = arith.constant 0 : index
    %c0_25 = arith.constant 0 : index
    %c0_26 = arith.constant 0 : index
    %81 = vector.load %arg9[%c0_23, %c0_24, %c0_25, %c0_26] : memref<1x16x16x512xf32, #tpu.memory_space<vmem>>, vector<1x16x16x512xf32>
    %82 = vector.shape_cast %81 : vector<1x16x16x512xf32> to vector<16x16x512xf32>
    %83 = vector.shape_cast %80 : vector<16x16x512xf32> to vector<1x16x16x512xf32>
    tpu.vector_store %arg9[%c0_23, %c0_24, %c0_25, %c0_26], %83 {strides = array<i32>} : memref<1x16x16x512xf32, #tpu.memory_space<vmem>>, vector<1x16x16x512xf32>,
    return
  }
  func.func @transform_0(%arg0: i32, %arg1: i32) -> (i32, i32, i32) {
    %c0_i32 = arith.constant 0 : i32
    %c0_i32_0 = arith.constant 0 : i32
    %c0_i32_1 = arith.constant 0 : i32
    return %arg0, %c0_i32, %c0_i32_0 : i32, i32, i32
  }
  func.func @transform_1(%arg0: i32, %arg1: i32) -> (i32, i32) {
    %c0_i32 = arith.constant 0 : i32
    %c0_i32_0 = arith.constant 0 : i32
    %c0_i32_1 = arith.constant 0 : i32
    return %c0_i32, %c0_i32_0 : i32, i32
  }
  func.func @transform_2(%arg0: i32, %arg1: i32) -> (i32, i32) {
    %c0_i32 = arith.constant 0 : i32
    %c0_i32_0 = arith.constant 0 : i32
    %c0_i32_1 = arith.constant 0 : i32
    return %c0_i32, %c0_i32_0 : i32, i32
  }
  func.func @transform_3(%arg0: i32, %arg1: i32) -> (i32, i32) {
    %c0_i32 = arith.constant 0 : i32
    %c0_i32_0 = arith.constant 0 : i32
    %c0_i32_1 = arith.constant 0 : i32
    return %c0_i32, %c0_i32_0 : i32, i32
  }
  func.func @transform_4(%arg0: i32, %arg1: i32) -> (i32, i32) {
    %c0_i32 = arith.constant 0 : i32
    %c0_i32_0 = arith.constant 0 : i32
    %c0_i32_1 = arith.constant 0 : i32
    return %c0_i32, %c0_i32_0 : i32, i32
  }
  func.func @transform_5(%arg0: i32, %arg1: i32) -> (i32, i32) {
    %c0_i32 = arith.constant 0 : i32
    %c0_i32_0 = arith.constant 0 : i32
    %c0_i32_1 = arith.constant 0 : i32
    return %c0_i32, %c0_i32_0 : i32, i32
  }
  func.func @transform_6(%arg0: i32, %arg1: i32) -> (i32, i32) {
    %c0_i32 = arith.constant 0 : i32
    %c0_i32_0 = arith.constant 0 : i32
    %c0_i32_1 = arith.constant 0 : i32
    return %c0_i32, %c0_i32_0 : i32, i32
  }
  func.func @transform_7(%arg0: i32, %arg1: i32) -> (i32, i32, i32, i32) {
    %c0_i32 = arith.constant 0 : i32
    %c0_i32_0 = arith.constant 0 : i32
    %c0_i32_1 = arith.constant 0 : i32
    return %arg0, %arg1, %c0_i32, %c0_i32_0 : i32, i32, i32, i32
  }
}

</mosaic_0001>

<llo_original>
// kernel: tpu_custom_call.1
$region0: #{tpu_custom_call.1}
  #allocation0 [shape = 'u32[]', space=smem, size = 0x4, offset = 0x4, fixed_abs, tag = 'smem constant byte address 0x4 - core index']
  #allocation1 [shape = 'u32[144,128]{1,0:T(1,128)}', space=vmem, size = 0x12000, scoped, tag = 'internal scratch']
  %s0 = inlined_call_operand.hbm [shape: bf16[2,432,512], index: 0, kind: input, shape index: {}]
  %s1 = inlined_call_operand.hbm [shape: bf16[512,128], index: 1, kind: input, shape index: {}]
  %s2 = inlined_call_operand.vmem [shape: f32[1,128], index: 2, kind: input, shape index: {}]
  %s3 = inlined_call_operand.hbm [shape: bf16[1152,128], index: 3, kind: input, shape index: {}]
  %s4 = inlined_call_operand.vmem [shape: f32[1,128], index: 4, kind: input, shape index: {}]
  %s5 = inlined_call_operand.hbm [shape: bf16[128,512], index: 5, kind: input, shape index: {}]
  %s6 = inlined_call_operand.vmem [shape: f32[1,512], index: 6, kind: input, shape index: {}]
  %s7 = inlined_call_operand.hbm [shape: f32[2,16,16,512], index: 7, kind: output, shape index: {}]
  %s8 = sld [smem:[#allocation0]]
  $region77: #{tpu_custom_call.1} parent=0
    _
  %s10 = ssub.s32 1, %s8
  %s11 = scalar_select 0, %s10, %s8
  $region1: #{tpu_custom_call.1} parent=0
    #allocation2 [shape = 'u8[884736]{0}', space=vmem, size = 0xd8000, scoped, tag = 'input window, operand 0']
    #allocation3 [shape = 's32[2]{0}', space=sflag, size = 0x8, scoped, tag = 'scoped memory for tpu_custom_call.1']
    #allocation4 [shape = 's32[2]{0}', space=sflag, size = 0x8, scoped, tag = 'scoped memory for tpu_custom_call.1']
    #allocation5 [shape = 'u8[131072]{0}', space=vmem, size = 0x20000, scoped, tag = 'input window, operand 1, single buffered']
    #allocation6 [shape = 's32[1]{0}', space=sflag, size = 0x4, scoped, tag = 'scoped memory for tpu_custom_call.1']
    #allocation7 [shape = 'u8[294912]{0}', space=vmem, size = 0x48000, scoped, tag = 'input window, operand 3, single buffered']
    #allocation8 [shape = 'u8[131072]{0}', space=vmem, size = 0x20000, scoped, tag = 'input window, operand 5, single buffered']
    #allocation9 [shape = 's32[1]{0}', space=sflag, size = 0x4, scoped, tag = 'scoped memory for tpu_custom_call.1']
    #allocation10 [shape = 'u8[1048576]{0}', space=vmem, size = 0x100000, scoped, tag = 'output window, operand 0']
    %12 = vsyncpa [#allocation3], 0
    %s13 = scalar_lea.sflag [#allocation3], 1
    %14 = vsyncpa %s13, 0
    %15 = vsyncpa [#allocation6], 0
    %16 = vsyncpa [#allocation9], 0
    %17 = vsyncpa [#allocation4], 0
    %s18 = scalar_lea.sflag [#allocation4], 1
    %19 = vsyncpa %s18, 0
    loop: start=0, step=1, limit=4
    $region2: #{tpu_custom_call.1} parent=1 // loop_pre_header
      _
    $region3: #{tpu_custom_call.1} parent=1 // loop_header
      %s21 = sphi 0, %s25
      %p22 = scmp.ge.s32.totalorder %s21, 4
      %s28 = sphi 0, %s40
      %s29 = sphi 0, %s36
      %s30 = sphi 0, %s28
      %s31 = sphi 0, %s29
      %s32 = sphi 0, %s30
      %s33 = sphi 0, %s31
      %s43 = sphi 0, %s45
      %s46 = sphi 0, %s43
      %s47 = sphi 0, %s46
      %s63 = sphi 0, %s47
      %s67 = sphi 0, %s67
      %s69 = sphi 0, %s67
      %s70 = sphi 0, %s69
      %s84 = sphi 0, %s70
      %s88 = sphi 0, %s88
      %s90 = sphi 0, %s88
      %s91 = sphi 0, %s90
      %s105 = sphi 0, %s91
      %s109 = sphi 0, %s109
      %s111 = sphi 0, %s109
      %s112 = sphi 0, %s111
      %s126 = sphi 0, %s112
      %s130 = sphi 0, %s130
      %s132 = sphi 0, %s130
      %s133 = sphi 0, %s132
      %s147 = sphi 0, %s133
      %s151 = sphi 0, %s151
      %s153 = sphi 0, %s151
      %s154 = sphi 0, %s153
      %s168 = sphi 0, %s154
      %s172 = sphi 0, %s172
      %s174 = sphi 0, %s172
      %s175 = sphi 0, %s174
      %s189 = sphi 0, %s175
      %s197 = sphi 0, %s199
      %s200 = sphi 0, %s197
      %s201 = sphi 0, %s200
      %s217 = sphi 0, %s201
    $region4: #{tpu_custom_call.1} parent=1 // loop_header_branch
      %24 = sbr.rel (%p22) target = $region8
    $region5: #{tpu_custom_call.1} parent=1 // loop_body
      %s26 = ssub.s32 %s21, 1
      %s27 = ssub.s32 %s21, 2
      %s34 = sadd.s32 1, %s29
      %p35 = scmp.ge.s32.totalorder %s34, 1
      %s36 = scalar_select %p35, 0, %s34
      %s37 = sadd.s32 1, %s28
      %s38 = scalar_select %p35, %s37, %s28
      %p39 = scmp.ge.s32.totalorder %s38, 2
      %s40 = scalar_select %p39, 0, %s38
      %s41 = ssub.s32 %s28, %s40
      %p42 = scmp.eq.s32.totalorder %s41, 0
      %s44 = sadd.s32 %s43, 1
      %s45 = scalar_select %p42, %s43, %s44
      %p48 = pneg %p42
      %p49 = scmp.eq.s32.totalorder %s21, 1
      %p50 = por %p48, %p49
      %p51 = scmp.ne.s32.totalorder %s43, %s46
      %p52 = scmp.eq.s32.totalorder %s21, 0
      %p53 = por %p51, %p52
      %p54 = scmp.ne.s32.totalorder %s43, %s46
      %p55 = scmp.eq.s32.totalorder %s26, 1
      %p56 = por %p54, %p55
      %p57 = scmp.ne.s32.totalorder %s46, %s47
      %p58 = scmp.eq.s32.totalorder %s26, 0
      %p59 = por %p57, %p58
      %p60 = scmp.ne.s32.totalorder %s46, %s47
      %p61 = scmp.eq.s32.totalorder %s27, 1
      %p62 = por %p60, %p61
      %p64 = scmp.ne.s32.totalorder %s47, %s63
      %p65 = scmp.eq.s32.totalorder %s27, 0
      %p66 = por %p64, %p65
      %s68 = sadd.s32 %s67, 1
      %p71 = scmp.eq.s32.totalorder %s21, 1
      %p72 = scmp.ne.s32.totalorder %s67, %s69
      %p73 = scmp.eq.s32.totalorder %s21, 0
      %p74 = por %p72, %p73
      %p75 = scmp.ne.s32.totalorder %s67, %s69
      %p76 = scmp.eq.s32.totalorder %s26, 1
      %p77 = por %p75, %p76
      %p78 = scmp.ne.s32.totalorder %s69, %s70
      %p79 = scmp.eq.s32.totalorder %s26, 0
      %p80 = por %p78, %p79
      %p81 = scmp.ne.s32.totalorder %s69, %s70
      %p82 = scmp.eq.s32.totalorder %s27, 1
      %p83 = por %p81, %p82
      %p85 = scmp.ne.s32.totalorder %s70, %s84
      %p86 = scmp.eq.s32.totalorder %s27, 0
      %p87 = por %p85, %p86
      %s89 = sadd.s32 %s88, 1
      %p92 = scmp.eq.s32.totalorder %s21, 1
      %p93 = scmp.ne.s32.totalorder %s88, %s90
      %p94 = scmp.eq.s32.totalorder %s21, 0
      %p95 = por %p93, %p94
      %p96 = scmp.ne.s32.totalorder %s88, %s90
      %p97 = scmp.eq.s32.totalorder %s26, 1
      %p98 = por %p96, %p97
      %p99 = scmp.ne.s32.totalorder %s90, %s91
      %p100 = scmp.eq.s32.totalorder %s26, 0
      %p101 = por %p99, %p100
      %p102 = scmp.ne.s32.totalorder %s90, %s91
      %p103 = scmp.eq.s32.totalorder %s27, 1
      %p104 = por %p102, %p103
      %p106 = scmp.ne.s32.totalorder %s91, %s105
      %p107 = scmp.eq.s32.totalorder %s27, 0
      %p108 = por %p106, %p107
      %s110 = sadd.s32 %s109, 1
      %p113 = scmp.eq.s32.totalorder %s21, 1
      %p114 = scmp.ne.s32.totalorder %s109, %s111
      %p115 = scmp.eq.s32.totalorder %s21, 0
      %p116 = por %p114, %p115
      %p117 = scmp.ne.s32.totalorder %s109, %s111
      %p118 = scmp.eq.s32.totalorder %s26, 1
      %p119 = por %p117, %p118
      %p120 = scmp.ne.s32.totalorder %s111, %s112
      %p121 = scmp.eq.s32.totalorder %s26, 0
      %p122 = por %p120, %p121
      %p123 = scmp.ne.s32.totalorder %s111, %s112
      %p124 = scmp.eq.s32.totalorder %s27, 1
      %p125 = por %p123, %p124
      %p127 = scmp.ne.s32.totalorder %s112, %s126
      %p128 = scmp.eq.s32.totalorder %s27, 0
      %p129 = por %p127, %p128
      %s131 = sadd.s32 %s130, 1
      %p134 = scmp.eq.s32.totalorder %s21, 1
      %p135 = scmp.ne.s32.totalorder %s130, %s132
      %p136 = scmp.eq.s32.totalorder %s21, 0
      %p137 = por %p135, %p136
      %p138 = scmp.ne.s32.totalorder %s130, %s132
      %p139 = scmp.eq.s32.totalorder %s26, 1
      %p140 = por %p138, %p139
      %p141 = scmp.ne.s32.totalorder %s132, %s133
      %p142 = scmp.eq.s32.totalorder %s26, 0
      %p143 = por %p141, %p142
      %p144 = scmp.ne.s32.totalorder %s132, %s133
      %p145 = scmp.eq.s32.totalorder %s27, 1
      %p146 = por %p144, %p145
      %p148 = scmp.ne.s32.totalorder %s133, %s147
      %p149 = scmp.eq.s32.totalorder %s27, 0
      %p150 = por %p148, %p149
      %s152 = sadd.s32 %s151, 1
      %p155 = scmp.eq.s32.totalorder %s21, 1
      %p156 = scmp.ne.s32.totalorder %s151, %s153
      %p157 = scmp.eq.s32.totalorder %s21, 0
      %p158 = por %p156, %p157
      %p159 = scmp.ne.s32.totalorder %s151, %s153
      %p160 = scmp.eq.s32.totalorder %s26, 1
      %p161 = por %p159, %p160
      %p162 = scmp.ne.s32.totalorder %s153, %s154
      %p163 = scmp.eq.s32.totalorder %s26, 0
      %p164 = por %p162, %p163
      %p165 = scmp.ne.s32.totalorder %s153, %s154
      %p166 = scmp.eq.s32.totalorder %s27, 1
      %p167 = por %p165, %p166
      %p169 = scmp.ne.s32.totalorder %s154, %s168
      %p170 = scmp.eq.s32.totalorder %s27, 0
      %p171 = por %p169, %p170
      %s173 = sadd.s32 %s172, 1
      %p176 = scmp.eq.s32.totalorder %s21, 1
      %p177 = scmp.ne.s32.totalorder %s172, %s174
      %p178 = scmp.eq.s32.totalorder %s21, 0
      %p179 = por %p177, %p178
      %p180 = scmp.ne.s32.totalorder %s172, %s174
      %p181 = scmp.eq.s32.totalorder %s26, 1
      %p182 = por %p180, %p181
      %p183 = scmp.ne.s32.totalorder %s174, %s175
      %p184 = scmp.eq.s32.totalorder %s26, 0
      %p185 = por %p183, %p184
      %p186 = scmp.ne.s32.totalorder %s174, %s175
      %p187 = scmp.eq.s32.totalorder %s27, 1
      %p188 = por %p186, %p187
      %p190 = scmp.ne.s32.totalorder %s175, %s189
      %p191 = scmp.eq.s32.totalorder %s27, 0
      %p192 = por %p190, %p191
      %s193 = ssub.s32 %s28, %s40
      %s194 = ssub.s32 %s29, %s36
      %s195 = sor.u32 %s193, %s194
      %p196 = scmp.eq.s32.totalorder %s195, 0
      %s198 = sadd.s32 %s197, 1
      %s199 = scalar_select %p196, %s197, %s198
      %p202 = pneg %p196
      %p203 = scmp.eq.s32.totalorder %s21, 1
      %p204 = por %p202, %p203
      %p205 = scmp.ne.s32.totalorder %s197, %s200
      %p206 = scmp.eq.s32.totalorder %s21, 0
      %p207 = por %p205, %p206
      %p208 = scmp.ne.s32.totalorder %s197, %s200
      %p209 = scmp.eq.s32.totalorder %s26, 1
      %p210 = por %p208, %p209
      %p211 = scmp.ne.s32.totalorder %s200, %s201
      %p212 = scmp.eq.s32.totalorder %s26, 0
      %p213 = por %p211, %p212
      %p214 = scmp.ne.s32.totalorder %s200, %s201
      %p215 = scmp.eq.s32.totalorder %s27, 1
      %p216 = por %p214, %p215
      %p218 = scmp.ne.s32.totalorder %s201, %s217
      %p219 = scmp.eq.s32.totalorder %s27, 0
      %p220 = por %p218, %p219
      %p221 = scmp.le.s32.totalorder 1, %s21
      %p222 = scmp.lt.s32.totalorder %s21, 3
      %p223 = pnand %p221, %p222
      %p224 = pneg %p223
      // Predicated region
      $region9: #{tpu_custom_call.1} parent=5 // pred_check
        _
      $region10: #{tpu_custom_call.1} parent=5 // pred_check_branch
        %226 = sbr.rel (%p223) target = $region12
      $region11: #{tpu_custom_call.1} parent=5 // pred_region
        %s227 = ssub.s32 %s21, 1
        // Predicated region
        $region13: #{tpu_custom_call.1} parent=11 // pred_check
          %p228 = pneg %p80
        $region14: #{tpu_custom_call.1} parent=11 // pred_check_branch
          %230 = sbr.rel (%p228) target = $region16
        $region15: #{tpu_custom_call.1} parent=11 // pred_region
          %s232 = ssub.s32 4096, 4096
          %233 = vsyncadd [#allocation6], %s232
          %s234 = sshll.u32 [#allocation5], 4
          %s235 = int_to_ptr.vmem [resolvable:$true] %s234
          %240 = dma.hbm_to_vmem [thread:$0]  %s1, 4096, %s235, [#allocation6], 64, 64, 4
        $region16: #{tpu_custom_call.1} parent=11 // pred_fallthru
          _
        // Predicated region
        $region17: #{tpu_custom_call.1} parent=11 // pred_check
          %p241 = pneg %p101
        $region18: #{tpu_custom_call.1} parent=11 // pred_check_branch
          %243 = sbr.rel (%p241) target = $region20
        $region19: #{tpu_custom_call.1} parent=11 // pred_region
          _
        $region20: #{tpu_custom_call.1} parent=11 // pred_fallthru
          _
        // Predicated region
        $region21: #{tpu_custom_call.1} parent=11 // pred_check
          %p244 = pneg %p122
        $region22: #{tpu_custom_call.1} parent=11 // pred_check_branch
          %246 = sbr.rel (%p244) target = $region24
        $region23: #{tpu_custom_call.1} parent=11 // pred_region
          %s248 = ssub.s32 9216, 9216
          %249 = vsyncadd [#allocation6], %s248
          %s250 = sshll.u32 [#allocation7], 4
          %s251 = int_to_ptr.vmem [resolvable:$true] %s250
          %256 = dma.hbm_to_vmem [thread:$0]  %s3, 9216, %s251, [#allocation6], 64, 64, 4
        $region24: #{tpu_custom_call.1} parent=11 // pred_fallthru
          _
        // Predicated region
        $region25: #{tpu_custom_call.1} parent=11 // pred_check
          %p257 = pneg %p143
        $region26: #{tpu_custom_call.1} parent=11 // pred_check_branch
          %259 = sbr.rel (%p257) target = $region28
        $region27: #{tpu_custom_call.1} parent=11 // pred_region
          _
        $region28: #{tpu_custom_call.1} parent=11 // pred_fallthru
          _
        // Predicated region
        $region29: #{tpu_custom_call.1} parent=11 // pred_check
          %p260 = pneg %p164
        $region30: #{tpu_custom_call.1} parent=11 // pred_check_branch
          %262 = sbr.rel (%p260) target = $region32
        $region31: #{tpu_custom_call.1} parent=11 // pred_region
          %s264 = ssub.s32 4096, 4096
          %265 = vsyncadd [#allocation9], %s264
          %s266 = sshll.u32 [#allocation8], 4
          %s267 = int_to_ptr.vmem [resolvable:$true] %s266
          %272 = dma.hbm_to_vmem [thread:$0]  %s5, 4096, %s267, [#allocation9], 256, 256, 16
        $region32: #{tpu_custom_call.1} parent=11 // pred_fallthru
          _
        // Predicated region
        $region33: #{tpu_custom_call.1} parent=11 // pred_check
          %p273 = pneg %p185
        $region34: #{tpu_custom_call.1} parent=11 // pred_check_branch
          %275 = sbr.rel (%p273) target = $region36
        $region35: #{tpu_custom_call.1} parent=11 // pred_region
          _
        $region36: #{tpu_custom_call.1} parent=11 // pred_fallthru
          _
      $region12: #{tpu_custom_call.1} parent=5 // pred_fallthru
        _
      %p276 = scmp.lt.s32.totalorder %s21, 2
      // Predicated region
      $region37: #{tpu_custom_call.1} parent=5 // pred_check
        %p277 = pneg %p276
      $region38: #{tpu_custom_call.1} parent=5 // pred_check_branch
        %279 = sbr.rel (%p277) target = $region40
      $region39: #{tpu_custom_call.1} parent=5 // pred_region
        // Predicated region
        $region41: #{tpu_custom_call.1} parent=39 // pred_check
          %p280 = pneg %p53
        $region42: #{tpu_custom_call.1} parent=39 // pred_check_branch
          %282 = sbr.rel (%p280) target = $region44
        $region43: #{tpu_custom_call.1} parent=39 // pred_region
          %s283 = sand.u32 %s43, 1
          %s284 = scalar_lea.sflag [#allocation3], %s283
          %s285 = sand.u32 %s43, 1
          %s286 = smul.addr %s285, 864
          %s287 = scalar_lea.vmem [#allocation2], %s286
          %s289 = ssub.s32 13824, 13824
          %290 = vsyncadd %s284, %s289
          %s291 = smul.addr %s28, 216
          %s292 = smul.addr %s291, 64
          %s293 = scalar_lea.hbm %s0, %s292
          %s294 = sshll.u32 %s287, 4
          %s295 = int_to_ptr.vmem [resolvable:$true] %s294
          %300 = dma.hbm_to_vmem [thread:$0]  %s293, 13824, %s295, %s284, 256, 256, 16
        $region44: #{tpu_custom_call.1} parent=39 // pred_fallthru
          _
      $region40: #{tpu_custom_call.1} parent=5 // pred_fallthru
        _
      %p301 = scmp.le.s32.totalorder 1, %s21
      %p302 = scmp.lt.s32.totalorder %s21, 3
      %p303 = pnand %p301, %p302
      %p304 = pneg %p303
      // Predicated region
      $region45: #{tpu_custom_call.1} parent=5 // pred_check
        _
      $region46: #{tpu_custom_call.1} parent=5 // pred_check_branch
        %306 = sbr.rel (%p303) target = $region48
      $region47: #{tpu_custom_call.1} parent=5 // pred_region
        %s307 = ssub.s32 %s21, 1
        %s308 = sand.u32 %s46, 1
        %s309 = scalar_lea.sflag [#allocation3], %s308
        %s310 = sand.u32 %s46, 1
        %s311 = smul.addr %s310, 864
        %s312 = scalar_lea.vmem [#allocation2], %s311
        // Predicated region
        $region49: #{tpu_custom_call.1} parent=47 // pred_check
          %p313 = pneg %p59
        $region50: #{tpu_custom_call.1} parent=47 // pred_check_branch
          %315 = sbr.rel (%p313) target = $region52
        $region51: #{tpu_custom_call.1} parent=47 // pred_region
          %316 = dma.done %s309, 13824
        $region52: #{tpu_custom_call.1} parent=47 // pred_fallthru
          _
        // Predicated region
        $region53: #{tpu_custom_call.1} parent=47 // pred_check
          %p317 = pneg %p80
        $region54: #{tpu_custom_call.1} parent=47 // pred_check_branch
          %319 = sbr.rel (%p317) target = $region56
        $region55: #{tpu_custom_call.1} parent=47 // pred_region
          %320 = dma.done [#allocation6], 4096
        $region56: #{tpu_custom_call.1} parent=47 // pred_fallthru
          _
        // Predicated region
        $region57: #{tpu_custom_call.1} parent=47 // pred_check
          %p321 = pneg %p122
        $region58: #{tpu_custom_call.1} parent=47 // pred_check_branch
          %323 = sbr.rel (%p321) target = $region60
        $region59: #{tpu_custom_call.1} parent=47 // pred_region
          %324 = dma.done [#allocation6], 9216
        $region60: #{tpu_custom_call.1} parent=47 // pred_fallthru
          _
        // Predicated region
        $region61: #{tpu_custom_call.1} parent=47 // pred_check
          %p325 = pneg %p164
        $region62: #{tpu_custom_call.1} parent=47 // pred_check_branch
          %327 = sbr.rel (%p325) target = $region64
        $region63: #{tpu_custom_call.1} parent=47 // pred_region
          %328 = dma.done [#allocation9], 4096
        $region64: #{tpu_custom_call.1} parent=47 // pred_fallthru
          _
        %s329 = sand.u32 %s46, 1
        %s330 = scalar_lea.sflag [#allocation3], %s329
        %s331 = sand.u32 %s46, 1
        %s332 = smul.addr %s331, 864
        %s333 = scalar_lea.vmem [#allocation2], %s332
        %p334 = pneg %p59
        %p335 = pneg %p56
        %p336 = pneg %p80
        %p337 = pneg %p77
        %p338 = pneg %p101
        %p339 = pneg %p98
        %p340 = pneg %p122
        %p341 = pneg %p119
        %p342 = pneg %p143
        %p343 = pneg %p140
        %p344 = pneg %p164
        %p345 = pneg %p161
        %p346 = pneg %p185
        %p347 = pneg %p182
        %p348 = pneg %p213
        %p349 = pneg %p210
        %s350 = sand.u32 %s200, 1
        %s351 = scalar_lea.sflag [#allocation4], %s350
        %s352 = sand.u32 %s200, 1
        %s353 = smul.addr %s352, 1024
        %s354 = scalar_lea.vmem [#allocation10], %s353
        %s355 = smul.u32 16, %s31
        %s357 = smul.u32 %s31, 384
        %s358 = sshra.s32 %s357, 3
        %s359 = sand.u32 %s357, 7
        %s360 = smul.u32 %s358, 4
        %s361 = smul.addr %s360, 4
        %s362 = scalar_lea.vmem %s312, %s361 [#allocation2]
        %v363 = vld [vmem:[%s362] sm:$0xff]
        %v364 = vld [vmem:[%s362 + $0x8] sm:$0xff]
        %v365 = vld [vmem:[%s362 + $0x10] sm:$0xff]
        %v366 = vld [vmem:[%s362 + $0x18] sm:$0xff]
        %v367 = vld [vmem:[%s362 + $0x20] sm:$0xff]
        %v368 = vld [vmem:[%s362 + $0x28] sm:$0xff]
        %v369 = vld [vmem:[%s362 + $0x30] sm:$0xff]
        %v370 = vld [vmem:[%s362 + $0x38] sm:$0xff]
        %v371 = vld [vmem:[%s362 + $0x40] sm:$0xff]
        %v372 = vld [vmem:[%s362 + $0x48] sm:$0xff]
        %v373 = vld [vmem:[%s362 + $0x50] sm:$0xff]
        %v374 = vld [vmem:[%s362 + $0x58] sm:$0xff]
        %v375 = vld [vmem:[%s362 + $0x60] sm:$0xff]
        %v376 = vld [vmem:[%s362 + $0x68] sm:$0xff]
        %v377 = vld [vmem:[%s362 + $0x70] sm:$0xff]
        %v378 = vld [vmem:[%s362 + $0x78] sm:$0xff]
        %v379 = vld [vmem:[%s362 + $0x80] sm:$0xff]
        %v380 = vld [vmem:[%s362 + $0x88] sm:$0xff]
        %v381 = vld [vmem:[%s362 + $0x90] sm:$0xff]
        %v382 = vld [vmem:[%s362 + $0x98] sm:$0xff]
        %v383 = vld [vmem:[%s362 + $0xa0] sm:$0xff]
        %v384 = vld [vmem:[%s362 + $0xa8] sm:$0xff]
        %v385 = vld [vmem:[%s362 + $0xb0] sm:$0xff]
        %v386 = vld [vmem:[%s362 + $0xb8] sm:$0xff]
        %v387 = vld [vmem:[%s362 + $0xc0] sm:$0xff]
        %v388 = vld [vmem:[%s362 + $0xc8] sm:$0xff]
        %v389 = vld [vmem:[%s362 + $0xd0] sm:$0xff]
        %v390 = vld [vmem:[%s362 + $0xd8] sm:$0xff]
        %v391 = vld [vmem:[%s362 + $0xe0] sm:$0xff]
        %v392 = vld [vmem:[%s362 + $0xe8] sm:$0xff]
        %v393 = vld [vmem:[%s362 + $0xf0] sm:$0xff]
        %v394 = vld [vmem:[%s362 + $0xf8] sm:$0xff]
        %v395 = vld [vmem:[%s362 + $0x100] sm:$0xff]
        %v396 = vld [vmem:[%s362 + $0x108] sm:$0xff]
        %v397 = vld [vmem:[%s362 + $0x110] sm:$0xff]
        %v398 = vld [vmem:[%s362 + $0x118] sm:$0xff]
        %v399 = vld [vmem:[%s362 + $0x120] sm:$0xff]
        %v400 = vld [vmem:[%s362 + $0x128] sm:$0xff]
        %v401 = vld [vmem:[%s362 + $0x130] sm:$0xff]
        %v402 = vld [vmem:[%s362 + $0x138] sm:$0xff]
        %v403 = vld [vmem:[%s362 + $0x140] sm:$0xff]
        %v404 = vld [vmem:[%s362 + $0x148] sm:$0xff]
        %v405 = vld [vmem:[%s362 + $0x150] sm:$0xff]
        %v406 = vld [vmem:[%s362 + $0x158] sm:$0xff]
        %v407 = vld [vmem:[%s362 + $0x160] sm:$0xff]
        %v408 = vld [vmem:[%s362 + $0x168] sm:$0xff]
        %v409 = vld [vmem:[%s362 + $0x170] sm:$0xff]
        %v410 = vld [vmem:[%s362 + $0x178] sm:$0xff]
        %v411 = vld [vmem:[%s362 + $0x180] sm:$0xff]
        %v412 = vld [vmem:[%s362 + $0x188] sm:$0xff]
        %v413 = vld [vmem:[%s362 + $0x190] sm:$0xff]
        %v414 = vld [vmem:[%s362 + $0x198] sm:$0xff]
        %v415 = vld [vmem:[%s362 + $0x1a0] sm:$0xff]
        %v416 = vld [vmem:[%s362 + $0x1a8] sm:$0xff]
        %v417 = vld [vmem:[%s362 + $0x1b0] sm:$0xff]
        %v418 = vld [vmem:[%s362 + $0x1b8] sm:$0xff]
        %v419 = vld [vmem:[%s362 + $0x1c0] sm:$0xff]
        %v420 = vld [vmem:[%s362 + $0x1c8] sm:$0xff]
        %v421 = vld [vmem:[%s362 + $0x1d0] sm:$0xff]
        %v422 = vld [vmem:[%s362 + $0x1d8] sm:$0xff]
        %v423 = vld [vmem:[%s362 + $0x1e0] sm:$0xff]
        %v424 = vld [vmem:[%s362 + $0x1e8] sm:$0xff]
        %v425 = vld [vmem:[%s362 + $0x1f0] sm:$0xff]
        %v426 = vld [vmem:[%s362 + $0x1f8] sm:$0xff]
        %v427 = vld [vmem:[%s362 + $0x200] sm:$0xff]
        %v428 = vld [vmem:[%s362 + $0x208] sm:$0xff]
        %v429 = vld [vmem:[%s362 + $0x210] sm:$0xff]
        %v430 = vld [vmem:[%s362 + $0x218] sm:$0xff]
        %v431 = vld [vmem:[%s362 + $0x220] sm:$0xff]
        %v432 = vld [vmem:[%s362 + $0x228] sm:$0xff]
        %v433 = vld [vmem:[%s362 + $0x230] sm:$0xff]
        %v434 = vld [vmem:[%s362 + $0x238] sm:$0xff]
        %v435 = vld [vmem:[%s362 + $0x240] sm:$0xff]
        %v436 = vld [vmem:[%s362 + $0x248] sm:$0xff]
        %v437 = vld [vmem:[%s362 + $0x250] sm:$0xff]
        %v438 = vld [vmem:[%s362 + $0x258] sm:$0xff]
        %v439 = vld [vmem:[%s362 + $0x260] sm:$0xff]
        %v440 = vld [vmem:[%s362 + $0x268] sm:$0xff]
        %v441 = vld [vmem:[%s362 + $0x270] sm:$0xff]
        %v442 = vld [vmem:[%s362 + $0x278] sm:$0xff]
        %v443 = vld [vmem:[%s362 + $0x280] sm:$0xff]
        %v444 = vld [vmem:[%s362 + $0x288] sm:$0xff]
        %v445 = vld [vmem:[%s362 + $0x290] sm:$0xff]
        %v446 = vld [vmem:[%s362 + $0x298] sm:$0xff]
        %v447 = vld [vmem:[%s362 + $0x2a0] sm:$0xff]
        %v448 = vld [vmem:[%s362 + $0x2a8] sm:$0xff]
        %v449 = vld [vmem:[%s362 + $0x2b0] sm:$0xff]
        %v450 = vld [vmem:[%s362 + $0x2b8] sm:$0xff]
        %v451 = vld [vmem:[%s362 + $0x2c0] sm:$0xff]
        %v452 = vld [vmem:[%s362 + $0x2c8] sm:$0xff]
        %v453 = vld [vmem:[%s362 + $0x2d0] sm:$0xff]
        %v454 = vld [vmem:[%s362 + $0x2d8] sm:$0xff]
        %v455 = vld [vmem:[%s362 + $0x2e0] sm:$0xff]
        %v456 = vld [vmem:[%s362 + $0x2e8] sm:$0xff]
        %v457 = vld [vmem:[%s362 + $0x2f0] sm:$0xff]
        %v458 = vld [vmem:[%s362 + $0x2f8] sm:$0xff]
        %v459 = vld [vmem:[%s362 + $0x300] sm:$0xff]
        %v460 = vld [vmem:[%s362 + $0x308] sm:$0xff]
        %v461 = vld [vmem:[%s362 + $0x310] sm:$0xff]
        %v462 = vld [vmem:[%s362 + $0x318] sm:$0xff]
        %v463 = vld [vmem:[%s362 + $0x320] sm:$0xff]
        %v464 = vld [vmem:[%s362 + $0x328] sm:$0xff]
        %v465 = vld [vmem:[%s362 + $0x330] sm:$0xff]
        %v466 = vld [vmem:[%s362 + $0x338] sm:$0xff]
        %v467 = vld [vmem:[%s362 + $0x340] sm:$0xff]
        %v468 = vld [vmem:[%s362 + $0x348] sm:$0xff]
        %v469 = vld [vmem:[%s362 + $0x350] sm:$0xff]
        %v470 = vld [vmem:[%s362 + $0x358] sm:$0xff]
        %v471 = vld [vmem:[#allocation5] sm:$0xf]
        %v472 = vld [vmem:[#allocation5 + $0x4] sm:$0xf]
        %v473 = vld [vmem:[#allocation5 + $0x8] sm:$0xf]
        %v474 = vld [vmem:[#allocation5 + $0xc] sm:$0xf]
        %v475 = vld [vmem:[#allocation5 + $0x10] sm:$0xf]
        %v476 = vld [vmem:[#allocation5 + $0x14] sm:$0xf]
        %v477 = vld [vmem:[#allocation5 + $0x18] sm:$0xf]
        %v478 = vld [vmem:[#allocation5 + $0x1c] sm:$0xf]
        %v479 = vld [vmem:[#allocation5 + $0x20] sm:$0xf]
        %v480 = vld [vmem:[#allocation5 + $0x24] sm:$0xf]
        %v481 = vld [vmem:[#allocation5 + $0x28] sm:$0xf]
        %v482 = vld [vmem:[#allocation5 + $0x2c] sm:$0xf]
        %v483 = vld [vmem:[#allocation5 + $0x30] sm:$0xf]
        %v484 = vld [vmem:[#allocation5 + $0x34] sm:$0xf]
        %v485 = vld [vmem:[#allocation5 + $0x38] sm:$0xf]
        %v486 = vld [vmem:[#allocation5 + $0x3c] sm:$0xf]
        %v487 = vld [vmem:[#allocation5 + $0x40] sm:$0xf]
        %v488 = vld [vmem:[#allocation5 + $0x44] sm:$0xf]
        %v489 = vld [vmem:[#allocation5 + $0x48] sm:$0xf]
        %v490 = vld [vmem:[#allocation5 + $0x4c] sm:$0xf]
        %v491 = vld [vmem:[#allocation5 + $0x50] sm:$0xf]
        %v492 = vld [vmem:[#allocation5 + $0x54] sm:$0xf]
        %v493 = vld [vmem:[#allocation5 + $0x58] sm:$0xf]
        %v494 = vld [vmem:[#allocation5 + $0x5c] sm:$0xf]
        %v495 = vld [vmem:[#allocation5 + $0x60] sm:$0xf]
        %v496 = vld [vmem:[#allocation5 + $0x64] sm:$0xf]
        %v497 = vld [vmem:[#allocation5 + $0x68] sm:$0xf]
        %v498 = vld [vmem:[#allocation5 + $0x6c] sm:$0xf]
        %v499 = vld [vmem:[#allocation5 + $0x70] sm:$0xf]
        %v500 = vld [vmem:[#allocation5 + $0x74] sm:$0xf]
        %v501 = vld [vmem:[#allocation5 + $0x78] sm:$0xf]
        %v502 = vld [vmem:[#allocation5 + $0x7c] sm:$0xf]
        %v503 = vld [vmem:[#allocation5 + $0x80] sm:$0xf]
        %v504 = vld [vmem:[#allocation5 + $0x84] sm:$0xf]
        %v505 = vld [vmem:[#allocation5 + $0x88] sm:$0xf]
        %v506 = vld [vmem:[#allocation5 + $0x8c] sm:$0xf]
        %v507 = vld [vmem:[#allocation5 + $0x90] sm:$0xf]
        %v508 = vld [vmem:[#allocation5 + $0x94] sm:$0xf]
        %v509 = vld [vmem:[#allocation5 + $0x98] sm:$0xf]
        %v510 = vld [vmem:[#allocation5 + $0x9c] sm:$0xf]
        %v511 = vld [vmem:[#allocation5 + $0xa0] sm:$0xf]
        %v512 = vld [vmem:[#allocation5 + $0xa4] sm:$0xf]
        %v513 = vld [vmem:[#allocation5 + $0xa8] sm:$0xf]
        %v514 = vld [vmem:[#allocation5 + $0xac] sm:$0xf]
        %v515 = vld [vmem:[#allocation5 + $0xb0] sm:$0xf]
        %v516 = vld [vmem:[#allocation5 + $0xb4] sm:$0xf]
        %v517 = vld [vmem:[#allocation5 + $0xb8] sm:$0xf]
        %v518 = vld [vmem:[#allocation5 + $0xbc] sm:$0xf]
        %v519 = vld [vmem:[#allocation5 + $0xc0] sm:$0xf]
        %v520 = vld [vmem:[#allocation5 + $0xc4] sm:$0xf]
        %v521 = vld [vmem:[#allocation5 + $0xc8] sm:$0xf]
        %v522 = vld [vmem:[#allocation5 + $0xcc] sm:$0xf]
        %v523 = vld [vmem:[#allocation5 + $0xd0] sm:$0xf]
        %v524 = vld [vmem:[#allocation5 + $0xd4] sm:$0xf]
        %v525 = vld [vmem:[#allocation5 + $0xd8] sm:$0xf]
        %v526 = vld [vmem:[#allocation5 + $0xdc] sm:$0xf]
        %v527 = vld [vmem:[#allocation5 + $0xe0] sm:$0xf]
        %v528 = vld [vmem:[#allocation5 + $0xe4] sm:$0xf]
        %v529 = vld [vmem:[#allocation5 + $0xe8] sm:$0xf]
        %v530 = vld [vmem:[#allocation5 + $0xec] sm:$0xf]
        %v531 = vld [vmem:[#allocation5 + $0xf0] sm:$0xf]
        %v532 = vld [vmem:[#allocation5 + $0xf4] sm:$0xf]
        %v533 = vld [vmem:[#allocation5 + $0xf8] sm:$0xf]
        %v534 = vld [vmem:[#allocation5 + $0xfc] sm:$0xf]
        %v535 = vld [vmem:[%s2] sm:$0x1]
        %v537 = vlaneseq
        %v538 = vshrl.u32 %v537, 7
        %v539 = vsub.s32 0, %v538
        %v540 = vrot.slane %v535, %v539
        %v650 = vunpack.c.l.b16 %v363
        %v651 = vunpack.c.h.b16 %v363
        %v652 = vunpack.c.l.b16 %v364
        %v653 = vunpack.c.h.b16 %v364
        %v654 = vunpack.c.l.b16 %v365
        %v655 = vunpack.c.h.b16 %v365
        %v656 = vunpack.c.l.b16 %v366
        %v657 = vunpack.c.h.b16 %v366
        %v658 = vunpack.c.l.b16 %v367
        %v659 = vunpack.c.h.b16 %v367
        %v660 = vunpack.c.l.b16 %v368
        %v661 = vunpack.c.h.b16 %v368
        %v662 = vunpack.c.l.b16 %v369
        %v663 = vunpack.c.h.b16 %v369
        %v664 = vunpack.c.l.b16 %v370
        %v665 = vunpack.c.h.b16 %v370
        %v666 = vunpack.c.l.b16 %v371
        %v667 = vunpack.c.h.b16 %v371
        %v668 = vunpack.c.l.b16 %v372
        %v669 = vunpack.c.h.b16 %v372
        %v670 = vunpack.c.l.b16 %v373
        %v671 = vunpack.c.h.b16 %v373
        %v672 = vunpack.c.l.b16 %v374
        %v673 = vunpack.c.h.b16 %v374
        %v674 = vunpack.c.l.b16 %v375
        %v675 = vunpack.c.h.b16 %v375
        %v676 = vunpack.c.l.b16 %v376
        %v677 = vunpack.c.h.b16 %v376
        %v678 = vunpack.c.l.b16 %v377
        %v679 = vunpack.c.h.b16 %v377
        %v680 = vunpack.c.l.b16 %v378
        %v681 = vunpack.c.h.b16 %v378
        %v682 = vunpack.c.l.b16 %v379
        %v683 = vunpack.c.h.b16 %v379
        %v684 = vunpack.c.l.b16 %v380
        %v685 = vunpack.c.h.b16 %v380
        %v686 = vunpack.c.l.b16 %v381
        %v687 = vunpack.c.h.b16 %v381
        %v688 = vunpack.c.l.b16 %v382
        %v689 = vunpack.c.h.b16 %v382
        %v690 = vunpack.c.l.b16 %v383
        %v691 = vunpack.c.h.b16 %v383
        %v692 = vunpack.c.l.b16 %v384
        %v693 = vunpack.c.h.b16 %v384
        %v694 = vunpack.c.l.b16 %v385
        %v695 = vunpack.c.h.b16 %v385
        %v696 = vunpack.c.l.b16 %v386
        %v697 = vunpack.c.h.b16 %v386
        %v698 = vunpack.c.l.b16 %v387
        %v699 = vunpack.c.h.b16 %v387
        %v700 = vunpack.c.l.b16 %v388
        %v701 = vunpack.c.h.b16 %v388
        %v702 = vunpack.c.l.b16 %v389
        %v703 = vunpack.c.h.b16 %v389
        %v704 = vunpack.c.l.b16 %v390
        %v705 = vunpack.c.h.b16 %v390
        %v706 = vunpack.c.l.b16 %v391
        %v707 = vunpack.c.h.b16 %v391
        %v708 = vunpack.c.l.b16 %v392
        %v709 = vunpack.c.h.b16 %v392
        %v710 = vunpack.c.l.b16 %v393
        %v711 = vunpack.c.h.b16 %v393
        %v712 = vunpack.c.l.b16 %v394
        %v713 = vunpack.c.h.b16 %v394
        %v714 = vunpack.c.l.b16 %v395
        %v715 = vunpack.c.h.b16 %v395
        %v716 = vunpack.c.l.b16 %v396
        %v717 = vunpack.c.h.b16 %v396
        %v718 = vunpack.c.l.b16 %v397
        %v719 = vunpack.c.h.b16 %v397
        %v720 = vunpack.c.l.b16 %v398
        %v721 = vunpack.c.h.b16 %v398
        %v722 = vunpack.c.l.b16 %v399
        %v723 = vunpack.c.h.b16 %v399
        %v724 = vunpack.c.l.b16 %v400
        %v725 = vunpack.c.h.b16 %v400
        %v726 = vunpack.c.l.b16 %v401
        %v727 = vunpack.c.h.b16 %v401
        %v728 = vunpack.c.l.b16 %v402
        %v729 = vunpack.c.h.b16 %v402
        %v730 = vunpack.c.l.b16 %v403
        %v731 = vunpack.c.h.b16 %v403
        %v732 = vunpack.c.l.b16 %v404
        %v733 = vunpack.c.h.b16 %v404
        %v734 = vunpack.c.l.b16 %v405
        %v735 = vunpack.c.h.b16 %v405
        %v736 = vunpack.c.l.b16 %v406
        %v737 = vunpack.c.h.b16 %v406
        %v738 = vunpack.c.l.b16 %v407
        %v739 = vunpack.c.h.b16 %v407
        %v740 = vunpack.c.l.b16 %v408
        %v741 = vunpack.c.h.b16 %v408
        %v742 = vunpack.c.l.b16 %v409
        %v743 = vunpack.c.h.b16 %v409
        %v744 = vunpack.c.l.b16 %v410
        %v745 = vunpack.c.h.b16 %v410
        %v746 = vunpack.c.l.b16 %v411
        %v747 = vunpack.c.h.b16 %v411
        %v748 = vunpack.c.l.b16 %v412
        %v749 = vunpack.c.h.b16 %v412
        %v750 = vunpack.c.l.b16 %v413
        %v751 = vunpack.c.h.b16 %v413
        %v752 = vunpack.c.l.b16 %v414
        %v753 = vunpack.c.h.b16 %v414
        %v754 = vunpack.c.l.b16 %v415
        %v755 = vunpack.c.h.b16 %v415
        %v756 = vunpack.c.l.b16 %v416
        %v757 = vunpack.c.h.b16 %v416
        %v758 = vunpack.c.l.b16 %v417
        %v759 = vunpack.c.h.b16 %v417
        %v760 = vunpack.c.l.b16 %v418
        %v761 = vunpack.c.h.b16 %v418
        %v762 = vunpack.c.l.b16 %v419
        %v763 = vunpack.c.h.b16 %v419
        %v764 = vunpack.c.l.b16 %v420
        %v765 = vunpack.c.h.b16 %v420
        %v766 = vunpack.c.l.b16 %v421
        %v767 = vunpack.c.h.b16 %v421
        %v768 = vunpack.c.l.b16 %v422
        %v769 = vunpack.c.h.b16 %v422
        %v770 = vunpack.c.l.b16 %v423
        %v771 = vunpack.c.h.b16 %v423
        %v772 = vunpack.c.l.b16 %v424
        %v773 = vunpack.c.h.b16 %v424
        %v774 = vunpack.c.l.b16 %v425
        %v775 = vunpack.c.h.b16 %v425
        %v776 = vunpack.c.l.b16 %v426
        %v777 = vunpack.c.h.b16 %v426
        %v778 = vunpack.c.l.b16 %v427
        %v779 = vunpack.c.h.b16 %v427
        %v780 = vunpack.c.l.b16 %v428
        %v781 = vunpack.c.h.b16 %v428
        %v782 = vunpack.c.l.b16 %v429
        %v783 = vunpack.c.h.b16 %v429
        %v784 = vunpack.c.l.b16 %v430
        %v785 = vunpack.c.h.b16 %v430
        %v786 = vunpack.c.l.b16 %v431
        %v787 = vunpack.c.h.b16 %v431
        %v788 = vunpack.c.l.b16 %v432
        %v789 = vunpack.c.h.b16 %v432
        %v790 = vunpack.c.l.b16 %v433
        %v791 = vunpack.c.h.b16 %v433
        %v792 = vunpack.c.l.b16 %v434
        %v793 = vunpack.c.h.b16 %v434
        %v794 = vunpack.c.l.b16 %v435
        %v795 = vunpack.c.h.b16 %v435
        %v796 = vunpack.c.l.b16 %v436
        %v797 = vunpack.c.h.b16 %v436
        %v798 = vunpack.c.l.b16 %v437
        %v799 = vunpack.c.h.b16 %v437
        %v800 = vunpack.c.l.b16 %v438
        %v801 = vunpack.c.h.b16 %v438
        %v802 = vunpack.c.l.b16 %v439
        %v803 = vunpack.c.h.b16 %v439
        %v804 = vunpack.c.l.b16 %v440
        %v805 = vunpack.c.h.b16 %v440
        %v806 = vunpack.c.l.b16 %v441
        %v807 = vunpack.c.h.b16 %v441
        %v808 = vunpack.c.l.b16 %v442
        %v809 = vunpack.c.h.b16 %v442
        %v810 = vunpack.c.l.b16 %v443
        %v811 = vunpack.c.h.b16 %v443
        %v812 = vunpack.c.l.b16 %v444
        %v813 = vunpack.c.h.b16 %v444
        %v814 = vunpack.c.l.b16 %v445
        %v815 = vunpack.c.h.b16 %v445
        %v816 = vunpack.c.l.b16 %v446
        %v817 = vunpack.c.h.b16 %v446
        %v818 = vunpack.c.l.b16 %v447
        %v819 = vunpack.c.h.b16 %v447
        %v820 = vunpack.c.l.b16 %v448
        %v821 = vunpack.c.h.b16 %v448
        %v822 = vunpack.c.l.b16 %v449
        %v823 = vunpack.c.h.b16 %v449
        %v824 = vunpack.c.l.b16 %v450
        %v825 = vunpack.c.h.b16 %v450
        %v826 = vunpack.c.l.b16 %v451
        %v827 = vunpack.c.h.b16 %v451
        %v828 = vunpack.c.l.b16 %v452
        %v829 = vunpack.c.h.b16 %v452
        %v830 = vunpack.c.l.b16 %v453
        %v831 = vunpack.c.h.b16 %v453
        %v832 = vunpack.c.l.b16 %v454
        %v833 = vunpack.c.h.b16 %v454
        %v834 = vunpack.c.l.b16 %v455
        %v835 = vunpack.c.h.b16 %v455
        %v836 = vunpack.c.l.b16 %v456
        %v837 = vunpack.c.h.b16 %v456
        %v838 = vunpack.c.l.b16 %v457
        %v839 = vunpack.c.h.b16 %v457
        %v840 = vunpack.c.l.b16 %v458
        %v841 = vunpack.c.h.b16 %v458
        %v842 = vunpack.c.l.b16 %v459
        %v843 = vunpack.c.h.b16 %v459
        %v844 = vunpack.c.l.b16 %v460
        %v845 = vunpack.c.h.b16 %v460
        %v846 = vunpack.c.l.b16 %v461
        %v847 = vunpack.c.h.b16 %v461
        %v848 = vunpack.c.l.b16 %v462
        %v849 = vunpack.c.h.b16 %v462
        %v850 = vunpack.c.l.b16 %v463
        %v851 = vunpack.c.h.b16 %v463
        %v852 = vunpack.c.l.b16 %v464
        %v853 = vunpack.c.h.b16 %v464
        %v854 = vunpack.c.l.b16 %v465
        %v855 = vunpack.c.h.b16 %v465
        %v856 = vunpack.c.l.b16 %v466
        %v857 = vunpack.c.h.b16 %v466
        %v858 = vunpack.c.l.b16 %v467
        %v859 = vunpack.c.h.b16 %v467
        %v860 = vunpack.c.l.b16 %v468
        %v861 = vunpack.c.h.b16 %v468
        %v862 = vunpack.c.l.b16 %v469
        %v863 = vunpack.c.h.b16 %v469
        %v864 = vunpack.c.l.b16 %v470
        %v865 = vunpack.c.h.b16 %v470
        %v866 = vpack.c.b16 %v654, %v650
        %v867 = vpack.c.b16 %v655, %v651
        %v868 = vpack.c.b16 %v656, %v652
        %v869 = vpack.c.b16 %v657, %v653
        %v870 = vpack.c.b16 %v662, %v658
        %v871 = vpack.c.b16 %v663, %v659
        %v872 = vpack.c.b16 %v664, %v660
        %v873 = vpack.c.b16 %v665, %v661
        %v874 = vpack.c.b16 %v670, %v666
        %v875 = vpack.c.b16 %v671, %v667
        %v876 = vpack.c.b16 %v672, %v668
        %v877 = vpack.c.b16 %v673, %v669
        %v878 = vpack.c.b16 %v678, %v674
        %v879 = vpack.c.b16 %v679, %v675
        %v880 = vpack.c.b16 %v680, %v676
        %v881 = vpack.c.b16 %v681, %v677
        %v882 = vpack.c.b16 %v686, %v682
        %v883 = vpack.c.b16 %v687, %v683
        %v884 = vpack.c.b16 %v688, %v684
        %v885 = vpack.c.b16 %v689, %v685
        %v886 = vpack.c.b16 %v694, %v690
        %v887 = vpack.c.b16 %v695, %v691
        %v888 = vpack.c.b16 %v696, %v692
        %v889 = vpack.c.b16 %v697, %v693
        %v890 = vpack.c.b16 %v702, %v698
        %v891 = vpack.c.b16 %v703, %v699
        %v892 = vpack.c.b16 %v704, %v700
        %v893 = vpack.c.b16 %v705, %v701
        %v894 = vpack.c.b16 %v710, %v706
        %v895 = vpack.c.b16 %v711, %v707
        %v896 = vpack.c.b16 %v712, %v708
        %v897 = vpack.c.b16 %v713, %v709
        %v898 = vpack.c.b16 %v718, %v714
        %v899 = vpack.c.b16 %v719, %v715
        %v900 = vpack.c.b16 %v720, %v716
        %v901 = vpack.c.b16 %v721, %v717
        %v902 = vpack.c.b16 %v726, %v722
        %v903 = vpack.c.b16 %v727, %v723
        %v904 = vpack.c.b16 %v728, %v724
        %v905 = vpack.c.b16 %v729, %v725
        %v906 = vpack.c.b16 %v734, %v730
        %v907 = vpack.c.b16 %v735, %v731
        %v908 = vpack.c.b16 %v736, %v732
        %v909 = vpack.c.b16 %v737, %v733
        %v910 = vpack.c.b16 %v742, %v738
        %v911 = vpack.c.b16 %v743, %v739
        %v912 = vpack.c.b16 %v744, %v740
        %v913 = vpack.c.b16 %v745, %v741
        %v914 = vpack.c.b16 %v750, %v746
        %v915 = vpack.c.b16 %v751, %v747
        %v916 = vpack.c.b16 %v752, %v748
        %v917 = vpack.c.b16 %v753, %v749
        %v918 = vpack.c.b16 %v758, %v754
        %v919 = vpack.c.b16 %v759, %v755
        %v920 = vpack.c.b16 %v760, %v756
        %v921 = vpack.c.b16 %v761, %v757
        %v922 = vpack.c.b16 %v766, %v762
        %v923 = vpack.c.b16 %v767, %v763
        %v924 = vpack.c.b16 %v768, %v764
        %v925 = vpack.c.b16 %v769, %v765
        %v926 = vpack.c.b16 %v774, %v770
        %v927 = vpack.c.b16 %v775, %v771
        %v928 = vpack.c.b16 %v776, %v772
        %v929 = vpack.c.b16 %v777, %v773
        %v930 = vpack.c.b16 %v782, %v778
        %v931 = vpack.c.b16 %v783, %v779
        %v932 = vpack.c.b16 %v784, %v780
        %v933 = vpack.c.b16 %v785, %v781
        %v934 = vpack.c.b16 %v790, %v786
        %v935 = vpack.c.b16 %v791, %v787
        %v936 = vpack.c.b16 %v792, %v788
        %v937 = vpack.c.b16 %v793, %v789
        %v938 = vpack.c.b16 %v798, %v794
        %v939 = vpack.c.b16 %v799, %v795
        %v940 = vpack.c.b16 %v800, %v796
        %v941 = vpack.c.b16 %v801, %v797
        %v942 = vpack.c.b16 %v806, %v802
        %v943 = vpack.c.b16 %v807, %v803
        %v944 = vpack.c.b16 %v808, %v804
        %v945 = vpack.c.b16 %v809, %v805
        %v946 = vpack.c.b16 %v814, %v810
        %v947 = vpack.c.b16 %v815, %v811
        %v948 = vpack.c.b16 %v816, %v812
        %v949 = vpack.c.b16 %v817, %v813
        %v950 = vpack.c.b16 %v822, %v818
        %v951 = vpack.c.b16 %v823, %v819
        %v952 = vpack.c.b16 %v824, %v820
        %v953 = vpack.c.b16 %v825, %v821
        %v954 = vpack.c.b16 %v830, %v826
        %v955 = vpack.c.b16 %v831, %v827
        %v956 = vpack.c.b16 %v832, %v828
        %v957 = vpack.c.b16 %v833, %v829
        %v958 = vpack.c.b16 %v838, %v834
        %v959 = vpack.c.b16 %v839, %v835
        %v960 = vpack.c.b16 %v840, %v836
        %v961 = vpack.c.b16 %v841, %v837
        %v962 = vpack.c.b16 %v846, %v842
        %v963 = vpack.c.b16 %v847, %v843
        %v964 = vpack.c.b16 %v848, %v844
        %v965 = vpack.c.b16 %v849, %v845
        %v966 = vpack.c.b16 %v854, %v850
        %v967 = vpack.c.b16 %v855, %v851
        %v968 = vpack.c.b16 %v856, %v852
        %v969 = vpack.c.b16 %v857, %v853
        %v970 = vpack.c.b16 %v862, %v858
        %v971 = vpack.c.b16 %v863, %v859
        %v972 = vpack.c.b16 %v864, %v860
        %v973 = vpack.c.b16 %v865, %v861
        %v1146 = vunpack.c.l.b16 %v471
        %v1147 = vunpack.c.l.b16 %v472
        %v1148 = vunpack.c.l.b16 %v473
        %v1149 = vunpack.c.l.b16 %v474
        %v1150 = vunpack.c.l.b16 %v475
        %v1151 = vunpack.c.l.b16 %v476
        %v1152 = vunpack.c.l.b16 %v477
        %v1153 = vunpack.c.l.b16 %v478
        %v1154 = vunpack.c.l.b16 %v479
        %v1155 = vunpack.c.l.b16 %v480
        %v1156 = vunpack.c.l.b16 %v481
        %v1157 = vunpack.c.l.b16 %v482
        %v1158 = vunpack.c.l.b16 %v483
        %v1159 = vunpack.c.l.b16 %v484
        %v1160 = vunpack.c.l.b16 %v485
        %v1161 = vunpack.c.l.b16 %v486
        %v1162 = vunpack.c.l.b16 %v487
        %v1163 = vunpack.c.l.b16 %v488
        %v1164 = vunpack.c.l.b16 %v489
        %v1165 = vunpack.c.l.b16 %v490
        %v1166 = vunpack.c.l.b16 %v491
        %v1167 = vunpack.c.l.b16 %v492
        %v1168 = vunpack.c.l.b16 %v493
        %v1169 = vunpack.c.l.b16 %v494
        %v1170 = vunpack.c.l.b16 %v495
        %v1171 = vunpack.c.l.b16 %v496
        %v1172 = vunpack.c.l.b16 %v497
        %v1173 = vunpack.c.l.b16 %v498
        %v1174 = vunpack.c.l.b16 %v499
        %v1175 = vunpack.c.l.b16 %v500
        %v1176 = vunpack.c.l.b16 %v501
        %v1177 = vunpack.c.l.b16 %v502
        %v1178 = vunpack.c.l.b16 %v503
        %v1179 = vunpack.c.l.b16 %v504
        %v1180 = vunpack.c.l.b16 %v505
        %v1181 = vunpack.c.l.b16 %v506
        %v1182 = vunpack.c.l.b16 %v507
        %v1183 = vunpack.c.l.b16 %v508
        %v1184 = vunpack.c.l.b16 %v509
        %v1185 = vunpack.c.l.b16 %v510
        %v1186 = vunpack.c.l.b16 %v511
        %v1187 = vunpack.c.l.b16 %v512
        %v1188 = vunpack.c.l.b16 %v513
        %v1189 = vunpack.c.l.b16 %v514
        %v1190 = vunpack.c.l.b16 %v515
        %v1191 = vunpack.c.l.b16 %v516
        %v1192 = vunpack.c.l.b16 %v517
        %v1193 = vunpack.c.l.b16 %v518
        %v1194 = vunpack.c.l.b16 %v519
        %v1195 = vunpack.c.l.b16 %v520
        %v1196 = vunpack.c.l.b16 %v521
        %v1197 = vunpack.c.l.b16 %v522
        %v1198 = vunpack.c.l.b16 %v523
        %v1199 = vunpack.c.l.b16 %v524
        %v1200 = vunpack.c.l.b16 %v525
        %v1201 = vunpack.c.l.b16 %v526
        %v1202 = vunpack.c.l.b16 %v527
        %v1203 = vunpack.c.l.b16 %v528
        %v1204 = vunpack.c.l.b16 %v529
        %v1205 = vunpack.c.l.b16 %v530
        %v1206 = vunpack.c.l.b16 %v531
        %v1207 = vunpack.c.l.b16 %v532
        %v1208 = vunpack.c.l.b16 %v533
        %v1209 = vunpack.c.l.b16 %v534
        %v1210 = vpack.c.b16 %v1147, %v1146
        %v1211 = vpack.c.b16 %v1149, %v1148
        %v1212 = vpack.c.b16 %v1151, %v1150
        %v1213 = vpack.c.b16 %v1153, %v1152
        %v1214 = vpack.c.b16 %v1155, %v1154
        %v1215 = vpack.c.b16 %v1157, %v1156
        %v1216 = vpack.c.b16 %v1159, %v1158
        %v1217 = vpack.c.b16 %v1161, %v1160
        %v1218 = vpack.c.b16 %v1163, %v1162
        %v1219 = vpack.c.b16 %v1165, %v1164
        %v1220 = vpack.c.b16 %v1167, %v1166
        %v1221 = vpack.c.b16 %v1169, %v1168
        %v1222 = vpack.c.b16 %v1171, %v1170
        %v1223 = vpack.c.b16 %v1173, %v1172
        %v1224 = vpack.c.b16 %v1175, %v1174
        %v1225 = vpack.c.b16 %v1177, %v1176
        %v1226 = vpack.c.b16 %v1179, %v1178
        %v1227 = vpack.c.b16 %v1181, %v1180
        %v1228 = vpack.c.b16 %v1183, %v1182
        %v1229 = vpack.c.b16 %v1185, %v1184
        %v1230 = vpack.c.b16 %v1187, %v1186
        %v1231 = vpack.c.b16 %v1189, %v1188
        %v1232 = vpack.c.b16 %v1191, %v1190
        %v1233 = vpack.c.b16 %v1193, %v1192
        %v1234 = vpack.c.b16 %v1195, %v1194
        %v1235 = vpack.c.b16 %v1197, %v1196
        %v1236 = vpack.c.b16 %v1199, %v1198
        %v1237 = vpack.c.b16 %v1201, %v1200
        %v1238 = vpack.c.b16 %v1203, %v1202
        %v1239 = vpack.c.b16 %v1205, %v1204
        %v1240 = vpack.c.b16 %v1207, %v1206
        %v1241 = vpack.c.b16 %v1209, %v1208
        %1274 = vmatprep.subr.bf16.mxu0 0
        %1275 = vmatpush1.bf16.msra.mxu0 %v1217
        %1276 = vmatprep.subr.bf16.mxu0 0
        %1277 = vmatpush1.bf16.msra.mxu0 %v1216
        %1278 = vmatprep.subr.bf16.mxu0 0
        %1279 = vmatpush1.bf16.msra.mxu0 %v1215
        %1280 = vmatprep.subr.bf16.mxu0 0
        %1281 = vmatpush1.bf16.msra.mxu0 %v1214
        %1282 = vmatprep.subr.bf16.mxu0 0
        %1283 = vmatpush1.bf16.msra.mxu0 %v1213
        %1284 = vmatprep.subr.bf16.mxu0 0
        %1285 = vmatpush1.bf16.msra.mxu0 %v1212
        %1286 = vmatprep.subr.bf16.mxu0 0
        %1287 = vmatpush1.bf16.msra.mxu0 %v1211
        %1288 = vmatprep.subr.bf16.mxu0 0
        %1289 = vmatpush1.bf16.msra.mxu0 %v1210
        %1290 = vmatprep.subr.bf16.mxu0 0
        %1291 = vmatpush2.bf16.msra.mxu0 %v1225
        %1292 = vmatprep.subr.bf16.mxu0 0
        %1293 = vmatpush2.bf16.msra.mxu0 %v1224
        %1294 = vmatprep.subr.bf16.mxu0 0
        %1295 = vmatpush2.bf16.msra.mxu0 %v1223
        %1296 = vmatprep.subr.bf16.mxu0 0
        %1297 = vmatpush2.bf16.msra.mxu0 %v1222
        %1298 = vmatprep.subr.bf16.mxu0 0
        %1299 = vmatpush2.bf16.msra.mxu0 %v1221
        %1300 = vmatprep.subr.bf16.mxu0 0
        %1301 = vmatpush2.bf16.msra.mxu0 %v1220
        %1302 = vmatprep.subr.bf16.mxu0 0
        %1303 = vmatpush2.bf16.msra.mxu0 %v1219
        %1304 = vmatprep.subr.bf16.mxu0 0
        %1305 = vmatpush2.bf16.msra.mxu0 %v1218
        %1306 = vmatprep.mubr.bf16.mxu0 %v867
        %1307 = vmatmul.mubr.bf16.gmra.mxu0 %v866
        %v1308 = vpop.f32.mrf.mxu0
        %v1309 = vadd.f32 %v540, %v1308
        %v1310 = vpop.f32.mrf.mxu0
        %v1311 = vpop.f32.mrf.mxu0
        %v1312 = vadd.f32 %v540, %v1311
        %v1313 = vpop.f32.mrf.mxu0
        %1314 = vmatprep.mubr.bf16.mxu0 %v871
        %1315 = vmatmul.mubr.bf16.gmra.mxu0 %v870
        %v1316 = vpop.f32.mrf.mxu0
        %v1317 = vadd.f32 %v540, %v1316
        %v1318 = vpop.f32.mrf.mxu0
        %v1319 = vpop.f32.mrf.mxu0
        %v1320 = vadd.f32 %v540, %v1319
        %v1321 = vpop.f32.mrf.mxu0
        %1322 = vmatprep.mubr.bf16.mxu0 %v875
        %1323 = vmatmul.mubr.bf16.gmra.mxu0 %v874
        %v1324 = vpop.f32.mrf.mxu0
        %v1325 = vadd.f32 %v540, %v1324
        %v1326 = vpop.f32.mrf.mxu0
        %v1327 = vpop.f32.mrf.mxu0
        %v1328 = vadd.f32 %v540, %v1327
        %v1329 = vpop.f32.mrf.mxu0
        %1330 = vmatprep.mubr.bf16.mxu0 %v879
        %1331 = vmatmul.mubr.bf16.gmra.mxu0 %v878
        %v1332 = vpop.f32.mrf.mxu0
        %v1333 = vadd.f32 %v540, %v1332
        %v1334 = vpop.f32.mrf.mxu0
        %v1335 = vpop.f32.mrf.mxu0
        %v1336 = vadd.f32 %v540, %v1335
        %v1337 = vpop.f32.mrf.mxu0
        %1338 = vmatprep.mubr.bf16.mxu0 %v883
        %1339 = vmatmul.mubr.bf16.gmra.mxu0 %v882
        %v1340 = vpop.f32.mrf.mxu0
        %v1341 = vadd.f32 %v540, %v1340
        %v1342 = vpop.f32.mrf.mxu0
        %v1343 = vpop.f32.mrf.mxu0
        %v1344 = vadd.f32 %v540, %v1343
        %v1345 = vpop.f32.mrf.mxu0
        %1346 = vmatprep.mubr.bf16.mxu0 %v887
        %1347 = vmatmul.mubr.bf16.gmra.mxu0 %v886
        %v1348 = vpop.f32.mrf.mxu0
        %v1349 = vadd.f32 %v540, %v1348
        %v1350 = vpop.f32.mrf.mxu0
        %v1351 = vpop.f32.mrf.mxu0
        %v1352 = vadd.f32 %v540, %v1351
        %v1353 = vpop.f32.mrf.mxu0
        %1354 = vmatprep.mubr.bf16.mxu0 %v891
        %1355 = vmatmul.mubr.bf16.gmra.mxu0 %v890
        %v1356 = vpop.f32.mrf.mxu0
        %v1357 = vadd.f32 %v540, %v1356
        %v1358 = vpop.f32.mrf.mxu0
        %v1359 = vpop.f32.mrf.mxu0
        %v1360 = vadd.f32 %v540, %v1359
        %v1361 = vpop.f32.mrf.mxu0
        %1362 = vmatprep.mubr.bf16.mxu0 %v895
        %1363 = vmatmul.mubr.bf16.gmra.mxu0 %v894
        %v1364 = vpop.f32.mrf.mxu0
        %v1365 = vadd.f32 %v540, %v1364
        %v1366 = vpop.f32.mrf.mxu0
        %v1367 = vpop.f32.mrf.mxu0
        %v1368 = vadd.f32 %v540, %v1367
        %v1369 = vpop.f32.mrf.mxu0
        %1370 = vmatprep.mubr.bf16.mxu0 %v899
        %1371 = vmatmul.mubr.bf16.gmra.mxu0 %v898
        %v1372 = vpop.f32.mrf.mxu0
        %v1373 = vadd.f32 %v540, %v1372
        %v1374 = vpop.f32.mrf.mxu0
        %v1375 = vpop.f32.mrf.mxu0
        %v1376 = vadd.f32 %v540, %v1375
        %v1377 = vpop.f32.mrf.mxu0
        %1378 = vmatprep.mubr.bf16.mxu0 %v903
        %1379 = vmatmul.mubr.bf16.gmra.mxu0 %v902
        %v1380 = vpop.f32.mrf.mxu0
        %v1381 = vadd.f32 %v540, %v1380
        %v1382 = vpop.f32.mrf.mxu0
        %v1383 = vpop.f32.mrf.mxu0
        %v1384 = vadd.f32 %v540, %v1383
        %v1385 = vpop.f32.mrf.mxu0
        %1386 = vmatprep.mubr.bf16.mxu0 %v907
        %1387 = vmatmul.mubr.bf16.gmra.mxu0 %v906
        %v1388 = vpop.f32.mrf.mxu0
        %v1389 = vadd.f32 %v540, %v1388
        %v1390 = vpop.f32.mrf.mxu0
        %v1391 = vpop.f32.mrf.mxu0
        %v1392 = vadd.f32 %v540, %v1391
        %v1393 = vpop.f32.mrf.mxu0
        %1394 = vmatprep.mubr.bf16.mxu0 %v911
        %1395 = vmatmul.mubr.bf16.gmra.mxu0 %v910
        %v1396 = vpop.f32.mrf.mxu0
        %v1397 = vadd.f32 %v540, %v1396
        %v1398 = vpop.f32.mrf.mxu0
        %v1399 = vpop.f32.mrf.mxu0
        %v1400 = vadd.f32 %v540, %v1399
        %v1401 = vpop.f32.mrf.mxu0
        %1402 = vmatprep.mubr.bf16.mxu0 %v915
        %1403 = vmatmul.mubr.bf16.gmra.mxu0 %v914
        %v1404 = vpop.f32.mrf.mxu0
        %v1405 = vadd.f32 %v540, %v1404
        %v1406 = vpop.f32.mrf.mxu0
        %v1407 = vpop.f32.mrf.mxu0
        %v1408 = vadd.f32 %v540, %v1407
        %v1409 = vpop.f32.mrf.mxu0
        %1410 = vmatprep.mubr.bf16.mxu0 %v919
        %1411 = vmatmul.mubr.bf16.gmra.mxu0 %v918
        %v1412 = vpop.f32.mrf.mxu0
        %v1413 = vadd.f32 %v540, %v1412
        %v1414 = vpop.f32.mrf.mxu0
        %v1415 = vpop.f32.mrf.mxu0
        %v1416 = vadd.f32 %v540, %v1415
        %v1417 = vpop.f32.mrf.mxu0
        %1418 = vmatprep.mubr.bf16.mxu0 %v923
        %1419 = vmatmul.mubr.bf16.gmra.mxu0 %v922
        %v1420 = vpop.f32.mrf.mxu0
        %v1421 = vadd.f32 %v540, %v1420
        %v1422 = vpop.f32.mrf.mxu0
        %v1423 = vpop.f32.mrf.mxu0
        %v1424 = vadd.f32 %v540, %v1423
        %v1425 = vpop.f32.mrf.mxu0
        %1426 = vmatprep.mubr.bf16.mxu0 %v927
        %1427 = vmatmul.mubr.bf16.gmra.mxu0 %v926
        %v1428 = vpop.f32.mrf.mxu0
        %v1429 = vadd.f32 %v540, %v1428
        %v1430 = vpop.f32.mrf.mxu0
        %v1431 = vpop.f32.mrf.mxu0
        %v1432 = vadd.f32 %v540, %v1431
        %v1433 = vpop.f32.mrf.mxu0
        %1434 = vmatprep.mubr.bf16.mxu0 %v931
        %1435 = vmatmul.mubr.bf16.gmra.mxu0 %v930
        %v1436 = vpop.f32.mrf.mxu0
        %v1437 = vadd.f32 %v540, %v1436
        %v1438 = vpop.f32.mrf.mxu0
        %v1439 = vpop.f32.mrf.mxu0
        %v1440 = vadd.f32 %v540, %v1439
        %v1441 = vpop.f32.mrf.mxu0
        %1442 = vmatprep.mubr.bf16.mxu0 %v935
        %1443 = vmatmul.mubr.bf16.gmra.mxu0 %v934
        %v1444 = vpop.f32.mrf.mxu0
        %v1445 = vadd.f32 %v540, %v1444
        %v1446 = vpop.f32.mrf.mxu0
        %v1447 = vpop.f32.mrf.mxu0
        %v1448 = vadd.f32 %v540, %v1447
        %v1449 = vpop.f32.mrf.mxu0
        %1450 = vmatprep.mubr.bf16.mxu0 %v939
        %1451 = vmatmul.mubr.bf16.gmra.mxu0 %v938
        %v1452 = vpop.f32.mrf.mxu0
        %v1453 = vadd.f32 %v540, %v1452
        %v1454 = vpop.f32.mrf.mxu0
        %v1455 = vpop.f32.mrf.mxu0
        %v1456 = vadd.f32 %v540, %v1455
        %v1457 = vpop.f32.mrf.mxu0
        %1458 = vmatprep.mubr.bf16.mxu0 %v943
        %1459 = vmatmul.mubr.bf16.gmra.mxu0 %v942
        %v1460 = vpop.f32.mrf.mxu0
        %v1461 = vadd.f32 %v540, %v1460
        %v1462 = vpop.f32.mrf.mxu0
        %v1463 = vpop.f32.mrf.mxu0
        %v1464 = vadd.f32 %v540, %v1463
        %v1465 = vpop.f32.mrf.mxu0
        %1466 = vmatprep.mubr.bf16.mxu0 %v947
        %1467 = vmatmul.mubr.bf16.gmra.mxu0 %v946
        %v1468 = vpop.f32.mrf.mxu0
        %v1469 = vadd.f32 %v540, %v1468
        %v1470 = vpop.f32.mrf.mxu0
        %v1471 = vpop.f32.mrf.mxu0
        %v1472 = vadd.f32 %v540, %v1471
        %v1473 = vpop.f32.mrf.mxu0
        %1474 = vmatprep.mubr.bf16.mxu0 %v951
        %1475 = vmatmul.mubr.bf16.gmra.mxu0 %v950
        %v1476 = vpop.f32.mrf.mxu0
        %v1477 = vadd.f32 %v540, %v1476
        %v1478 = vpop.f32.mrf.mxu0
        %v1479 = vpop.f32.mrf.mxu0
        %v1480 = vadd.f32 %v540, %v1479
        %v1481 = vpop.f32.mrf.mxu0
        %1482 = vmatprep.mubr.bf16.mxu0 %v955
        %1483 = vmatmul.mubr.bf16.gmra.mxu0 %v954
        %v1484 = vpop.f32.mrf.mxu0
        %v1485 = vadd.f32 %v540, %v1484
        %v1486 = vpop.f32.mrf.mxu0
        %v1487 = vpop.f32.mrf.mxu0
        %v1488 = vadd.f32 %v540, %v1487
        %v1489 = vpop.f32.mrf.mxu0
        %1490 = vmatprep.mubr.bf16.mxu0 %v959
        %1491 = vmatmul.mubr.bf16.gmra.mxu0 %v958
        %v1492 = vpop.f32.mrf.mxu0
        %v1493 = vadd.f32 %v540, %v1492
        %v1494 = vpop.f32.mrf.mxu0
        %v1495 = vpop.f32.mrf.mxu0
        %v1496 = vadd.f32 %v540, %v1495
        %v1497 = vpop.f32.mrf.mxu0
        %1498 = vmatprep.mubr.bf16.mxu0 %v963
        %1499 = vmatmul.mubr.bf16.gmra.mxu0 %v962
        %v1500 = vpop.f32.mrf.mxu0
        %v1501 = vadd.f32 %v540, %v1500
        %v1502 = vpop.f32.mrf.mxu0
        %v1503 = vpop.f32.mrf.mxu0
        %v1504 = vadd.f32 %v540, %v1503
        %v1505 = vpop.f32.mrf.mxu0
        %1506 = vmatprep.mubr.bf16.mxu0 %v967
        %1507 = vmatmul.mubr.bf16.gmra.mxu0 %v966
        %v1508 = vpop.f32.mrf.mxu0
        %v1509 = vadd.f32 %v540, %v1508
        %v1510 = vpop.f32.mrf.mxu0
        %v1511 = vpop.f32.mrf.mxu0
        %v1512 = vadd.f32 %v540, %v1511
        %v1513 = vpop.f32.mrf.mxu0
        %1514 = vmatprep.mubr.bf16.mxu0 %v971
        %1515 = vmatmul.mubr.bf16.gmra.mxu0 %v970
        %v1516 = vpop.f32.mrf.mxu0
        %v1517 = vadd.f32 %v540, %v1516
        %v1518 = vpop.f32.mrf.mxu0
        %v1519 = vpop.f32.mrf.mxu0
        %v1520 = vadd.f32 %v540, %v1519
        %v1521 = vpop.f32.mrf.mxu0
        %1522 = vdwg.mxu0
        %1523 = vmatprep.subr.bf16.mxu0 0
        %1524 = vmatpush1.bf16.msra.mxu0 %v1233
        %1525 = vmatprep.subr.bf16.mxu0 0
        %1526 = vmatpush1.bf16.msra.mxu0 %v1232
        %1527 = vmatprep.subr.bf16.mxu0 0
        %1528 = vmatpush1.bf16.msra.mxu0 %v1231
        %1529 = vmatprep.subr.bf16.mxu0 0
        %1530 = vmatpush1.bf16.msra.mxu0 %v1230
        %1531 = vmatprep.subr.bf16.mxu0 0
        %1532 = vmatpush1.bf16.msra.mxu0 %v1229
        %1533 = vmatprep.subr.bf16.mxu0 0
        %1534 = vmatpush1.bf16.msra.mxu0 %v1228
        %1535 = vmatprep.subr.bf16.mxu0 0
        %1536 = vmatpush1.bf16.msra.mxu0 %v1227
        %1537 = vmatprep.subr.bf16.mxu0 0
        %1538 = vmatpush1.bf16.msra.mxu0 %v1226
        %1539 = vmatprep.subr.bf16.mxu0 0
        %1540 = vmatpush2.bf16.msra.mxu0 %v1241
        %1541 = vmatprep.subr.bf16.mxu0 0
        %1542 = vmatpush2.bf16.msra.mxu0 %v1240
        %1543 = vmatprep.subr.bf16.mxu0 0
        %1544 = vmatpush2.bf16.msra.mxu0 %v1239
        %1545 = vmatprep.subr.bf16.mxu0 0
        %1546 = vmatpush2.bf16.msra.mxu0 %v1238
        %1547 = vmatprep.subr.bf16.mxu0 0
        %1548 = vmatpush2.bf16.msra.mxu0 %v1237
        %1549 = vmatprep.subr.bf16.mxu0 0
        %1550 = vmatpush2.bf16.msra.mxu0 %v1236
        %1551 = vmatprep.subr.bf16.mxu0 0
        %1552 = vmatpush2.bf16.msra.mxu0 %v1235
        %1553 = vmatprep.subr.bf16.mxu0 0
        %1554 = vmatpush2.bf16.msra.mxu0 %v1234
        %1555 = vmatprep.mubr.bf16.mxu0 %v869
        %1556 = vmatmul.mubr.bf16.gmra.mxu0 %v868
        %v1557 = vpop.f32.mrf.mxu0
        %v1558 = vadd.f32 %v1309, %v1557
        %v1559 = vpop.f32.mrf.mxu0
        %v1560 = vpop.f32.mrf.mxu0
        %v1561 = vadd.f32 %v1312, %v1560
        %v1562 = vpop.f32.mrf.mxu0
        %1563 = vmatprep.mubr.bf16.mxu0 %v873
        %1564 = vmatmul.mubr.bf16.gmra.mxu0 %v872
        %v1565 = vpop.f32.mrf.mxu0
        %v1566 = vadd.f32 %v1317, %v1565
        %v1567 = vpop.f32.mrf.mxu0
        %v1568 = vpop.f32.mrf.mxu0
        %v1569 = vadd.f32 %v1320, %v1568
        %v1570 = vpop.f32.mrf.mxu0
        %1571 = vmatprep.mubr.bf16.mxu0 %v877
        %1572 = vmatmul.mubr.bf16.gmra.mxu0 %v876
        %v1573 = vpop.f32.mrf.mxu0
        %v1574 = vadd.f32 %v1325, %v1573
        %v1575 = vpop.f32.mrf.mxu0
        %v1576 = vpop.f32.mrf.mxu0
        %v1577 = vadd.f32 %v1328, %v1576
        %v1578 = vpop.f32.mrf.mxu0
        %1579 = vmatprep.mubr.bf16.mxu0 %v881
        %1580 = vmatmul.mubr.bf16.gmra.mxu0 %v880
        %v1581 = vpop.f32.mrf.mxu0
        %v1582 = vadd.f32 %v1333, %v1581
        %v1583 = vpop.f32.mrf.mxu0
        %v1584 = vpop.f32.mrf.mxu0
        %v1585 = vadd.f32 %v1336, %v1584
        %v1586 = vpop.f32.mrf.mxu0
        %1587 = vmatprep.mubr.bf16.mxu0 %v885
        %1588 = vmatmul.mubr.bf16.gmra.mxu0 %v884
        %v1589 = vpop.f32.mrf.mxu0
        %v1590 = vadd.f32 %v1341, %v1589
        %v1591 = vpop.f32.mrf.mxu0
        %v1592 = vpop.f32.mrf.mxu0
        %v1593 = vadd.f32 %v1344, %v1592
        %v1594 = vpop.f32.mrf.mxu0
        %1595 = vmatprep.mubr.bf16.mxu0 %v889
        %1596 = vmatmul.mubr.bf16.gmra.mxu0 %v888
        %v1597 = vpop.f32.mrf.mxu0
        %v1598 = vadd.f32 %v1349, %v1597
        %v1599 = vpop.f32.mrf.mxu0
        %v1600 = vpop.f32.mrf.mxu0
        %v1601 = vadd.f32 %v1352, %v1600
        %v1602 = vpop.f32.mrf.mxu0
        %1603 = vmatprep.mubr.bf16.mxu0 %v893
        %1604 = vmatmul.mubr.bf16.gmra.mxu0 %v892
        %v1605 = vpop.f32.mrf.mxu0
        %v1606 = vadd.f32 %v1357, %v1605
        %v1607 = vpop.f32.mrf.mxu0
        %v1608 = vpop.f32.mrf.mxu0
        %v1609 = vadd.f32 %v1360, %v1608
        %v1610 = vpop.f32.mrf.mxu0
        %1611 = vmatprep.mubr.bf16.mxu0 %v897
        %1612 = vmatmul.mubr.bf16.gmra.mxu0 %v896
        %v1613 = vpop.f32.mrf.mxu0
        %v1614 = vadd.f32 %v1365, %v1613
        %v1615 = vpop.f32.mrf.mxu0
        %v1616 = vpop.f32.mrf.mxu0
        %v1617 = vadd.f32 %v1368, %v1616
        %v1618 = vpop.f32.mrf.mxu0
        %1619 = vmatprep.mubr.bf16.mxu0 %v901
        %1620 = vmatmul.mubr.bf16.gmra.mxu0 %v900
        %v1621 = vpop.f32.mrf.mxu0
        %v1622 = vadd.f32 %v1373, %v1621
        %v1623 = vpop.f32.mrf.mxu0
        %v1624 = vpop.f32.mrf.mxu0
        %v1625 = vadd.f32 %v1376, %v1624
        %v1626 = vpop.f32.mrf.mxu0
        %1627 = vmatprep.mubr.bf16.mxu0 %v905
        %1628 = vmatmul.mubr.bf16.gmra.mxu0 %v904
        %v1629 = vpop.f32.mrf.mxu0
        %v1630 = vadd.f32 %v1381, %v1629
        %v1631 = vpop.f32.mrf.mxu0
        %v1632 = vpop.f32.mrf.mxu0
        %v1633 = vadd.f32 %v1384, %v1632
        %v1634 = vpop.f32.mrf.mxu0
        %1635 = vmatprep.mubr.bf16.mxu0 %v909
        %1636 = vmatmul.mubr.bf16.gmra.mxu0 %v908
        %v1637 = vpop.f32.mrf.mxu0
        %v1638 = vadd.f32 %v1389, %v1637
        %v1639 = vpop.f32.mrf.mxu0
        %v1640 = vpop.f32.mrf.mxu0
        %v1641 = vadd.f32 %v1392, %v1640
        %v1642 = vpop.f32.mrf.mxu0
        %1643 = vmatprep.mubr.bf16.mxu0 %v913
        %1644 = vmatmul.mubr.bf16.gmra.mxu0 %v912
        %v1645 = vpop.f32.mrf.mxu0
        %v1646 = vadd.f32 %v1397, %v1645
        %v1647 = vpop.f32.mrf.mxu0
        %v1648 = vpop.f32.mrf.mxu0
        %v1649 = vadd.f32 %v1400, %v1648
        %v1650 = vpop.f32.mrf.mxu0
        %1651 = vmatprep.mubr.bf16.mxu0 %v917
        %1652 = vmatmul.mubr.bf16.gmra.mxu0 %v916
        %v1653 = vpop.f32.mrf.mxu0
        %v1654 = vadd.f32 %v1405, %v1653
        %v1655 = vpop.f32.mrf.mxu0
        %v1656 = vpop.f32.mrf.mxu0
        %v1657 = vadd.f32 %v1408, %v1656
        %v1658 = vpop.f32.mrf.mxu0
        %1659 = vmatprep.mubr.bf16.mxu0 %v921
        %1660 = vmatmul.mubr.bf16.gmra.mxu0 %v920
        %v1661 = vpop.f32.mrf.mxu0
        %v1662 = vadd.f32 %v1413, %v1661
        %v1663 = vpop.f32.mrf.mxu0
        %v1664 = vpop.f32.mrf.mxu0
        %v1665 = vadd.f32 %v1416, %v1664
        %v1666 = vpop.f32.mrf.mxu0
        %1667 = vmatprep.mubr.bf16.mxu0 %v925
        %1668 = vmatmul.mubr.bf16.gmra.mxu0 %v924
        %v1669 = vpop.f32.mrf.mxu0
        %v1670 = vadd.f32 %v1421, %v1669
        %v1671 = vpop.f32.mrf.mxu0
        %v1672 = vpop.f32.mrf.mxu0
        %v1673 = vadd.f32 %v1424, %v1672
        %v1674 = vpop.f32.mrf.mxu0
        %1675 = vmatprep.mubr.bf16.mxu0 %v929
        %1676 = vmatmul.mubr.bf16.gmra.mxu0 %v928
        %v1677 = vpop.f32.mrf.mxu0
        %v1678 = vadd.f32 %v1429, %v1677
        %v1679 = vpop.f32.mrf.mxu0
        %v1680 = vpop.f32.mrf.mxu0
        %v1681 = vadd.f32 %v1432, %v1680
        %v1682 = vpop.f32.mrf.mxu0
        %1683 = vmatprep.mubr.bf16.mxu0 %v933
        %1684 = vmatmul.mubr.bf16.gmra.mxu0 %v932
        %v1685 = vpop.f32.mrf.mxu0
        %v1686 = vadd.f32 %v1437, %v1685
        %v1687 = vpop.f32.mrf.mxu0
        %v1688 = vpop.f32.mrf.mxu0
        %v1689 = vadd.f32 %v1440, %v1688
        %v1690 = vpop.f32.mrf.mxu0
        %1691 = vmatprep.mubr.bf16.mxu0 %v937
        %1692 = vmatmul.mubr.bf16.gmra.mxu0 %v936
        %v1693 = vpop.f32.mrf.mxu0
        %v1694 = vadd.f32 %v1445, %v1693
        %v1695 = vpop.f32.mrf.mxu0
        %v1696 = vpop.f32.mrf.mxu0
        %v1697 = vadd.f32 %v1448, %v1696
        %v1698 = vpop.f32.mrf.mxu0
        %1699 = vmatprep.mubr.bf16.mxu0 %v941
        %1700 = vmatmul.mubr.bf16.gmra.mxu0 %v940
        %v1701 = vpop.f32.mrf.mxu0
        %v1702 = vadd.f32 %v1453, %v1701
        %v1703 = vpop.f32.mrf.mxu0
        %v1704 = vpop.f32.mrf.mxu0
        %v1705 = vadd.f32 %v1456, %v1704
        %v1706 = vpop.f32.mrf.mxu0
        %1707 = vmatprep.mubr.bf16.mxu0 %v945
        %1708 = vmatmul.mubr.bf16.gmra.mxu0 %v944
        %v1709 = vpop.f32.mrf.mxu0
        %v1710 = vadd.f32 %v1461, %v1709
        %v1711 = vpop.f32.mrf.mxu0
        %v1712 = vpop.f32.mrf.mxu0
        %v1713 = vadd.f32 %v1464, %v1712
        %v1714 = vpop.f32.mrf.mxu0
        %1715 = vmatprep.mubr.bf16.mxu0 %v949
        %1716 = vmatmul.mubr.bf16.gmra.mxu0 %v948
        %v1717 = vpop.f32.mrf.mxu0
        %v1718 = vadd.f32 %v1469, %v1717
        %v1719 = vpop.f32.mrf.mxu0
        %v1720 = vpop.f32.mrf.mxu0
        %v1721 = vadd.f32 %v1472, %v1720
        %v1722 = vpop.f32.mrf.mxu0
        %1723 = vmatprep.mubr.bf16.mxu0 %v953
        %1724 = vmatmul.mubr.bf16.gmra.mxu0 %v952
        %v1725 = vpop.f32.mrf.mxu0
        %v1726 = vadd.f32 %v1477, %v1725
        %v1727 = vpop.f32.mrf.mxu0
        %v1728 = vpop.f32.mrf.mxu0
        %v1729 = vadd.f32 %v1480, %v1728
        %v1730 = vpop.f32.mrf.mxu0
        %1731 = vmatprep.mubr.bf16.mxu0 %v957
        %1732 = vmatmul.mubr.bf16.gmra.mxu0 %v956
        %v1733 = vpop.f32.mrf.mxu0
        %v1734 = vadd.f32 %v1485, %v1733
        %v1735 = vpop.f32.mrf.mxu0
        %v1736 = vpop.f32.mrf.mxu0
        %v1737 = vadd.f32 %v1488, %v1736
        %v1738 = vpop.f32.mrf.mxu0
        %1739 = vmatprep.mubr.bf16.mxu0 %v961
        %1740 = vmatmul.mubr.bf16.gmra.mxu0 %v960
        %v1741 = vpop.f32.mrf.mxu0
        %v1742 = vadd.f32 %v1493, %v1741
        %v1743 = vpop.f32.mrf.mxu0
        %v1744 = vpop.f32.mrf.mxu0
        %v1745 = vadd.f32 %v1496, %v1744
        %v1746 = vpop.f32.mrf.mxu0
        %1747 = vmatprep.mubr.bf16.mxu0 %v965
        %1748 = vmatmul.mubr.bf16.gmra.mxu0 %v964
        %v1749 = vpop.f32.mrf.mxu0
        %v1750 = vadd.f32 %v1501, %v1749
        %v1751 = vpop.f32.mrf.mxu0
        %v1752 = vpop.f32.mrf.mxu0
        %v1753 = vadd.f32 %v1504, %v1752
        %v1754 = vpop.f32.mrf.mxu0
        %1755 = vmatprep.mubr.bf16.mxu0 %v969
        %1756 = vmatmul.mubr.bf16.gmra.mxu0 %v968
        %v1757 = vpop.f32.mrf.mxu0
        %v1758 = vadd.f32 %v1509, %v1757
        %v1759 = vpop.f32.mrf.mxu0
        %v1760 = vpop.f32.mrf.mxu0
        %v1761 = vadd.f32 %v1512, %v1760
        %v1762 = vpop.f32.mrf.mxu0
        %1763 = vmatprep.mubr.bf16.mxu0 %v973
        %1764 = vmatmul.mubr.bf16.gmra.mxu0 %v972
        %v1765 = vpop.f32.mrf.mxu0
        %v1766 = vadd.f32 %v1517, %v1765
        %v1767 = vpop.f32.mrf.mxu0
        %v1768 = vpop.f32.mrf.mxu0
        %v1769 = vadd.f32 %v1520, %v1768
        %v1770 = vpop.f32.mrf.mxu0
        %1771 = vdwg.mxu0
        %v1772 = vmax.f32 %v1558, 0.0
        %v1773 = vmax.f32 %v1561, 0.0
        %v1774 = vmax.f32 %v1566, 0.0
        %v1775 = vmax.f32 %v1569, 0.0
        %v1776 = vmax.f32 %v1574, 0.0
        %v1777 = vmax.f32 %v1577, 0.0
        %v1778 = vmax.f32 %v1582, 0.0
        %v1779 = vmax.f32 %v1585, 0.0
        %v1780 = vmax.f32 %v1590, 0.0
        %v1781 = vmax.f32 %v1593, 0.0
        %v1782 = vmax.f32 %v1598, 0.0
        %v1783 = vmax.f32 %v1601, 0.0
        %v1784 = vmax.f32 %v1606, 0.0
        %v1785 = vmax.f32 %v1609, 0.0
        %v1786 = vmax.f32 %v1614, 0.0
        %v1787 = vmax.f32 %v1617, 0.0
        %v1788 = vmax.f32 %v1622, 0.0
        %v1789 = vmax.f32 %v1625, 0.0
        %v1790 = vmax.f32 %v1630, 0.0
        %v1791 = vmax.f32 %v1633, 0.0
        %v1792 = vmax.f32 %v1638, 0.0
        %v1793 = vmax.f32 %v1641, 0.0
        %v1794 = vmax.f32 %v1646, 0.0
        %v1795 = vmax.f32 %v1649, 0.0
        %v1796 = vmax.f32 %v1654, 0.0
        %v1797 = vmax.f32 %v1657, 0.0
        %v1798 = vmax.f32 %v1662, 0.0
        %v1799 = vmax.f32 %v1665, 0.0
        %v1800 = vmax.f32 %v1670, 0.0
        %v1801 = vmax.f32 %v1673, 0.0
        %v1802 = vmax.f32 %v1678, 0.0
        %v1803 = vmax.f32 %v1681, 0.0
        %v1804 = vmax.f32 %v1686, 0.0
        %v1805 = vmax.f32 %v1689, 0.0
        %v1806 = vmax.f32 %v1694, 0.0
        %v1807 = vmax.f32 %v1697, 0.0
        %v1808 = vmax.f32 %v1702, 0.0
        %v1809 = vmax.f32 %v1705, 0.0
        %v1810 = vmax.f32 %v1710, 0.0
        %v1811 = vmax.f32 %v1713, 0.0
        %v1812 = vmax.f32 %v1718, 0.0
        %v1813 = vmax.f32 %v1721, 0.0
        %v1814 = vmax.f32 %v1726, 0.0
        %v1815 = vmax.f32 %v1729, 0.0
        %v1816 = vmax.f32 %v1734, 0.0
        %v1817 = vmax.f32 %v1737, 0.0
        %v1818 = vmax.f32 %v1742, 0.0
        %v1819 = vmax.f32 %v1745, 0.0
        %v1820 = vmax.f32 %v1750, 0.0
        %v1821 = vmax.f32 %v1753, 0.0
        %v1822 = vmax.f32 %v1758, 0.0
        %v1823 = vmax.f32 %v1761, 0.0
        %v1824 = vmax.f32 %v1766, 0.0
        %v1825 = vmax.f32 %v1769, 0.0
        %s1826 = smul.u32 %s31, 16
        %v1827 = vstv %s1826
        %v1828 = vadd.s32 %v1827, 1
        %v1829 = vadd.s32 %v1827, 2
        %v1830 = vadd.s32 %v1827, 3
        %v1831 = vadd.s32 %v1827, 4
        %v1832 = vadd.s32 %v1827, 5
        %v1833 = vadd.s32 %v1827, 6
        %v1834 = vadd.s32 %v1827, 7
        %v1835 = vadd.s32 %v1827, 8
        %v1836 = vadd.s32 %v1827, 9
        %v1837 = vadd.s32 %v1827, 10
        %v1838 = vadd.s32 %v1827, 11
        %v1839 = vadd.s32 %v1827, 12
        %v1840 = vadd.s32 %v1827, 13
        %v1841 = vadd.s32 %v1827, 14
        %v1842 = vadd.s32 %v1827, 15
        %v1843 = vadd.s32 %v1827, 16
        %v1844 = vadd.s32 %v1827, 17
        %v1845 = vlaneseq
        %v1846 = vshrl.u32 %v1845, 7
        %v1847 = vadd.s32 %v1846, 8
        %v1848 = vadd.s32 %v1846, 16
        %vm1849 = vcmp.ge.s32.totalorder %v1827, 1
        %vm1850 = vcmp.ge.s32.totalorder %v1828, 1
        %vm1851 = vcmp.ge.s32.totalorder %v1829, 1
        %vm1852 = vcmp.ge.s32.totalorder %v1830, 1
        %vm1853 = vcmp.ge.s32.totalorder %v1831, 1
        %vm1854 = vcmp.ge.s32.totalorder %v1832, 1
        %vm1855 = vcmp.ge.s32.totalorder %v1833, 1
        %vm1856 = vcmp.ge.s32.totalorder %v1834, 1
        %vm1857 = vcmp.ge.s32.totalorder %v1835, 1
        %vm1858 = vcmp.ge.s32.totalorder %v1836, 1
        %vm1859 = vcmp.ge.s32.totalorder %v1837, 1
        %vm1860 = vcmp.ge.s32.totalorder %v1838, 1
        %vm1861 = vcmp.ge.s32.totalorder %v1839, 1
        %vm1862 = vcmp.ge.s32.totalorder %v1840, 1
        %vm1863 = vcmp.ge.s32.totalorder %v1841, 1
        %vm1864 = vcmp.ge.s32.totalorder %v1842, 1
        %vm1865 = vcmp.ge.s32.totalorder %v1843, 1
        %vm1866 = vcmp.ge.s32.totalorder %v1844, 1
        %vm1867 = vcmp.le.s32.totalorder %v1827, 16
        %vm1868 = vcmp.le.s32.totalorder %v1828, 16
        %vm1869 = vcmp.le.s32.totalorder %v1829, 16
        %vm1870 = vcmp.le.s32.totalorder %v1830, 16
        %vm1871 = vcmp.le.s32.totalorder %v1831, 16
        %vm1872 = vcmp.le.s32.totalorder %v1832, 16
        %vm1873 = vcmp.le.s32.totalorder %v1833, 16
        %vm1874 = vcmp.le.s32.totalorder %v1834, 16
        %vm1875 = vcmp.le.s32.totalorder %v1835, 16
        %vm1876 = vcmp.le.s32.totalorder %v1836, 16
        %vm1877 = vcmp.le.s32.totalorder %v1837, 16
        %vm1878 = vcmp.le.s32.totalorder %v1838, 16
        %vm1879 = vcmp.le.s32.totalorder %v1839, 16
        %vm1880 = vcmp.le.s32.totalorder %v1840, 16
        %vm1881 = vcmp.le.s32.totalorder %v1841, 16
        %vm1882 = vcmp.le.s32.totalorder %v1842, 16
        %vm1883 = vcmp.le.s32.totalorder %v1843, 16
        %vm1884 = vcmp.le.s32.totalorder %v1844, 16
        %vm1885 = vmand %vm1849, %vm1867
        %vm1886 = vmand %vm1850, %vm1868
        %vm1887 = vmand %vm1851, %vm1869
        %vm1888 = vmand %vm1852, %vm1870
        %vm1889 = vmand %vm1853, %vm1871
        %vm1890 = vmand %vm1854, %vm1872
        %vm1891 = vmand %vm1855, %vm1873
        %vm1892 = vmand %vm1856, %vm1874
        %vm1893 = vmand %vm1857, %vm1875
        %vm1894 = vmand %vm1858, %vm1876
        %vm1895 = vmand %vm1859, %vm1877
        %vm1896 = vmand %vm1860, %vm1878
        %vm1897 = vmand %vm1861, %vm1879
        %vm1898 = vmand %vm1862, %vm1880
        %vm1899 = vmand %vm1863, %vm1881
        %vm1900 = vmand %vm1864, %vm1882
        %vm1901 = vmand %vm1865, %vm1883
        %vm1902 = vmand %vm1866, %vm1884
        %vm1903 = vcmp.ge.s32.totalorder %v1846, 1
        %vm1904 = vcmp.ge.s32.totalorder %v1847, 1
        %vm1905 = vcmp.ge.s32.totalorder %v1848, 1
        %vm1906 = vmand %vm1885, %vm1903
        %vm1907 = vmand %vm1885, %vm1904
        %vm1908 = vmand %vm1885, %vm1905
        %vm1909 = vmand %vm1886, %vm1903
        %vm1910 = vmand %vm1886, %vm1904
        %vm1911 = vmand %vm1886, %vm1905
        %vm1912 = vmand %vm1887, %vm1903
        %vm1913 = vmand %vm1887, %vm1904
        %vm1914 = vmand %vm1887, %vm1905
        %vm1915 = vmand %vm1888, %vm1903
        %vm1916 = vmand %vm1888, %vm1904
        %vm1917 = vmand %vm1888, %vm1905
        %vm1918 = vmand %vm1889, %vm1903
        %vm1919 = vmand %vm1889, %vm1904
        %vm1920 = vmand %vm1889, %vm1905
        %vm1921 = vmand %vm1890, %vm1903
        %vm1922 = vmand %vm1890, %vm1904
        %vm1923 = vmand %vm1890, %vm1905
        %vm1924 = vmand %vm1891, %vm1903
        %vm1925 = vmand %vm1891, %vm1904
        %vm1926 = vmand %vm1891, %vm1905
        %vm1927 = vmand %vm1892, %vm1903
        %vm1928 = vmand %vm1892, %vm1904
        %vm1929 = vmand %vm1892, %vm1905
        %vm1930 = vmand %vm1893, %vm1903
        %vm1931 = vmand %vm1893, %vm1904
        %vm1932 = vmand %vm1893, %vm1905
        %vm1933 = vmand %vm1894, %vm1903
        %vm1934 = vmand %vm1894, %vm1904
        %vm1935 = vmand %vm1894, %vm1905
        %vm1936 = vmand %vm1895, %vm1903
        %vm1937 = vmand %vm1895, %vm1904
        %vm1938 = vmand %vm1895, %vm1905
        %vm1939 = vmand %vm1896, %vm1903
        %vm1940 = vmand %vm1896, %vm1904
        %vm1941 = vmand %vm1896, %vm1905
        %vm1942 = vmand %vm1897, %vm1903
        %vm1943 = vmand %vm1897, %vm1904
        %vm1944 = vmand %vm1897, %vm1905
        %vm1945 = vmand %vm1898, %vm1903
        %vm1946 = vmand %vm1898, %vm1904
        %vm1947 = vmand %vm1898, %vm1905
        %vm1948 = vmand %vm1899, %vm1903
        %vm1949 = vmand %vm1899, %vm1904
        %vm1950 = vmand %vm1899, %vm1905
        %vm1951 = vmand %vm1900, %vm1903
        %vm1952 = vmand %vm1900, %vm1904
        %vm1953 = vmand %vm1900, %vm1905
        %vm1954 = vmand %vm1901, %vm1903
        %vm1955 = vmand %vm1901, %vm1904
        %vm1956 = vmand %vm1901, %vm1905
        %vm1957 = vmand %vm1902, %vm1903
        %vm1958 = vmand %vm1902, %vm1904
        %vm1959 = vmand %vm1902, %vm1905
        %vm1960 = vcmp.le.s32.totalorder %v1846, 16
        %vm1961 = vcmp.le.s32.totalorder %v1847, 16
        %vm1962 = vcmp.le.s32.totalorder %v1848, 16
        %vm1963 = vmand %vm1906, %vm1960
        %vm1964 = vmand %vm1907, %vm1961
        %vm1965 = vmand %vm1908, %vm1962
        %vm1966 = vmand %vm1909, %vm1960
        %vm1967 = vmand %vm1910, %vm1961
        %vm1968 = vmand %vm1911, %vm1962
        %vm1969 = vmand %vm1912, %vm1960
        %vm1970 = vmand %vm1913, %vm1961
        %vm1971 = vmand %vm1914, %vm1962
        %vm1972 = vmand %vm1915, %vm1960
        %vm1973 = vmand %vm1916, %vm1961
        %vm1974 = vmand %vm1917, %vm1962
        %vm1975 = vmand %vm1918, %vm1960
        %vm1976 = vmand %vm1919, %vm1961
        %vm1977 = vmand %vm1920, %vm1962
        %vm1978 = vmand %vm1921, %vm1960
        %vm1979 = vmand %vm1922, %vm1961
        %vm1980 = vmand %vm1923, %vm1962
        %vm1981 = vmand %vm1924, %vm1960
        %vm1982 = vmand %vm1925, %vm1961
        %vm1983 = vmand %vm1926, %vm1962
        %vm1984 = vmand %vm1927, %vm1960
        %vm1985 = vmand %vm1928, %vm1961
        %vm1986 = vmand %vm1929, %vm1962
        %vm1987 = vmand %vm1930, %vm1960
        %vm1988 = vmand %vm1931, %vm1961
        %vm1989 = vmand %vm1932, %vm1962
        %vm1990 = vmand %vm1933, %vm1960
        %vm1991 = vmand %vm1934, %vm1961
        %vm1992 = vmand %vm1935, %vm1962
        %vm1993 = vmand %vm1936, %vm1960
        %vm1994 = vmand %vm1937, %vm1961
        %vm1995 = vmand %vm1938, %vm1962
        %vm1996 = vmand %vm1939, %vm1960
        %vm1997 = vmand %vm1940, %vm1961
        %vm1998 = vmand %vm1941, %vm1962
        %vm1999 = vmand %vm1942, %vm1960
        %vm2000 = vmand %vm1943, %vm1961
        %vm2001 = vmand %vm1944, %vm1962
        %vm2002 = vmand %vm1945, %vm1960
        %vm2003 = vmand %vm1946, %vm1961
        %vm2004 = vmand %vm1947, %vm1962
        %vm2005 = vmand %vm1948, %vm1960
        %vm2006 = vmand %vm1949, %vm1961
        %vm2007 = vmand %vm1950, %vm1962
        %vm2008 = vmand %vm1951, %vm1960
        %vm2009 = vmand %vm1952, %vm1961
        %vm2010 = vmand %vm1953, %vm1962
        %vm2011 = vmand %vm1954, %vm1960
        %vm2012 = vmand %vm1955, %vm1961
        %vm2013 = vmand %vm1956, %vm1962
        %vm2014 = vmand %vm1957, %vm1960
        %vm2015 = vmand %vm1958, %vm1961
        %vm2016 = vmand %vm1959, %vm1962
        %v2017 = vsel %vm1963, %v1772, 0.0
        %v2018 = vsel %vm1964, %v1773, 0.0
        %v2019 = vsel %vm1965, %v1774, 0.0
        %v2020 = vsel %vm1966, %v1775, 0.0
        %v2021 = vsel %vm1967, %v1776, 0.0
        %v2022 = vsel %vm1968, %v1777, 0.0
        %v2023 = vsel %vm1969, %v1778, 0.0
        %v2024 = vsel %vm1970, %v1779, 0.0
        %v2025 = vsel %vm1971, %v1780, 0.0
        %v2026 = vsel %vm1972, %v1781, 0.0
        %v2027 = vsel %vm1973, %v1782, 0.0
        %v2028 = vsel %vm1974, %v1783, 0.0
        %v2029 = vsel %vm1975, %v1784, 0.0
        %v2030 = vsel %vm1976, %v1785, 0.0
        %v2031 = vsel %vm1977, %v1786, 0.0
        %v2032 = vsel %vm1978, %v1787, 0.0
        %v2033 = vsel %vm1979, %v1788, 0.0
        %v2034 = vsel %vm1980, %v1789, 0.0
        %v2035 = vsel %vm1981, %v1790, 0.0
        %v2036 = vsel %vm1982, %v1791, 0.0
        %v2037 = vsel %vm1983, %v1792, 0.0
        %v2038 = vsel %vm1984, %v1793, 0.0
        %v2039 = vsel %vm1985, %v1794, 0.0
        %v2040 = vsel %vm1986, %v1795, 0.0
        %v2041 = vsel %vm1987, %v1796, 0.0
        %v2042 = vsel %vm1988, %v1797, 0.0
        %v2043 = vsel %vm1989, %v1798, 0.0
        %v2044 = vsel %vm1990, %v1799, 0.0
        %v2045 = vsel %vm1991, %v1800, 0.0
        %v2046 = vsel %vm1992, %v1801, 0.0
        %v2047 = vsel %vm1993, %v1802, 0.0
        %v2048 = vsel %vm1994, %v1803, 0.0
        %v2049 = vsel %vm1995, %v1804, 0.0
        %v2050 = vsel %vm1996, %v1805, 0.0
        %v2051 = vsel %vm1997, %v1806, 0.0
        %v2052 = vsel %vm1998, %v1807, 0.0
        %v2053 = vsel %vm1999, %v1808, 0.0
        %v2054 = vsel %vm2000, %v1809, 0.0
        %v2055 = vsel %vm2001, %v1810, 0.0
        %v2056 = vsel %vm2002, %v1811, 0.0
        %v2057 = vsel %vm2003, %v1812, 0.0
        %v2058 = vsel %vm2004, %v1813, 0.0
        %v2059 = vsel %vm2005, %v1814, 0.0
        %v2060 = vsel %vm2006, %v1815, 0.0
        %v2061 = vsel %vm2007, %v1816, 0.0
        %v2062 = vsel %vm2008, %v1817, 0.0
        %v2063 = vsel %vm2009, %v1818, 0.0
        %v2064 = vsel %vm2010, %v1819, 0.0
        %v2065 = vsel %vm2011, %v1820, 0.0
        %v2066 = vsel %vm2012, %v1821, 0.0
        %v2067 = vsel %vm2013, %v1822, 0.0
        %v2068 = vsel %vm2014, %v1823, 0.0
        %v2069 = vsel %vm2015, %v1824, 0.0
        %v2070 = vsel %vm2016, %v1825, 0.0
        %v2071 = vpack.c.bf16 %v2018, %v2017
        %v2072 = vpack.c.bf16 %v2021, %v2020
        %v2073 = vpack.c.bf16 %v2024, %v2023
        %v2074 = vpack.c.bf16 %v2027, %v2026
        %v2075 = vpack.c.bf16 %v2030, %v2029
        %v2076 = vpack.c.bf16 %v2033, %v2032
        %v2077 = vpack.c.bf16 %v2036, %v2035
        %v2078 = vpack.c.bf16 %v2039, %v2038
        %v2079 = vpack.c.bf16 %v2042, %v2041
        %v2080 = vpack.c.bf16 %v2045, %v2044
        %v2081 = vpack.c.bf16 %v2048, %v2047
        %v2082 = vpack.c.bf16 %v2051, %v2050
        %v2083 = vpack.c.bf16 %v2054, %v2053
        %v2084 = vpack.c.bf16 %v2057, %v2056
        %v2085 = vpack.c.bf16 %v2060, %v2059
        %v2086 = vpack.c.bf16 %v2063, %v2062
        %vm2135 = vcmask 1046528
        %v2136 = vrot.slane %v2017, 1
        %v2137 = vrot.slane %v2018, 1
        %v2138 = vsel %vm2135, %v2136, %v2137
        %v2139 = vrot.slane %v2019, 1
        %v2140 = vsel %vm2135, %v2137, %v2139
        %v2141 = vrot.slane %v2020, 1
        %v2142 = vrot.slane %v2021, 1
        %v2143 = vsel %vm2135, %v2141, %v2142
        %v2144 = vrot.slane %v2022, 1
        %v2145 = vsel %vm2135, %v2142, %v2144
        %v2146 = vrot.slane %v2023, 1
        %v2147 = vrot.slane %v2024, 1
        %v2148 = vsel %vm2135, %v2146, %v2147
        %v2149 = vrot.slane %v2025, 1
        %v2150 = vsel %vm2135, %v2147, %v2149
        %v2151 = vrot.slane %v2026, 1
        %v2152 = vrot.slane %v2027, 1
        %v2153 = vsel %vm2135, %v2151, %v2152
        %v2154 = vrot.slane %v2028, 1
        %v2155 = vsel %vm2135, %v2152, %v2154
        %v2156 = vrot.slane %v2029, 1
        %v2157 = vrot.slane %v2030, 1
        %v2158 = vsel %vm2135, %v2156, %v2157
        %v2159 = vrot.slane %v2031, 1
        %v2160 = vsel %vm2135, %v2157, %v2159
        %v2161 = vrot.slane %v2032, 1
        %v2162 = vrot.slane %v2033, 1
        %v2163 = vsel %vm2135, %v2161, %v2162
        %v2164 = vrot.slane %v2034, 1
        %v2165 = vsel %vm2135, %v2162, %v2164
        %v2166 = vrot.slane %v2035, 1
        %v2167 = vrot.slane %v2036, 1
        %v2168 = vsel %vm2135, %v2166, %v2167
        %v2169 = vrot.slane %v2037, 1
        %v2170 = vsel %vm2135, %v2167, %v2169
        %v2171 = vrot.slane %v2038, 1
        %v2172 = vrot.slane %v2039, 1
        %v2173 = vsel %vm2135, %v2171, %v2172
        %v2174 = vrot.slane %v2040, 1
        %v2175 = vsel %vm2135, %v2172, %v2174
        %v2176 = vrot.slane %v2041, 1
        %v2177 = vrot.slane %v2042, 1
        %v2178 = vsel %vm2135, %v2176, %v2177
        %v2179 = vrot.slane %v2043, 1
        %v2180 = vsel %vm2135, %v2177, %v2179
        %v2181 = vrot.slane %v2044, 1
        %v2182 = vrot.slane %v2045, 1
        %v2183 = vsel %vm2135, %v2181, %v2182
        %v2184 = vrot.slane %v2046, 1
        %v2185 = vsel %vm2135, %v2182, %v2184
        %v2186 = vrot.slane %v2047, 1
        %v2187 = vrot.slane %v2048, 1
        %v2188 = vsel %vm2135, %v2186, %v2187
        %v2189 = vrot.slane %v2049, 1
        %v2190 = vsel %vm2135, %v2187, %v2189
        %v2191 = vrot.slane %v2050, 1
        %v2192 = vrot.slane %v2051, 1
        %v2193 = vsel %vm2135, %v2191, %v2192
        %v2194 = vrot.slane %v2052, 1
        %v2195 = vsel %vm2135, %v2192, %v2194
        %v2196 = vrot.slane %v2053, 1
        %v2197 = vrot.slane %v2054, 1
        %v2198 = vsel %vm2135, %v2196, %v2197
        %v2199 = vrot.slane %v2055, 1
        %v2200 = vsel %vm2135, %v2197, %v2199
        %v2201 = vrot.slane %v2056, 1
        %v2202 = vrot.slane %v2057, 1
        %v2203 = vsel %vm2135, %v2201, %v2202
        %v2204 = vrot.slane %v2058, 1
        %v2205 = vsel %vm2135, %v2202, %v2204
        %v2206 = vrot.slane %v2059, 1
        %v2207 = vrot.slane %v2060, 1
        %v2208 = vsel %vm2135, %v2206, %v2207
        %v2209 = vrot.slane %v2061, 1
        %v2210 = vsel %vm2135, %v2207, %v2209
        %v2211 = vrot.slane %v2062, 1
        %v2212 = vrot.slane %v2063, 1
        %v2213 = vsel %vm2135, %v2211, %v2212
        %v2214 = vrot.slane %v2064, 1
        %v2215 = vsel %vm2135, %v2212, %v2214
        %v2248 = vpack.c.bf16 %v2140, %v2138
        %v2249 = vpack.c.bf16 %v2145, %v2143
        %v2250 = vpack.c.bf16 %v2150, %v2148
        %v2251 = vpack.c.bf16 %v2155, %v2153
        %v2252 = vpack.c.bf16 %v2160, %v2158
        %v2253 = vpack.c.bf16 %v2165, %v2163
        %v2254 = vpack.c.bf16 %v2170, %v2168
        %v2255 = vpack.c.bf16 %v2175, %v2173
        %v2256 = vpack.c.bf16 %v2180, %v2178
        %v2257 = vpack.c.bf16 %v2185, %v2183
        %v2258 = vpack.c.bf16 %v2190, %v2188
        %v2259 = vpack.c.bf16 %v2195, %v2193
        %v2260 = vpack.c.bf16 %v2200, %v2198
        %v2261 = vpack.c.bf16 %v2205, %v2203
        %v2262 = vpack.c.bf16 %v2210, %v2208
        %v2263 = vpack.c.bf16 %v2215, %v2213
        %vm2264 = vcmask 1045504
        %v2265 = vrot.slane %v2017, 2
        %v2266 = vrot.slane %v2018, 2
        %v2267 = vsel %vm2264, %v2265, %v2266
        %v2268 = vrot.slane %v2019, 2
        %v2269 = vsel %vm2264, %v2266, %v2268
        %v2270 = vrot.slane %v2020, 2
        %v2271 = vrot.slane %v2021, 2
        %v2272 = vsel %vm2264, %v2270, %v2271
        %v2273 = vrot.slane %v2022, 2
        %v2274 = vsel %vm2264, %v2271, %v2273
        %v2275 = vrot.slane %v2023, 2
        %v2276 = vrot.slane %v2024, 2
        %v2277 = vsel %vm2264, %v2275, %v2276
        %v2278 = vrot.slane %v2025, 2
        %v2279 = vsel %vm2264, %v2276, %v2278
        %v2280 = vrot.slane %v2026, 2
        %v2281 = vrot.slane %v2027, 2
        %v2282 = vsel %vm2264, %v2280, %v2281
        %v2283 = vrot.slane %v2028, 2
        %v2284 = vsel %vm2264, %v2281, %v2283
        %v2285 = vrot.slane %v2029, 2
        %v2286 = vrot.slane %v2030, 2
        %v2287 = vsel %vm2264, %v2285, %v2286
        %v2288 = vrot.slane %v2031, 2
        %v2289 = vsel %vm2264, %v2286, %v2288
        %v2290 = vrot.slane %v2032, 2
        %v2291 = vrot.slane %v2033, 2
        %v2292 = vsel %vm2264, %v2290, %v2291
        %v2293 = vrot.slane %v2034, 2
        %v2294 = vsel %vm2264, %v2291, %v2293
        %v2295 = vrot.slane %v2035, 2
        %v2296 = vrot.slane %v2036, 2
        %v2297 = vsel %vm2264, %v2295, %v2296
        %v2298 = vrot.slane %v2037, 2
        %v2299 = vsel %vm2264, %v2296, %v2298
        %v2300 = vrot.slane %v2038, 2
        %v2301 = vrot.slane %v2039, 2
        %v2302 = vsel %vm2264, %v2300, %v2301
        %v2303 = vrot.slane %v2040, 2
        %v2304 = vsel %vm2264, %v2301, %v2303
        %v2305 = vrot.slane %v2041, 2
        %v2306 = vrot.slane %v2042, 2
        %v2307 = vsel %vm2264, %v2305, %v2306
        %v2308 = vrot.slane %v2043, 2
        %v2309 = vsel %vm2264, %v2306, %v2308
        %v2310 = vrot.slane %v2044, 2
        %v2311 = vrot.slane %v2045, 2
        %v2312 = vsel %vm2264, %v2310, %v2311
        %v2313 = vrot.slane %v2046, 2
        %v2314 = vsel %vm2264, %v2311, %v2313
        %v2315 = vrot.slane %v2047, 2
        %v2316 = vrot.slane %v2048, 2
        %v2317 = vsel %vm2264, %v2315, %v2316
        %v2318 = vrot.slane %v2049, 2
        %v2319 = vsel %vm2264, %v2316, %v2318
        %v2320 = vrot.slane %v2050, 2
        %v2321 = vrot.slane %v2051, 2
        %v2322 = vsel %vm2264, %v2320, %v2321
        %v2323 = vrot.slane %v2052, 2
        %v2324 = vsel %vm2264, %v2321, %v2323
        %v2325 = vrot.slane %v2053, 2
        %v2326 = vrot.slane %v2054, 2
        %v2327 = vsel %vm2264, %v2325, %v2326
        %v2328 = vrot.slane %v2055, 2
        %v2329 = vsel %vm2264, %v2326, %v2328
        %v2330 = vrot.slane %v2056, 2
        %v2331 = vrot.slane %v2057, 2
        %v2332 = vsel %vm2264, %v2330, %v2331
        %v2333 = vrot.slane %v2058, 2
        %v2334 = vsel %vm2264, %v2331, %v2333
        %v2335 = vrot.slane %v2059, 2
        %v2336 = vrot.slane %v2060, 2
        %v2337 = vsel %vm2264, %v2335, %v2336
        %v2338 = vrot.slane %v2061, 2
        %v2339 = vsel %vm2264, %v2336, %v2338
        %v2340 = vrot.slane %v2062, 2
        %v2341 = vrot.slane %v2063, 2
        %v2342 = vsel %vm2264, %v2340, %v2341
        %v2343 = vrot.slane %v2064, 2
        %v2344 = vsel %vm2264, %v2341, %v2343
        %v2377 = vpack.c.bf16 %v2269, %v2267
        %v2378 = vpack.c.bf16 %v2274, %v2272
        %v2379 = vpack.c.bf16 %v2279, %v2277
        %v2380 = vpack.c.bf16 %v2284, %v2282
        %v2381 = vpack.c.bf16 %v2289, %v2287
        %v2382 = vpack.c.bf16 %v2294, %v2292
        %v2383 = vpack.c.bf16 %v2299, %v2297
        %v2384 = vpack.c.bf16 %v2304, %v2302
        %v2385 = vpack.c.bf16 %v2309, %v2307
        %v2386 = vpack.c.bf16 %v2314, %v2312
        %v2387 = vpack.c.bf16 %v2319, %v2317
        %v2388 = vpack.c.bf16 %v2324, %v2322
        %v2389 = vpack.c.bf16 %v2329, %v2327
        %v2390 = vpack.c.bf16 %v2334, %v2332
        %v2391 = vpack.c.bf16 %v2339, %v2337
        %v2392 = vpack.c.bf16 %v2344, %v2342
        %v2393 = vpack.c.bf16 %v2066, %v2065
        %v2397 = vrot.slane %v2065, 1
        %v2398 = vrot.slane %v2066, 1
        %v2399 = vsel %vm2135, %v2397, %v2398
        %v2400 = vrot.slane %v2067, 1
        %v2401 = vsel %vm2135, %v2398, %v2400
        %v2404 = vpack.c.bf16 %v2401, %v2399
        %v2405 = vrot.slane %v2065, 2
        %v2406 = vrot.slane %v2066, 2
        %v2407 = vsel %vm2264, %v2405, %v2406
        %v2408 = vrot.slane %v2067, 2
        %v2409 = vsel %vm2264, %v2406, %v2408
        %v2412 = vpack.c.bf16 %v2409, %v2407
        %v2413 = vpack.c.bf16 %v2069, %v2068
        %v2417 = vrot.slane %v2068, 1
        %v2418 = vrot.slane %v2069, 1
        %v2419 = vsel %vm2135, %v2417, %v2418
        %v2420 = vrot.slane %v2070, 1
        %v2421 = vsel %vm2135, %v2418, %v2420
        %v2424 = vpack.c.bf16 %v2421, %v2419
        %v2425 = vrot.slane %v2068, 2
        %v2426 = vrot.slane %v2069, 2
        %v2427 = vsel %vm2264, %v2425, %v2426
        %v2428 = vrot.slane %v2070, 2
        %v2429 = vsel %vm2264, %v2426, %v2428
        %v2432 = vpack.c.bf16 %v2429, %v2427
        %v2433 = vld [vmem:[#allocation7] sm:$0xf]
        %v2434 = vld [vmem:[#allocation7 + $0x4] sm:$0xf]
        %v2435 = vld [vmem:[#allocation7 + $0x8] sm:$0xf]
        %v2436 = vld [vmem:[#allocation7 + $0xc] sm:$0xf]
        %v2437 = vld [vmem:[#allocation7 + $0x10] sm:$0xf]
        %v2438 = vld [vmem:[#allocation7 + $0x14] sm:$0xf]
        %v2439 = vld [vmem:[#allocation7 + $0x18] sm:$0xf]
        %v2440 = vld [vmem:[#allocation7 + $0x1c] sm:$0xf]
        %v2441 = vld [vmem:[#allocation7 + $0x20] sm:$0xf]
        %v2442 = vld [vmem:[#allocation7 + $0x24] sm:$0xf]
        %v2443 = vld [vmem:[#allocation7 + $0x28] sm:$0xf]
        %v2444 = vld [vmem:[#allocation7 + $0x2c] sm:$0xf]
        %v2445 = vld [vmem:[#allocation7 + $0x30] sm:$0xf]
        %v2446 = vld [vmem:[#allocation7 + $0x34] sm:$0xf]
        %v2447 = vld [vmem:[#allocation7 + $0x38] sm:$0xf]
        %v2448 = vld [vmem:[#allocation7 + $0x3c] sm:$0xf]
        %v2449 = vld [vmem:[#allocation7 + $0x40] sm:$0xf]
        %v2450 = vld [vmem:[#allocation7 + $0x44] sm:$0xf]
        %v2451 = vld [vmem:[#allocation7 + $0x48] sm:$0xf]
        %v2452 = vld [vmem:[#allocation7 + $0x4c] sm:$0xf]
        %v2453 = vld [vmem:[#allocation7 + $0x50] sm:$0xf]
        %v2454 = vld [vmem:[#allocation7 + $0x54] sm:$0xf]
        %v2455 = vld [vmem:[#allocation7 + $0x58] sm:$0xf]
        %v2456 = vld [vmem:[#allocation7 + $0x5c] sm:$0xf]
        %v2457 = vld [vmem:[#allocation7 + $0x60] sm:$0xf]
        %v2458 = vld [vmem:[#allocation7 + $0x64] sm:$0xf]
        %v2459 = vld [vmem:[#allocation7 + $0x68] sm:$0xf]
        %v2460 = vld [vmem:[#allocation7 + $0x6c] sm:$0xf]
        %v2461 = vld [vmem:[#allocation7 + $0x70] sm:$0xf]
        %v2462 = vld [vmem:[#allocation7 + $0x74] sm:$0xf]
        %v2463 = vld [vmem:[#allocation7 + $0x78] sm:$0xf]
        %v2464 = vld [vmem:[#allocation7 + $0x7c] sm:$0xf]
        %v2465 = vld [vmem:[#allocation7 + $0x80] sm:$0xf]
        %v2466 = vld [vmem:[#allocation7 + $0x84] sm:$0xf]
        %v2467 = vld [vmem:[#allocation7 + $0x88] sm:$0xf]
        %v2468 = vld [vmem:[#allocation7 + $0x8c] sm:$0xf]
        %v2469 = vld [vmem:[#allocation7 + $0x90] sm:$0xf]
        %v2470 = vld [vmem:[#allocation7 + $0x94] sm:$0xf]
        %v2471 = vld [vmem:[#allocation7 + $0x98] sm:$0xf]
        %v2472 = vld [vmem:[#allocation7 + $0x9c] sm:$0xf]
        %v2473 = vld [vmem:[#allocation7 + $0xa0] sm:$0xf]
        %v2474 = vld [vmem:[#allocation7 + $0xa4] sm:$0xf]
        %v2475 = vld [vmem:[#allocation7 + $0xa8] sm:$0xf]
        %v2476 = vld [vmem:[#allocation7 + $0xac] sm:$0xf]
        %v2477 = vld [vmem:[#allocation7 + $0xb0] sm:$0xf]
        %v2478 = vld [vmem:[#allocation7 + $0xb4] sm:$0xf]
        %v2479 = vld [vmem:[#allocation7 + $0xb8] sm:$0xf]
        %v2480 = vld [vmem:[#allocation7 + $0xbc] sm:$0xf]
        %v2481 = vld [vmem:[#allocation7 + $0xc0] sm:$0xf]
        %v2482 = vld [vmem:[#allocation7 + $0xc4] sm:$0xf]
        %v2483 = vld [vmem:[#allocation7 + $0xc8] sm:$0xf]
        %v2484 = vld [vmem:[#allocation7 + $0xcc] sm:$0xf]
        %v2485 = vld [vmem:[#allocation7 + $0xd0] sm:$0xf]
        %v2486 = vld [vmem:[#allocation7 + $0xd4] sm:$0xf]
        %v2487 = vld [vmem:[#allocation7 + $0xd8] sm:$0xf]
        %v2488 = vld [vmem:[#allocation7 + $0xdc] sm:$0xf]
        %v2489 = vld [vmem:[#allocation7 + $0xe0] sm:$0xf]
        %v2490 = vld [vmem:[#allocation7 + $0xe4] sm:$0xf]
        %v2491 = vld [vmem:[#allocation7 + $0xe8] sm:$0xf]
        %v2492 = vld [vmem:[#allocation7 + $0xec] sm:$0xf]
        %v2493 = vld [vmem:[#allocation7 + $0xf0] sm:$0xf]
        %v2494 = vld [vmem:[#allocation7 + $0xf4] sm:$0xf]
        %v2495 = vld [vmem:[#allocation7 + $0xf8] sm:$0xf]
        %v2496 = vld [vmem:[#allocation7 + $0xfc] sm:$0xf]
        %v2497 = vld [vmem:[#allocation7 + $0x100] sm:$0xf]
        %v2498 = vld [vmem:[#allocation7 + $0x104] sm:$0xf]
        %v2499 = vld [vmem:[#allocation7 + $0x108] sm:$0xf]
        %v2500 = vld [vmem:[#allocation7 + $0x10c] sm:$0xf]
        %v2501 = vld [vmem:[#allocation7 + $0x110] sm:$0xf]
        %v2502 = vld [vmem:[#allocation7 + $0x114] sm:$0xf]
        %v2503 = vld [vmem:[#allocation7 + $0x118] sm:$0xf]
        %v2504 = vld [vmem:[#allocation7 + $0x11c] sm:$0xf]
        %v2505 = vld [vmem:[#allocation7 + $0x120] sm:$0xf]
        %v2506 = vld [vmem:[#allocation7 + $0x124] sm:$0xf]
        %v2507 = vld [vmem:[#allocation7 + $0x128] sm:$0xf]
        %v2508 = vld [vmem:[#allocation7 + $0x12c] sm:$0xf]
        %v2509 = vld [vmem:[#allocation7 + $0x130] sm:$0xf]
        %v2510 = vld [vmem:[#allocation7 + $0x134] sm:$0xf]
        %v2511 = vld [vmem:[#allocation7 + $0x138] sm:$0xf]
        %v2512 = vld [vmem:[#allocation7 + $0x13c] sm:$0xf]
        %v2513 = vld [vmem:[#allocation7 + $0x140] sm:$0xf]
        %v2514 = vld [vmem:[#allocation7 + $0x144] sm:$0xf]
        %v2515 = vld [vmem:[#allocation7 + $0x148] sm:$0xf]
        %v2516 = vld [vmem:[#allocation7 + $0x14c] sm:$0xf]
        %v2517 = vld [vmem:[#allocation7 + $0x150] sm:$0xf]
        %v2518 = vld [vmem:[#allocation7 + $0x154] sm:$0xf]
        %v2519 = vld [vmem:[#allocation7 + $0x158] sm:$0xf]
        %v2520 = vld [vmem:[#allocation7 + $0x15c] sm:$0xf]
        %v2521 = vld [vmem:[#allocation7 + $0x160] sm:$0xf]
        %v2522 = vld [vmem:[#allocation7 + $0x164] sm:$0xf]
        %v2523 = vld [vmem:[#allocation7 + $0x168] sm:$0xf]
        %v2524 = vld [vmem:[#allocation7 + $0x16c] sm:$0xf]
        %v2525 = vld [vmem:[#allocation7 + $0x170] sm:$0xf]
        %v2526 = vld [vmem:[#allocation7 + $0x174] sm:$0xf]
        %v2527 = vld [vmem:[#allocation7 + $0x178] sm:$0xf]
        %v2528 = vld [vmem:[#allocation7 + $0x17c] sm:$0xf]
        %v2529 = vld [vmem:[#allocation7 + $0x180] sm:$0xf]
        %v2530 = vld [vmem:[#allocation7 + $0x184] sm:$0xf]
        %v2531 = vld [vmem:[#allocation7 + $0x188] sm:$0xf]
        %v2532 = vld [vmem:[#allocation7 + $0x18c] sm:$0xf]
        %v2533 = vld [vmem:[#allocation7 + $0x190] sm:$0xf]
        %v2534 = vld [vmem:[#allocation7 + $0x194] sm:$0xf]
        %v2535 = vld [vmem:[#allocation7 + $0x198] sm:$0xf]
        %v2536 = vld [vmem:[#allocation7 + $0x19c] sm:$0xf]
        %v2537 = vld [vmem:[#allocation7 + $0x1a0] sm:$0xf]
        %v2538 = vld [vmem:[#allocation7 + $0x1a4] sm:$0xf]
        %v2539 = vld [vmem:[#allocation7 + $0x1a8] sm:$0xf]
        %v2540 = vld [vmem:[#allocation7 + $0x1ac] sm:$0xf]
        %v2541 = vld [vmem:[#allocation7 + $0x1b0] sm:$0xf]
        %v2542 = vld [vmem:[#allocation7 + $0x1b4] sm:$0xf]
        %v2543 = vld [vmem:[#allocation7 + $0x1b8] sm:$0xf]
        %v2544 = vld [vmem:[#allocation7 + $0x1bc] sm:$0xf]
        %v2545 = vld [vmem:[#allocation7 + $0x1c0] sm:$0xf]
        %v2546 = vld [vmem:[#allocation7 + $0x1c4] sm:$0xf]
        %v2547 = vld [vmem:[#allocation7 + $0x1c8] sm:$0xf]
        %v2548 = vld [vmem:[#allocation7 + $0x1cc] sm:$0xf]
        %v2549 = vld [vmem:[#allocation7 + $0x1d0] sm:$0xf]
        %v2550 = vld [vmem:[#allocation7 + $0x1d4] sm:$0xf]
        %v2551 = vld [vmem:[#allocation7 + $0x1d8] sm:$0xf]
        %v2552 = vld [vmem:[#allocation7 + $0x1dc] sm:$0xf]
        %v2553 = vld [vmem:[#allocation7 + $0x1e0] sm:$0xf]
        %v2554 = vld [vmem:[#allocation7 + $0x1e4] sm:$0xf]
        %v2555 = vld [vmem:[#allocation7 + $0x1e8] sm:$0xf]
        %v2556 = vld [vmem:[#allocation7 + $0x1ec] sm:$0xf]
        %v2557 = vld [vmem:[#allocation7 + $0x1f0] sm:$0xf]
        %v2558 = vld [vmem:[#allocation7 + $0x1f4] sm:$0xf]
        %v2559 = vld [vmem:[#allocation7 + $0x1f8] sm:$0xf]
        %v2560 = vld [vmem:[#allocation7 + $0x1fc] sm:$0xf]
        %v2561 = vld [vmem:[#allocation7 + $0x200] sm:$0xf]
        %v2562 = vld [vmem:[#allocation7 + $0x204] sm:$0xf]
        %v2563 = vld [vmem:[#allocation7 + $0x208] sm:$0xf]
        %v2564 = vld [vmem:[#allocation7 + $0x20c] sm:$0xf]
        %v2565 = vld [vmem:[#allocation7 + $0x210] sm:$0xf]
        %v2566 = vld [vmem:[#allocation7 + $0x214] sm:$0xf]
        %v2567 = vld [vmem:[#allocation7 + $0x218] sm:$0xf]
        %v2568 = vld [vmem:[#allocation7 + $0x21c] sm:$0xf]
        %v2569 = vld [vmem:[#allocation7 + $0x220] sm:$0xf]
        %v2570 = vld [vmem:[#allocation7 + $0x224] sm:$0xf]
        %v2571 = vld [vmem:[#allocation7 + $0x228] sm:$0xf]
        %v2572 = vld [vmem:[#allocation7 + $0x22c] sm:$0xf]
        %v2573 = vld [vmem:[#allocation7 + $0x230] sm:$0xf]
        %v2574 = vld [vmem:[#allocation7 + $0x234] sm:$0xf]
        %v2575 = vld [vmem:[#allocation7 + $0x238] sm:$0xf]
        %v2576 = vld [vmem:[#allocation7 + $0x23c] sm:$0xf]
        %v2577 = vld [vmem:[%s4] sm:$0x1]
        %v2579 = vlaneseq
        %v2580 = vshrl.u32 %v2579, 7
        %v2581 = vsub.s32 0, %v2580
        %v2582 = vrot.slane %v2577, %v2581
        %v2728 = vunpack.c.l.b16 %v2433
        %v2729 = vunpack.c.l.b16 %v2434
        %v2730 = vunpack.c.l.b16 %v2435
        %v2731 = vunpack.c.l.b16 %v2436
        %v2732 = vunpack.c.l.b16 %v2437
        %v2733 = vunpack.c.l.b16 %v2438
        %v2734 = vunpack.c.l.b16 %v2439
        %v2735 = vunpack.c.l.b16 %v2440
        %v2736 = vunpack.c.l.b16 %v2441
        %v2737 = vunpack.c.l.b16 %v2442
        %v2738 = vunpack.c.l.b16 %v2443
        %v2739 = vunpack.c.l.b16 %v2444
        %v2740 = vunpack.c.l.b16 %v2445
        %v2741 = vunpack.c.l.b16 %v2446
        %v2742 = vunpack.c.l.b16 %v2447
        %v2743 = vunpack.c.l.b16 %v2448
        %v2744 = vunpack.c.l.b16 %v2449
        %v2745 = vunpack.c.l.b16 %v2450
        %v2746 = vunpack.c.l.b16 %v2451
        %v2747 = vunpack.c.l.b16 %v2452
        %v2748 = vunpack.c.l.b16 %v2453
        %v2749 = vunpack.c.l.b16 %v2454
        %v2750 = vunpack.c.l.b16 %v2455
        %v2751 = vunpack.c.l.b16 %v2456
        %v2752 = vunpack.c.l.b16 %v2457
        %v2753 = vunpack.c.l.b16 %v2458
        %v2754 = vunpack.c.l.b16 %v2459
        %v2755 = vunpack.c.l.b16 %v2460
        %v2756 = vunpack.c.l.b16 %v2461
        %v2757 = vunpack.c.l.b16 %v2462
        %v2758 = vunpack.c.l.b16 %v2463
        %v2759 = vunpack.c.l.b16 %v2464
        %v2760 = vunpack.c.l.b16 %v2465
        %v2761 = vunpack.c.l.b16 %v2466
        %v2762 = vunpack.c.l.b16 %v2467
        %v2763 = vunpack.c.l.b16 %v2468
        %v2764 = vunpack.c.l.b16 %v2469
        %v2765 = vunpack.c.l.b16 %v2470
        %v2766 = vunpack.c.l.b16 %v2471
        %v2767 = vunpack.c.l.b16 %v2472
        %v2768 = vunpack.c.l.b16 %v2473
        %v2769 = vunpack.c.l.b16 %v2474
        %v2770 = vunpack.c.l.b16 %v2475
        %v2771 = vunpack.c.l.b16 %v2476
        %v2772 = vunpack.c.l.b16 %v2477
        %v2773 = vunpack.c.l.b16 %v2478
        %v2774 = vunpack.c.l.b16 %v2479
        %v2775 = vunpack.c.l.b16 %v2480
        %v2776 = vunpack.c.l.b16 %v2481
        %v2777 = vunpack.c.l.b16 %v2482
        %v2778 = vunpack.c.l.b16 %v2483
        %v2779 = vunpack.c.l.b16 %v2484
        %v2780 = vunpack.c.l.b16 %v2485
        %v2781 = vunpack.c.l.b16 %v2486
        %v2782 = vunpack.c.l.b16 %v2487
        %v2783 = vunpack.c.l.b16 %v2488
        %v2784 = vunpack.c.l.b16 %v2489
        %v2785 = vunpack.c.l.b16 %v2490
        %v2786 = vunpack.c.l.b16 %v2491
        %v2787 = vunpack.c.l.b16 %v2492
        %v2788 = vunpack.c.l.b16 %v2493
        %v2789 = vunpack.c.l.b16 %v2494
        %v2790 = vunpack.c.l.b16 %v2495
        %v2791 = vunpack.c.l.b16 %v2496
        %v2792 = vunpack.c.l.b16 %v2497
        %v2793 = vunpack.c.l.b16 %v2498
        %v2794 = vunpack.c.l.b16 %v2499
        %v2795 = vunpack.c.l.b16 %v2500
        %v2796 = vunpack.c.l.b16 %v2501
        %v2797 = vunpack.c.l.b16 %v2502
        %v2798 = vunpack.c.l.b16 %v2503
        %v2799 = vunpack.c.l.b16 %v2504
        %v2800 = vunpack.c.l.b16 %v2505
        %v2801 = vunpack.c.l.b16 %v2506
        %v2802 = vunpack.c.l.b16 %v2507
        %v2803 = vunpack.c.l.b16 %v2508
        %v2804 = vunpack.c.l.b16 %v2509
        %v2805 = vunpack.c.l.b16 %v2510
        %v2806 = vunpack.c.l.b16 %v2511
        %v2807 = vunpack.c.l.b16 %v2512
        %v2808 = vunpack.c.l.b16 %v2513
        %v2809 = vunpack.c.l.b16 %v2514
        %v2810 = vunpack.c.l.b16 %v2515
        %v2811 = vunpack.c.l.b16 %v2516
        %v2812 = vunpack.c.l.b16 %v2517
        %v2813 = vunpack.c.l.b16 %v2518
        %v2814 = vunpack.c.l.b16 %v2519
        %v2815 = vunpack.c.l.b16 %v2520
        %v2816 = vunpack.c.l.b16 %v2521
        %v2817 = vunpack.c.l.b16 %v2522
        %v2818 = vunpack.c.l.b16 %v2523
        %v2819 = vunpack.c.l.b16 %v2524
        %v2820 = vunpack.c.l.b16 %v2525
        %v2821 = vunpack.c.l.b16 %v2526
        %v2822 = vunpack.c.l.b16 %v2527
        %v2823 = vunpack.c.l.b16 %v2528
        %v2824 = vunpack.c.l.b16 %v2529
        %v2825 = vunpack.c.l.b16 %v2530
        %v2826 = vunpack.c.l.b16 %v2531
        %v2827 = vunpack.c.l.b16 %v2532
        %v2828 = vunpack.c.l.b16 %v2533
        %v2829 = vunpack.c.l.b16 %v2534
        %v2830 = vunpack.c.l.b16 %v2535
        %v2831 = vunpack.c.l.b16 %v2536
        %v2832 = vunpack.c.l.b16 %v2537
        %v2833 = vunpack.c.l.b16 %v2538
        %v2834 = vunpack.c.l.b16 %v2539
        %v2835 = vunpack.c.l.b16 %v2540
        %v2836 = vunpack.c.l.b16 %v2541
        %v2837 = vunpack.c.l.b16 %v2542
        %v2838 = vunpack.c.l.b16 %v2543
        %v2839 = vunpack.c.l.b16 %v2544
        %v2840 = vunpack.c.l.b16 %v2545
        %v2841 = vunpack.c.l.b16 %v2546
        %v2842 = vunpack.c.l.b16 %v2547
        %v2843 = vunpack.c.l.b16 %v2548
        %v2844 = vunpack.c.l.b16 %v2549
        %v2845 = vunpack.c.l.b16 %v2550
        %v2846 = vunpack.c.l.b16 %v2551
        %v2847 = vunpack.c.l.b16 %v2552
        %v2848 = vunpack.c.l.b16 %v2553
        %v2849 = vunpack.c.l.b16 %v2554
        %v2850 = vunpack.c.l.b16 %v2555
        %v2851 = vunpack.c.l.b16 %v2556
        %v2852 = vunpack.c.l.b16 %v2557
        %v2853 = vunpack.c.l.b16 %v2558
        %v2854 = vunpack.c.l.b16 %v2559
        %v2855 = vunpack.c.l.b16 %v2560
        %v2856 = vunpack.c.l.b16 %v2561
        %v2857 = vunpack.c.l.b16 %v2562
        %v2858 = vunpack.c.l.b16 %v2563
        %v2859 = vunpack.c.l.b16 %v2564
        %v2860 = vunpack.c.l.b16 %v2565
        %v2861 = vunpack.c.l.b16 %v2566
        %v2862 = vunpack.c.l.b16 %v2567
        %v2863 = vunpack.c.l.b16 %v2568
        %v2864 = vunpack.c.l.b16 %v2569
        %v2865 = vunpack.c.l.b16 %v2570
        %v2866 = vunpack.c.l.b16 %v2571
        %v2867 = vunpack.c.l.b16 %v2572
        %v2868 = vunpack.c.l.b16 %v2573
        %v2869 = vunpack.c.l.b16 %v2574
        %v2870 = vunpack.c.l.b16 %v2575
        %v2871 = vunpack.c.l.b16 %v2576
        %v2872 = vpack.c.b16 %v2729, %v2728
        %v2873 = vpack.c.b16 %v2731, %v2730
        %v2874 = vpack.c.b16 %v2733, %v2732
        %v2875 = vpack.c.b16 %v2735, %v2734
        %v2876 = vpack.c.b16 %v2737, %v2736
        %v2877 = vpack.c.b16 %v2739, %v2738
        %v2878 = vpack.c.b16 %v2741, %v2740
        %v2879 = vpack.c.b16 %v2743, %v2742
        %v2880 = vpack.c.b16 %v2745, %v2744
        %v2881 = vpack.c.b16 %v2747, %v2746
        %v2882 = vpack.c.b16 %v2749, %v2748
        %v2883 = vpack.c.b16 %v2751, %v2750
        %v2884 = vpack.c.b16 %v2753, %v2752
        %v2885 = vpack.c.b16 %v2755, %v2754
        %v2886 = vpack.c.b16 %v2757, %v2756
        %v2887 = vpack.c.b16 %v2759, %v2758
        %v2888 = vpack.c.b16 %v2761, %v2760
        %v2889 = vpack.c.b16 %v2763, %v2762
        %v2890 = vpack.c.b16 %v2765, %v2764
        %v2891 = vpack.c.b16 %v2767, %v2766
        %v2892 = vpack.c.b16 %v2769, %v2768
        %v2893 = vpack.c.b16 %v2771, %v2770
        %v2894 = vpack.c.b16 %v2773, %v2772
        %v2895 = vpack.c.b16 %v2775, %v2774
        %v2896 = vpack.c.b16 %v2777, %v2776
        %v2897 = vpack.c.b16 %v2779, %v2778
        %v2898 = vpack.c.b16 %v2781, %v2780
        %v2899 = vpack.c.b16 %v2783, %v2782
        %v2900 = vpack.c.b16 %v2785, %v2784
        %v2901 = vpack.c.b16 %v2787, %v2786
        %v2902 = vpack.c.b16 %v2789, %v2788
        %v2903 = vpack.c.b16 %v2791, %v2790
        %v2904 = vpack.c.b16 %v2793, %v2792
        %v2905 = vpack.c.b16 %v2795, %v2794
        %v2906 = vpack.c.b16 %v2797, %v2796
        %v2907 = vpack.c.b16 %v2799, %v2798
        %v2908 = vpack.c.b16 %v2801, %v2800
        %v2909 = vpack.c.b16 %v2803, %v2802
        %v2910 = vpack.c.b16 %v2805, %v2804
        %v2911 = vpack.c.b16 %v2807, %v2806
        %v2912 = vpack.c.b16 %v2809, %v2808
        %v2913 = vpack.c.b16 %v2811, %v2810
        %v2914 = vpack.c.b16 %v2813, %v2812
        %v2915 = vpack.c.b16 %v2815, %v2814
        %v2916 = vpack.c.b16 %v2817, %v2816
        %v2917 = vpack.c.b16 %v2819, %v2818
        %v2918 = vpack.c.b16 %v2821, %v2820
        %v2919 = vpack.c.b16 %v2823, %v2822
        %v2920 = vpack.c.b16 %v2825, %v2824
        %v2921 = vpack.c.b16 %v2827, %v2826
        %v2922 = vpack.c.b16 %v2829, %v2828
        %v2923 = vpack.c.b16 %v2831, %v2830
        %v2924 = vpack.c.b16 %v2833, %v2832
        %v2925 = vpack.c.b16 %v2835, %v2834
        %v2926 = vpack.c.b16 %v2837, %v2836
        %v2927 = vpack.c.b16 %v2839, %v2838
        %v2928 = vpack.c.b16 %v2841, %v2840
        %v2929 = vpack.c.b16 %v2843, %v2842
        %v2930 = vpack.c.b16 %v2845, %v2844
        %v2931 = vpack.c.b16 %v2847, %v2846
        %v2932 = vpack.c.b16 %v2849, %v2848
        %v2933 = vpack.c.b16 %v2851, %v2850
        %v2934 = vpack.c.b16 %v2853, %v2852
        %v2935 = vpack.c.b16 %v2855, %v2854
        %v2936 = vpack.c.b16 %v2857, %v2856
        %v2937 = vpack.c.b16 %v2859, %v2858
        %v2938 = vpack.c.b16 %v2861, %v2860
        %v2939 = vpack.c.b16 %v2863, %v2862
        %v2940 = vpack.c.b16 %v2865, %v2864
        %v2941 = vpack.c.b16 %v2867, %v2866
        %v2942 = vpack.c.b16 %v2869, %v2868
        %v2943 = vpack.c.b16 %v2871, %v2870
        %3016 = vmatprep.subr.bf16.mxu0 0
        %3017 = vmatpush1.bf16.msra.mxu0 %v2879
        %3018 = vmatprep.subr.bf16.mxu0 0
        %3019 = vmatpush1.bf16.msra.mxu0 %v2878
        %3020 = vmatprep.subr.bf16.mxu0 0
        %3021 = vmatpush1.bf16.msra.mxu0 %v2877
        %3022 = vmatprep.subr.bf16.mxu0 0
        %3023 = vmatpush1.bf16.msra.mxu0 %v2876
        %3024 = vmatprep.subr.bf16.mxu0 0
        %3025 = vmatpush1.bf16.msra.mxu0 %v2875
        %3026 = vmatprep.subr.bf16.mxu0 0
        %3027 = vmatpush1.bf16.msra.mxu0 %v2874
        %3028 = vmatprep.subr.bf16.mxu0 0
        %3029 = vmatpush1.bf16.msra.mxu0 %v2873
        %3030 = vmatprep.subr.bf16.mxu0 0
        %3031 = vmatpush1.bf16.msra.mxu0 %v2872
        %3032 = vmatprep.subr.bf16.mxu0 0
        %3033 = vmatpush2.bf16.msra.mxu0 %v2887
        %3034 = vmatprep.subr.bf16.mxu0 0
        %3035 = vmatpush2.bf16.msra.mxu0 %v2886
        %3036 = vmatprep.subr.bf16.mxu0 0
        %3037 = vmatpush2.bf16.msra.mxu0 %v2885
        %3038 = vmatprep.subr.bf16.mxu0 0
        %3039 = vmatpush2.bf16.msra.mxu0 %v2884
        %3040 = vmatprep.subr.bf16.mxu0 0
        %3041 = vmatpush2.bf16.msra.mxu0 %v2883
        %3042 = vmatprep.subr.bf16.mxu0 0
        %3043 = vmatpush2.bf16.msra.mxu0 %v2882
        %3044 = vmatprep.subr.bf16.mxu0 0
        %3045 = vmatpush2.bf16.msra.mxu0 %v2881
        %3046 = vmatprep.subr.bf16.mxu0 0
        %3047 = vmatpush2.bf16.msra.mxu0 %v2880
        %3048 = vmatprep.mubr.bf16.mxu0 %v2248
        %3049 = vmatmul.mubr.bf16.gmra.mxu0 %v2071
        %v3050 = vpop.f32.mrf.mxu0
        %v3051 = vadd.f32 %v2582, %v3050
        %v3052 = vpop.f32.mrf.mxu0
        %v3053 = vpop.f32.mrf.mxu0
        %v3054 = vadd.f32 %v2582, %v3053
        %v3055 = vpop.f32.mrf.mxu0
        %3056 = vmatprep.mubr.bf16.mxu0 %v2249
        %3057 = vmatmul.mubr.bf16.gmra.mxu0 %v2072
        %v3058 = vpop.f32.mrf.mxu0
        %v3059 = vadd.f32 %v2582, %v3058
        %v3060 = vpop.f32.mrf.mxu0
        %v3061 = vpop.f32.mrf.mxu0
        %v3062 = vadd.f32 %v2582, %v3061
        %v3063 = vpop.f32.mrf.mxu0
        %3064 = vmatprep.mubr.bf16.mxu0 %v2250
        %3065 = vmatmul.mubr.bf16.gmra.mxu0 %v2073
        %v3066 = vpop.f32.mrf.mxu0
        %v3067 = vadd.f32 %v2582, %v3066
        %v3068 = vpop.f32.mrf.mxu0
        %v3069 = vpop.f32.mrf.mxu0
        %v3070 = vadd.f32 %v2582, %v3069
        %v3071 = vpop.f32.mrf.mxu0
        %3072 = vmatprep.mubr.bf16.mxu0 %v2251
        %3073 = vmatmul.mubr.bf16.gmra.mxu0 %v2074
        %v3074 = vpop.f32.mrf.mxu0
        %v3075 = vadd.f32 %v2582, %v3074
        %v3076 = vpop.f32.mrf.mxu0
        %v3077 = vpop.f32.mrf.mxu0
        %v3078 = vadd.f32 %v2582, %v3077
        %v3079 = vpop.f32.mrf.mxu0
        %3080 = vmatprep.mubr.bf16.mxu0 %v2252
        %3081 = vmatmul.mubr.bf16.gmra.mxu0 %v2075
        %v3082 = vpop.f32.mrf.mxu0
        %v3083 = vadd.f32 %v2582, %v3082
        %v3084 = vpop.f32.mrf.mxu0
        %v3085 = vpop.f32.mrf.mxu0
        %v3086 = vadd.f32 %v2582, %v3085
        %v3087 = vpop.f32.mrf.mxu0
        %3088 = vmatprep.mubr.bf16.mxu0 %v2253
        %3089 = vmatmul.mubr.bf16.gmra.mxu0 %v2076
        %v3090 = vpop.f32.mrf.mxu0
        %v3091 = vadd.f32 %v2582, %v3090
        %v3092 = vpop.f32.mrf.mxu0
        %v3093 = vpop.f32.mrf.mxu0
        %v3094 = vadd.f32 %v2582, %v3093
        %v3095 = vpop.f32.mrf.mxu0
        %3096 = vmatprep.mubr.bf16.mxu0 %v2254
        %3097 = vmatmul.mubr.bf16.gmra.mxu0 %v2077
        %v3098 = vpop.f32.mrf.mxu0
        %v3099 = vadd.f32 %v2582, %v3098
        %v3100 = vpop.f32.mrf.mxu0
        %v3101 = vpop.f32.mrf.mxu0
        %v3102 = vadd.f32 %v2582, %v3101
        %v3103 = vpop.f32.mrf.mxu0
        %3104 = vmatprep.mubr.bf16.mxu0 %v2255
        %3105 = vmatmul.mubr.bf16.gmra.mxu0 %v2078
        %v3106 = vpop.f32.mrf.mxu0
        %v3107 = vadd.f32 %v2582, %v3106
        %v3108 = vpop.f32.mrf.mxu0
        %v3109 = vpop.f32.mrf.mxu0
        %v3110 = vadd.f32 %v2582, %v3109
        %v3111 = vpop.f32.mrf.mxu0
        %3112 = vmatprep.mubr.bf16.mxu0 %v2256
        %3113 = vmatmul.mubr.bf16.gmra.mxu0 %v2079
        %v3114 = vpop.f32.mrf.mxu0
        %v3115 = vadd.f32 %v2582, %v3114
        %v3116 = vpop.f32.mrf.mxu0
        %v3117 = vpop.f32.mrf.mxu0
        %v3118 = vadd.f32 %v2582, %v3117
        %v3119 = vpop.f32.mrf.mxu0
        %3120 = vmatprep.mubr.bf16.mxu0 %v2257
        %3121 = vmatmul.mubr.bf16.gmra.mxu0 %v2080
        %v3122 = vpop.f32.mrf.mxu0
        %v3123 = vadd.f32 %v2582, %v3122
        %v3124 = vpop.f32.mrf.mxu0
        %v3125 = vpop.f32.mrf.mxu0
        %v3126 = vadd.f32 %v2582, %v3125
        %v3127 = vpop.f32.mrf.mxu0
        %3128 = vmatprep.mubr.bf16.mxu0 %v2258
        %3129 = vmatmul.mubr.bf16.gmra.mxu0 %v2081
        %v3130 = vpop.f32.mrf.mxu0
        %v3131 = vadd.f32 %v2582, %v3130
        %v3132 = vpop.f32.mrf.mxu0
        %v3133 = vpop.f32.mrf.mxu0
        %v3134 = vadd.f32 %v2582, %v3133
        %v3135 = vpop.f32.mrf.mxu0
        %3136 = vmatprep.mubr.bf16.mxu0 %v2259
        %3137 = vmatmul.mubr.bf16.gmra.mxu0 %v2082
        %v3138 = vpop.f32.mrf.mxu0
        %v3139 = vadd.f32 %v2582, %v3138
        %v3140 = vpop.f32.mrf.mxu0
        %v3141 = vpop.f32.mrf.mxu0
        %v3142 = vadd.f32 %v2582, %v3141
        %v3143 = vpop.f32.mrf.mxu0
        %3144 = vmatprep.mubr.bf16.mxu0 %v2260
        %3145 = vmatmul.mubr.bf16.gmra.mxu0 %v2083
        %v3146 = vpop.f32.mrf.mxu0
        %v3147 = vadd.f32 %v2582, %v3146
        %v3148 = vpop.f32.mrf.mxu0
        %v3149 = vpop.f32.mrf.mxu0
        %v3150 = vadd.f32 %v2582, %v3149
        %v3151 = vpop.f32.mrf.mxu0
        %3152 = vmatprep.mubr.bf16.mxu0 %v2261
        %3153 = vmatmul.mubr.bf16.gmra.mxu0 %v2084
        %v3154 = vpop.f32.mrf.mxu0
        %v3155 = vadd.f32 %v2582, %v3154
        %v3156 = vpop.f32.mrf.mxu0
        %v3157 = vpop.f32.mrf.mxu0
        %v3158 = vadd.f32 %v2582, %v3157
        %v3159 = vpop.f32.mrf.mxu0
        %3160 = vmatprep.mubr.bf16.mxu0 %v2262
        %3161 = vmatmul.mubr.bf16.gmra.mxu0 %v2085
        %v3162 = vpop.f32.mrf.mxu0
        %v3163 = vadd.f32 %v2582, %v3162
        %v3164 = vpop.f32.mrf.mxu0
        %v3165 = vpop.f32.mrf.mxu0
        %v3166 = vadd.f32 %v2582, %v3165
        %v3167 = vpop.f32.mrf.mxu0
        %3168 = vmatprep.mubr.bf16.mxu0 %v2263
        %3169 = vmatmul.mubr.bf16.gmra.mxu0 %v2086
        %v3170 = vpop.f32.mrf.mxu0
        %v3171 = vadd.f32 %v2582, %v3170
        %v3172 = vpop.f32.mrf.mxu0
        %v3173 = vpop.f32.mrf.mxu0
        %v3174 = vadd.f32 %v2582, %v3173
        %v3175 = vpop.f32.mrf.mxu0
        %3176 = vdwg.mxu0
        %3177 = vmatprep.subr.bf16.mxu0 0
        %3178 = vmatpush1.bf16.msra.mxu0 %v2895
        %3179 = vmatprep.subr.bf16.mxu0 0
        %3180 = vmatpush1.bf16.msra.mxu0 %v2894
        %3181 = vmatprep.subr.bf16.mxu0 0
        %3182 = vmatpush1.bf16.msra.mxu0 %v2893
        %3183 = vmatprep.subr.bf16.mxu0 0
        %3184 = vmatpush1.bf16.msra.mxu0 %v2892
        %3185 = vmatprep.subr.bf16.mxu0 0
        %3186 = vmatpush1.bf16.msra.mxu0 %v2891
        %3187 = vmatprep.subr.bf16.mxu0 0
        %3188 = vmatpush1.bf16.msra.mxu0 %v2890
        %3189 = vmatprep.subr.bf16.mxu0 0
        %3190 = vmatpush1.bf16.msra.mxu0 %v2889
        %3191 = vmatprep.subr.bf16.mxu0 0
        %3192 = vmatpush1.bf16.msra.mxu0 %v2888
        %3193 = vmatprep.subr.bf16.mxu0 0
        %3194 = vmatpush2.bf16.msra.mxu0 %v2903
        %3195 = vmatprep.subr.bf16.mxu0 0
        %3196 = vmatpush2.bf16.msra.mxu0 %v2902
        %3197 = vmatprep.subr.bf16.mxu0 0
        %3198 = vmatpush2.bf16.msra.mxu0 %v2901
        %3199 = vmatprep.subr.bf16.mxu0 0
        %3200 = vmatpush2.bf16.msra.mxu0 %v2900
        %3201 = vmatprep.subr.bf16.mxu0 0
        %3202 = vmatpush2.bf16.msra.mxu0 %v2899
        %3203 = vmatprep.subr.bf16.mxu0 0
        %3204 = vmatpush2.bf16.msra.mxu0 %v2898
        %3205 = vmatprep.subr.bf16.mxu0 0
        %3206 = vmatpush2.bf16.msra.mxu0 %v2897
        %3207 = vmatprep.subr.bf16.mxu0 0
        %3208 = vmatpush2.bf16.msra.mxu0 %v2896
        %3209 = vmatprep.mubr.bf16.mxu0 %v2072
        %3210 = vmatmul.mubr.bf16.gmra.mxu0 %v2377
        %v3211 = vpop.f32.mrf.mxu0
        %v3212 = vadd.f32 %v3051, %v3211
        %v3213 = vpop.f32.mrf.mxu0
        %v3214 = vpop.f32.mrf.mxu0
        %v3215 = vadd.f32 %v3054, %v3214
        %v3216 = vpop.f32.mrf.mxu0
        %3217 = vmatprep.mubr.bf16.mxu0 %v2073
        %3218 = vmatmul.mubr.bf16.gmra.mxu0 %v2378
        %v3219 = vpop.f32.mrf.mxu0
        %v3220 = vadd.f32 %v3059, %v3219
        %v3221 = vpop.f32.mrf.mxu0
        %v3222 = vpop.f32.mrf.mxu0
        %v3223 = vadd.f32 %v3062, %v3222
        %v3224 = vpop.f32.mrf.mxu0
        %3225 = vmatprep.mubr.bf16.mxu0 %v2074
        %3226 = vmatmul.mubr.bf16.gmra.mxu0 %v2379
        %v3227 = vpop.f32.mrf.mxu0
        %v3228 = vadd.f32 %v3067, %v3227
        %v3229 = vpop.f32.mrf.mxu0
        %v3230 = vpop.f32.mrf.mxu0
        %v3231 = vadd.f32 %v3070, %v3230
        %v3232 = vpop.f32.mrf.mxu0
        %3233 = vmatprep.mubr.bf16.mxu0 %v2075
        %3234 = vmatmul.mubr.bf16.gmra.mxu0 %v2380
        %v3235 = vpop.f32.mrf.mxu0
        %v3236 = vadd.f32 %v3075, %v3235
        %v3237 = vpop.f32.mrf.mxu0
        %v3238 = vpop.f32.mrf.mxu0
        %v3239 = vadd.f32 %v3078, %v3238
        %v3240 = vpop.f32.mrf.mxu0
        %3241 = vmatprep.mubr.bf16.mxu0 %v2076
        %3242 = vmatmul.mubr.bf16.gmra.mxu0 %v2381
        %v3243 = vpop.f32.mrf.mxu0
        %v3244 = vadd.f32 %v3083, %v3243
        %v3245 = vpop.f32.mrf.mxu0
        %v3246 = vpop.f32.mrf.mxu0
        %v3247 = vadd.f32 %v3086, %v3246
        %v3248 = vpop.f32.mrf.mxu0
        %3249 = vmatprep.mubr.bf16.mxu0 %v2077
        %3250 = vmatmul.mubr.bf16.gmra.mxu0 %v2382
        %v3251 = vpop.f32.mrf.mxu0
        %v3252 = vadd.f32 %v3091, %v3251
        %v3253 = vpop.f32.mrf.mxu0
        %v3254 = vpop.f32.mrf.mxu0
        %v3255 = vadd.f32 %v3094, %v3254
        %v3256 = vpop.f32.mrf.mxu0
        %3257 = vmatprep.mubr.bf16.mxu0 %v2078
        %3258 = vmatmul.mubr.bf16.gmra.mxu0 %v2383
        %v3259 = vpop.f32.mrf.mxu0
        %v3260 = vadd.f32 %v3099, %v3259
        %v3261 = vpop.f32.mrf.mxu0
        %v3262 = vpop.f32.mrf.mxu0
        %v3263 = vadd.f32 %v3102, %v3262
        %v3264 = vpop.f32.mrf.mxu0
        %3265 = vmatprep.mubr.bf16.mxu0 %v2079
        %3266 = vmatmul.mubr.bf16.gmra.mxu0 %v2384
        %v3267 = vpop.f32.mrf.mxu0
        %v3268 = vadd.f32 %v3107, %v3267
        %v3269 = vpop.f32.mrf.mxu0
        %v3270 = vpop.f32.mrf.mxu0
        %v3271 = vadd.f32 %v3110, %v3270
        %v3272 = vpop.f32.mrf.mxu0
        %3273 = vmatprep.mubr.bf16.mxu0 %v2080
        %3274 = vmatmul.mubr.bf16.gmra.mxu0 %v2385
        %v3275 = vpop.f32.mrf.mxu0
        %v3276 = vadd.f32 %v3115, %v3275
        %v3277 = vpop.f32.mrf.mxu0
        %v3278 = vpop.f32.mrf.mxu0
        %v3279 = vadd.f32 %v3118, %v3278
        %v3280 = vpop.f32.mrf.mxu0
        %3281 = vmatprep.mubr.bf16.mxu0 %v2081
        %3282 = vmatmul.mubr.bf16.gmra.mxu0 %v2386
        %v3283 = vpop.f32.mrf.mxu0
        %v3284 = vadd.f32 %v3123, %v3283
        %v3285 = vpop.f32.mrf.mxu0
        %v3286 = vpop.f32.mrf.mxu0
        %v3287 = vadd.f32 %v3126, %v3286
        %v3288 = vpop.f32.mrf.mxu0
        %3289 = vmatprep.mubr.bf16.mxu0 %v2082
        %3290 = vmatmul.mubr.bf16.gmra.mxu0 %v2387
        %v3291 = vpop.f32.mrf.mxu0
        %v3292 = vadd.f32 %v3131, %v3291
        %v3293 = vpop.f32.mrf.mxu0
        %v3294 = vpop.f32.mrf.mxu0
        %v3295 = vadd.f32 %v3134, %v3294
        %v3296 = vpop.f32.mrf.mxu0
        %3297 = vmatprep.mubr.bf16.mxu0 %v2083
        %3298 = vmatmul.mubr.bf16.gmra.mxu0 %v2388
        %v3299 = vpop.f32.mrf.mxu0
        %v3300 = vadd.f32 %v3139, %v3299
        %v3301 = vpop.f32.mrf.mxu0
        %v3302 = vpop.f32.mrf.mxu0
        %v3303 = vadd.f32 %v3142, %v3302
        %v3304 = vpop.f32.mrf.mxu0
        %3305 = vmatprep.mubr.bf16.mxu0 %v2084
        %3306 = vmatmul.mubr.bf16.gmra.mxu0 %v2389
        %v3307 = vpop.f32.mrf.mxu0
        %v3308 = vadd.f32 %v3147, %v3307
        %v3309 = vpop.f32.mrf.mxu0
        %v3310 = vpop.f32.mrf.mxu0
        %v3311 = vadd.f32 %v3150, %v3310
        %v3312 = vpop.f32.mrf.mxu0
        %3313 = vmatprep.mubr.bf16.mxu0 %v2085
        %3314 = vmatmul.mubr.bf16.gmra.mxu0 %v2390
        %v3315 = vpop.f32.mrf.mxu0
        %v3316 = vadd.f32 %v3155, %v3315
        %v3317 = vpop.f32.mrf.mxu0
        %v3318 = vpop.f32.mrf.mxu0
        %v3319 = vadd.f32 %v3158, %v3318
        %v3320 = vpop.f32.mrf.mxu0
        %3321 = vmatprep.mubr.bf16.mxu0 %v2086
        %3322 = vmatmul.mubr.bf16.gmra.mxu0 %v2391
        %v3323 = vpop.f32.mrf.mxu0
        %v3324 = vadd.f32 %v3163, %v3323
        %v3325 = vpop.f32.mrf.mxu0
        %v3326 = vpop.f32.mrf.mxu0
        %v3327 = vadd.f32 %v3166, %v3326
        %v3328 = vpop.f32.mrf.mxu0
        %3329 = vmatprep.mubr.bf16.mxu0 %v2393
        %3330 = vmatmul.mubr.bf16.gmra.mxu0 %v2392
        %v3331 = vpop.f32.mrf.mxu0
        %v3332 = vadd.f32 %v3171, %v3331
        %v3333 = vpop.f32.mrf.mxu0
        %v3334 = vpop.f32.mrf.mxu0
        %v3335 = vadd.f32 %v3174, %v3334
        %v3336 = vpop.f32.mrf.mxu0
        %3337 = vdwg.mxu0
        %3338 = vmatprep.subr.bf16.mxu0 0
        %3339 = vmatpush1.bf16.msra.mxu0 %v2911
        %3340 = vmatprep.subr.bf16.mxu0 0
        %3341 = vmatpush1.bf16.msra.mxu0 %v2910
        %3342 = vmatprep.subr.bf16.mxu0 0
        %3343 = vmatpush1.bf16.msra.mxu0 %v2909
        %3344 = vmatprep.subr.bf16.mxu0 0
        %3345 = vmatpush1.bf16.msra.mxu0 %v2908
        %3346 = vmatprep.subr.bf16.mxu0 0
        %3347 = vmatpush1.bf16.msra.mxu0 %v2907
        %3348 = vmatprep.subr.bf16.mxu0 0
        %3349 = vmatpush1.bf16.msra.mxu0 %v2906
        %3350 = vmatprep.subr.bf16.mxu0 0
        %3351 = vmatpush1.bf16.msra.mxu0 %v2905
        %3352 = vmatprep.subr.bf16.mxu0 0
        %3353 = vmatpush1.bf16.msra.mxu0 %v2904
        %3354 = vmatprep.subr.bf16.mxu0 0
        %3355 = vmatpush2.bf16.msra.mxu0 %v2919
        %3356 = vmatprep.subr.bf16.mxu0 0
        %3357 = vmatpush2.bf16.msra.mxu0 %v2918
        %3358 = vmatprep.subr.bf16.mxu0 0
        %3359 = vmatpush2.bf16.msra.mxu0 %v2917
        %3360 = vmatprep.subr.bf16.mxu0 0
        %3361 = vmatpush2.bf16.msra.mxu0 %v2916
        %3362 = vmatprep.subr.bf16.mxu0 0
        %3363 = vmatpush2.bf16.msra.mxu0 %v2915
        %3364 = vmatprep.subr.bf16.mxu0 0
        %3365 = vmatpush2.bf16.msra.mxu0 %v2914
        %3366 = vmatprep.subr.bf16.mxu0 0
        %3367 = vmatpush2.bf16.msra.mxu0 %v2913
        %3368 = vmatprep.subr.bf16.mxu0 0
        %3369 = vmatpush2.bf16.msra.mxu0 %v2912
        %3370 = vmatprep.mubr.bf16.mxu0 %v2378
        %3371 = vmatmul.mubr.bf16.gmra.mxu0 %v2249
        %v3372 = vpop.f32.mrf.mxu0
        %v3373 = vadd.f32 %v3212, %v3372
        %v3374 = vpop.f32.mrf.mxu0
        %v3375 = vpop.f32.mrf.mxu0
        %v3376 = vadd.f32 %v3215, %v3375
        %v3377 = vpop.f32.mrf.mxu0
        %3378 = vmatprep.mubr.bf16.mxu0 %v2379
        %3379 = vmatmul.mubr.bf16.gmra.mxu0 %v2250
        %v3380 = vpop.f32.mrf.mxu0
        %v3381 = vadd.f32 %v3220, %v3380
        %v3382 = vpop.f32.mrf.mxu0
        %v3383 = vpop.f32.mrf.mxu0
        %v3384 = vadd.f32 %v3223, %v3383
        %v3385 = vpop.f32.mrf.mxu0
        %3386 = vmatprep.mubr.bf16.mxu0 %v2380
        %3387 = vmatmul.mubr.bf16.gmra.mxu0 %v2251
        %v3388 = vpop.f32.mrf.mxu0
        %v3389 = vadd.f32 %v3228, %v3388
        %v3390 = vpop.f32.mrf.mxu0
        %v3391 = vpop.f32.mrf.mxu0
        %v3392 = vadd.f32 %v3231, %v3391
        %v3393 = vpop.f32.mrf.mxu0
        %3394 = vmatprep.mubr.bf16.mxu0 %v2381
        %3395 = vmatmul.mubr.bf16.gmra.mxu0 %v2252
        %v3396 = vpop.f32.mrf.mxu0
        %v3397 = vadd.f32 %v3236, %v3396
        %v3398 = vpop.f32.mrf.mxu0
        %v3399 = vpop.f32.mrf.mxu0
        %v3400 = vadd.f32 %v3239, %v3399
        %v3401 = vpop.f32.mrf.mxu0
        %3402 = vmatprep.mubr.bf16.mxu0 %v2382
        %3403 = vmatmul.mubr.bf16.gmra.mxu0 %v2253
        %v3404 = vpop.f32.mrf.mxu0
        %v3405 = vadd.f32 %v3244, %v3404
        %v3406 = vpop.f32.mrf.mxu0
        %v3407 = vpop.f32.mrf.mxu0
        %v3408 = vadd.f32 %v3247, %v3407
        %v3409 = vpop.f32.mrf.mxu0
        %3410 = vmatprep.mubr.bf16.mxu0 %v2383
        %3411 = vmatmul.mubr.bf16.gmra.mxu0 %v2254
        %v3412 = vpop.f32.mrf.mxu0
        %v3413 = vadd.f32 %v3252, %v3412
        %v3414 = vpop.f32.mrf.mxu0
        %v3415 = vpop.f32.mrf.mxu0
        %v3416 = vadd.f32 %v3255, %v3415
        %v3417 = vpop.f32.mrf.mxu0
        %3418 = vmatprep.mubr.bf16.mxu0 %v2384
        %3419 = vmatmul.mubr.bf16.gmra.mxu0 %v2255
        %v3420 = vpop.f32.mrf.mxu0
        %v3421 = vadd.f32 %v3260, %v3420
        %v3422 = vpop.f32.mrf.mxu0
        %v3423 = vpop.f32.mrf.mxu0
        %v3424 = vadd.f32 %v3263, %v3423
        %v3425 = vpop.f32.mrf.mxu0
        %3426 = vmatprep.mubr.bf16.mxu0 %v2385
        %3427 = vmatmul.mubr.bf16.gmra.mxu0 %v2256
        %v3428 = vpop.f32.mrf.mxu0
        %v3429 = vadd.f32 %v3268, %v3428
        %v3430 = vpop.f32.mrf.mxu0
        %v3431 = vpop.f32.mrf.mxu0
        %v3432 = vadd.f32 %v3271, %v3431
        %v3433 = vpop.f32.mrf.mxu0
        %3434 = vmatprep.mubr.bf16.mxu0 %v2386
        %3435 = vmatmul.mubr.bf16.gmra.mxu0 %v2257
        %v3436 = vpop.f32.mrf.mxu0
        %v3437 = vadd.f32 %v3276, %v3436
        %v3438 = vpop.f32.mrf.mxu0
        %v3439 = vpop.f32.mrf.mxu0
        %v3440 = vadd.f32 %v3279, %v3439
        %v3441 = vpop.f32.mrf.mxu0
        %3442 = vmatprep.mubr.bf16.mxu0 %v2387
        %3443 = vmatmul.mubr.bf16.gmra.mxu0 %v2258
        %v3444 = vpop.f32.mrf.mxu0
        %v3445 = vadd.f32 %v3284, %v3444
        %v3446 = vpop.f32.mrf.mxu0
        %v3447 = vpop.f32.mrf.mxu0
        %v3448 = vadd.f32 %v3287, %v3447
        %v3449 = vpop.f32.mrf.mxu0
        %3450 = vmatprep.mubr.bf16.mxu0 %v2388
        %3451 = vmatmul.mubr.bf16.gmra.mxu0 %v2259
        %v3452 = vpop.f32.mrf.mxu0
        %v3453 = vadd.f32 %v3292, %v3452
        %v3454 = vpop.f32.mrf.mxu0
        %v3455 = vpop.f32.mrf.mxu0
        %v3456 = vadd.f32 %v3295, %v3455
        %v3457 = vpop.f32.mrf.mxu0
        %3458 = vmatprep.mubr.bf16.mxu0 %v2389
        %3459 = vmatmul.mubr.bf16.gmra.mxu0 %v2260
        %v3460 = vpop.f32.mrf.mxu0
        %v3461 = vadd.f32 %v3300, %v3460
        %v3462 = vpop.f32.mrf.mxu0
        %v3463 = vpop.f32.mrf.mxu0
        %v3464 = vadd.f32 %v3303, %v3463
        %v3465 = vpop.f32.mrf.mxu0
        %3466 = vmatprep.mubr.bf16.mxu0 %v2390
        %3467 = vmatmul.mubr.bf16.gmra.mxu0 %v2261
        %v3468 = vpop.f32.mrf.mxu0
        %v3469 = vadd.f32 %v3308, %v3468
        %v3470 = vpop.f32.mrf.mxu0
        %v3471 = vpop.f32.mrf.mxu0
        %v3472 = vadd.f32 %v3311, %v3471
        %v3473 = vpop.f32.mrf.mxu0
        %3474 = vmatprep.mubr.bf16.mxu0 %v2391
        %3475 = vmatmul.mubr.bf16.gmra.mxu0 %v2262
        %v3476 = vpop.f32.mrf.mxu0
        %v3477 = vadd.f32 %v3316, %v3476
        %v3478 = vpop.f32.mrf.mxu0
        %v3479 = vpop.f32.mrf.mxu0
        %v3480 = vadd.f32 %v3319, %v3479
        %v3481 = vpop.f32.mrf.mxu0
        %3482 = vmatprep.mubr.bf16.mxu0 %v2392
        %3483 = vmatmul.mubr.bf16.gmra.mxu0 %v2263
        %v3484 = vpop.f32.mrf.mxu0
        %v3485 = vadd.f32 %v3324, %v3484
        %v3486 = vpop.f32.mrf.mxu0
        %v3487 = vpop.f32.mrf.mxu0
        %v3488 = vadd.f32 %v3327, %v3487
        %v3489 = vpop.f32.mrf.mxu0
        %3490 = vmatprep.mubr.bf16.mxu0 %v2412
        %3491 = vmatmul.mubr.bf16.gmra.mxu0 %v2404
        %v3492 = vpop.f32.mrf.mxu0
        %v3493 = vadd.f32 %v3332, %v3492
        %v3494 = vpop.f32.mrf.mxu0
        %v3495 = vpop.f32.mrf.mxu0
        %v3496 = vadd.f32 %v3335, %v3495
        %v3497 = vpop.f32.mrf.mxu0
        %3498 = vdwg.mxu0
        %3499 = vmatprep.subr.bf16.mxu0 0
        %3500 = vmatpush1.bf16.msra.mxu0 %v2927
        %3501 = vmatprep.subr.bf16.mxu0 0
        %3502 = vmatpush1.bf16.msra.mxu0 %v2926
        %3503 = vmatprep.subr.bf16.mxu0 0
        %3504 = vmatpush1.bf16.msra.mxu0 %v2925
        %3505 = vmatprep.subr.bf16.mxu0 0
        %3506 = vmatpush1.bf16.msra.mxu0 %v2924
        %3507 = vmatprep.subr.bf16.mxu0 0
        %3508 = vmatpush1.bf16.msra.mxu0 %v2923
        %3509 = vmatprep.subr.bf16.mxu0 0
        %3510 = vmatpush1.bf16.msra.mxu0 %v2922
        %3511 = vmatprep.subr.bf16.mxu0 0
        %3512 = vmatpush1.bf16.msra.mxu0 %v2921
        %3513 = vmatprep.subr.bf16.mxu0 0
        %3514 = vmatpush1.bf16.msra.mxu0 %v2920
        %3515 = vmatprep.subr.bf16.mxu0 0
        %3516 = vmatpush2.bf16.msra.mxu0 %v2935
        %3517 = vmatprep.subr.bf16.mxu0 0
        %3518 = vmatpush2.bf16.msra.mxu0 %v2934
        %3519 = vmatprep.subr.bf16.mxu0 0
        %3520 = vmatpush2.bf16.msra.mxu0 %v2933
        %3521 = vmatprep.subr.bf16.mxu0 0
        %3522 = vmatpush2.bf16.msra.mxu0 %v2932
        %3523 = vmatprep.subr.bf16.mxu0 0
        %3524 = vmatpush2.bf16.msra.mxu0 %v2931
        %3525 = vmatprep.subr.bf16.mxu0 0
        %3526 = vmatpush2.bf16.msra.mxu0 %v2930
        %3527 = vmatprep.subr.bf16.mxu0 0
        %3528 = vmatpush2.bf16.msra.mxu0 %v2929
        %3529 = vmatprep.subr.bf16.mxu0 0
        %3530 = vmatpush2.bf16.msra.mxu0 %v2928
        %3531 = vmatprep.mubr.bf16.mxu0 %v2250
        %3532 = vmatmul.mubr.bf16.gmra.mxu0 %v2073
        %v3533 = vpop.f32.mrf.mxu0
        %v3534 = vadd.f32 %v3373, %v3533
        %v3535 = vpop.f32.mrf.mxu0
        %v3536 = vpop.f32.mrf.mxu0
        %v3537 = vadd.f32 %v3376, %v3536
        %v3538 = vpop.f32.mrf.mxu0
        %3539 = vmatprep.mubr.bf16.mxu0 %v2251
        %3540 = vmatmul.mubr.bf16.gmra.mxu0 %v2074
        %v3541 = vpop.f32.mrf.mxu0
        %v3542 = vadd.f32 %v3381, %v3541
        %v3543 = vpop.f32.mrf.mxu0
        %v3544 = vpop.f32.mrf.mxu0
        %v3545 = vadd.f32 %v3384, %v3544
        %v3546 = vpop.f32.mrf.mxu0
        %3547 = vmatprep.mubr.bf16.mxu0 %v2252
        %3548 = vmatmul.mubr.bf16.gmra.mxu0 %v2075
        %v3549 = vpop.f32.mrf.mxu0
        %v3550 = vadd.f32 %v3389, %v3549
        %v3551 = vpop.f32.mrf.mxu0
        %v3552 = vpop.f32.mrf.mxu0
        %v3553 = vadd.f32 %v3392, %v3552
        %v3554 = vpop.f32.mrf.mxu0
        %3555 = vmatprep.mubr.bf16.mxu0 %v2253
        %3556 = vmatmul.mubr.bf16.gmra.mxu0 %v2076
        %v3557 = vpop.f32.mrf.mxu0
        %v3558 = vadd.f32 %v3397, %v3557
        %v3559 = vpop.f32.mrf.mxu0
        %v3560 = vpop.f32.mrf.mxu0
        %v3561 = vadd.f32 %v3400, %v3560
        %v3562 = vpop.f32.mrf.mxu0
        %3563 = vmatprep.mubr.bf16.mxu0 %v2254
        %3564 = vmatmul.mubr.bf16.gmra.mxu0 %v2077
        %v3565 = vpop.f32.mrf.mxu0
        %v3566 = vadd.f32 %v3405, %v3565
        %v3567 = vpop.f32.mrf.mxu0
        %v3568 = vpop.f32.mrf.mxu0
        %v3569 = vadd.f32 %v3408, %v3568
        %v3570 = vpop.f32.mrf.mxu0
        %3571 = vmatprep.mubr.bf16.mxu0 %v2255
        %3572 = vmatmul.mubr.bf16.gmra.mxu0 %v2078
        %v3573 = vpop.f32.mrf.mxu0
        %v3574 = vadd.f32 %v3413, %v3573
        %v3575 = vpop.f32.mrf.mxu0
        %v3576 = vpop.f32.mrf.mxu0
        %v3577 = vadd.f32 %v3416, %v3576
        %v3578 = vpop.f32.mrf.mxu0
        %3579 = vmatprep.mubr.bf16.mxu0 %v2256
        %3580 = vmatmul.mubr.bf16.gmra.mxu0 %v2079
        %v3581 = vpop.f32.mrf.mxu0
        %v3582 = vadd.f32 %v3421, %v3581
        %v3583 = vpop.f32.mrf.mxu0
        %v3584 = vpop.f32.mrf.mxu0
        %v3585 = vadd.f32 %v3424, %v3584
        %v3586 = vpop.f32.mrf.mxu0
        %3587 = vmatprep.mubr.bf16.mxu0 %v2257
        %3588 = vmatmul.mubr.bf16.gmra.mxu0 %v2080
        %v3589 = vpop.f32.mrf.mxu0
        %v3590 = vadd.f32 %v3429, %v3589
        %v3591 = vpop.f32.mrf.mxu0
        %v3592 = vpop.f32.mrf.mxu0
        %v3593 = vadd.f32 %v3432, %v3592
        %v3594 = vpop.f32.mrf.mxu0
        %3595 = vmatprep.mubr.bf16.mxu0 %v2258
        %3596 = vmatmul.mubr.bf16.gmra.mxu0 %v2081
        %v3597 = vpop.f32.mrf.mxu0
        %v3598 = vadd.f32 %v3437, %v3597
        %v3599 = vpop.f32.mrf.mxu0
        %v3600 = vpop.f32.mrf.mxu0
        %v3601 = vadd.f32 %v3440, %v3600
        %v3602 = vpop.f32.mrf.mxu0
        %3603 = vmatprep.mubr.bf16.mxu0 %v2259
        %3604 = vmatmul.mubr.bf16.gmra.mxu0 %v2082
        %v3605 = vpop.f32.mrf.mxu0
        %v3606 = vadd.f32 %v3445, %v3605
        %v3607 = vpop.f32.mrf.mxu0
        %v3608 = vpop.f32.mrf.mxu0
        %v3609 = vadd.f32 %v3448, %v3608
        %v3610 = vpop.f32.mrf.mxu0
        %3611 = vmatprep.mubr.bf16.mxu0 %v2260
        %3612 = vmatmul.mubr.bf16.gmra.mxu0 %v2083
        %v3613 = vpop.f32.mrf.mxu0
        %v3614 = vadd.f32 %v3453, %v3613
        %v3615 = vpop.f32.mrf.mxu0
        %v3616 = vpop.f32.mrf.mxu0
        %v3617 = vadd.f32 %v3456, %v3616
        %v3618 = vpop.f32.mrf.mxu0
        %3619 = vmatprep.mubr.bf16.mxu0 %v2261
        %3620 = vmatmul.mubr.bf16.gmra.mxu0 %v2084
        %v3621 = vpop.f32.mrf.mxu0
        %v3622 = vadd.f32 %v3461, %v3621
        %v3623 = vpop.f32.mrf.mxu0
        %v3624 = vpop.f32.mrf.mxu0
        %v3625 = vadd.f32 %v3464, %v3624
        %v3626 = vpop.f32.mrf.mxu0
        %3627 = vmatprep.mubr.bf16.mxu0 %v2262
        %3628 = vmatmul.mubr.bf16.gmra.mxu0 %v2085
        %v3629 = vpop.f32.mrf.mxu0
        %v3630 = vadd.f32 %v3469, %v3629
        %v3631 = vpop.f32.mrf.mxu0
        %v3632 = vpop.f32.mrf.mxu0
        %v3633 = vadd.f32 %v3472, %v3632
        %v3634 = vpop.f32.mrf.mxu0
        %3635 = vmatprep.mubr.bf16.mxu0 %v2263
        %3636 = vmatmul.mubr.bf16.gmra.mxu0 %v2086
        %v3637 = vpop.f32.mrf.mxu0
        %v3638 = vadd.f32 %v3477, %v3637
        %v3639 = vpop.f32.mrf.mxu0
        %v3640 = vpop.f32.mrf.mxu0
        %v3641 = vadd.f32 %v3480, %v3640
        %v3642 = vpop.f32.mrf.mxu0
        %3643 = vmatprep.mubr.bf16.mxu0 %v2404
        %3644 = vmatmul.mubr.bf16.gmra.mxu0 %v2393
        %v3645 = vpop.f32.mrf.mxu0
        %v3646 = vadd.f32 %v3485, %v3645
        %v3647 = vpop.f32.mrf.mxu0
        %v3648 = vpop.f32.mrf.mxu0
        %v3649 = vadd.f32 %v3488, %v3648
        %v3650 = vpop.f32.mrf.mxu0
        %3651 = vmatprep.mubr.bf16.mxu0 %v2424
        %3652 = vmatmul.mubr.bf16.gmra.mxu0 %v2413
        %v3653 = vpop.f32.mrf.mxu0
        %v3654 = vadd.f32 %v3493, %v3653
        %v3655 = vpop.f32.mrf.mxu0
        %v3656 = vpop.f32.mrf.mxu0
        %v3657 = vadd.f32 %v3496, %v3656
        %v3658 = vpop.f32.mrf.mxu0
        %3659 = vdwg.mxu0
        %3660 = vmatprep.subr.bf16.mxu0 0
        %3661 = vmatpush1.bf16.msra.mxu0 %v2943
        %3662 = vmatprep.subr.bf16.mxu0 0
        %3663 = vmatpush1.bf16.msra.mxu0 %v2942
        %3664 = vmatprep.subr.bf16.mxu0 0
        %3665 = vmatpush1.bf16.msra.mxu0 %v2941
        %3666 = vmatprep.subr.bf16.mxu0 0
        %3667 = vmatpush1.bf16.msra.mxu0 %v2940
        %3668 = vmatprep.subr.bf16.mxu0 0
        %3669 = vmatpush1.bf16.msra.mxu0 %v2939
        %3670 = vmatprep.subr.bf16.mxu0 0
        %3671 = vmatpush1.bf16.msra.mxu0 %v2938
        %3672 = vmatprep.subr.bf16.mxu0 0
        %3673 = vmatpush1.bf16.msra.mxu0 %v2937
        %3674 = vmatprep.subr.bf16.mxu0 0
        %3675 = vmatpush1.bf16.msra.mxu0 %v2936
        %3676 = vmatprep.subr.bf16.mxu0 0
        %3677 = vmatpush2.bf16.msra.mxu0 0
        %3678 = vmatprep.subr.bf16.mxu0 0
        %3679 = vmatpush2.bf16.msra.mxu0 0
        %3680 = vmatprep.subr.bf16.mxu0 0
        %3681 = vmatpush2.bf16.msra.mxu0 0
        %3682 = vmatprep.subr.bf16.mxu0 0
        %3683 = vmatpush2.bf16.msra.mxu0 0
        %3684 = vmatprep.subr.bf16.mxu0 0
        %3685 = vmatpush2.bf16.msra.mxu0 0
        %3686 = vmatprep.subr.bf16.mxu0 0
        %3687 = vmatpush2.bf16.msra.mxu0 0
        %3688 = vmatprep.subr.bf16.mxu0 0
        %3689 = vmatpush2.bf16.msra.mxu0 0
        %3690 = vmatprep.subr.bf16.mxu0 0
        %3691 = vmatpush2.bf16.msra.mxu0 0
        %3692 = vmatprep.mubr.bf16.mxu0 0
        %3693 = vmatmul.mubr.bf16.gmra.mxu0 %v2379
        %v3694 = vpop.f32.mrf.mxu0
        %v3695 = vadd.f32 %v3534, %v3694
        %v3696 = vpop.f32.mrf.mxu0
        %v3697 = vpop.f32.mrf.mxu0
        %v3698 = vadd.f32 %v3537, %v3697
        %v3699 = vpop.f32.mrf.mxu0
        %3700 = vmatprep.mubr.bf16.mxu0 0
        %3701 = vmatmul.mubr.bf16.gmra.mxu0 %v2380
        %v3702 = vpop.f32.mrf.mxu0
        %v3703 = vadd.f32 %v3542, %v3702
        %v3704 = vpop.f32.mrf.mxu0
        %v3705 = vpop.f32.mrf.mxu0
        %v3706 = vadd.f32 %v3545, %v3705
        %v3707 = vpop.f32.mrf.mxu0
        %3708 = vmatprep.mubr.bf16.mxu0 0
        %3709 = vmatmul.mubr.bf16.gmra.mxu0 %v2381
        %v3710 = vpop.f32.mrf.mxu0
        %v3711 = vadd.f32 %v3550, %v3710
        %v3712 = vpop.f32.mrf.mxu0
        %v3713 = vpop.f32.mrf.mxu0
        %v3714 = vadd.f32 %v3553, %v3713
        %v3715 = vpop.f32.mrf.mxu0
        %3716 = vmatprep.mubr.bf16.mxu0 0
        %3717 = vmatmul.mubr.bf16.gmra.mxu0 %v2382
        %v3718 = vpop.f32.mrf.mxu0
        %v3719 = vadd.f32 %v3558, %v3718
        %v3720 = vpop.f32.mrf.mxu0
        %v3721 = vpop.f32.mrf.mxu0
        %v3722 = vadd.f32 %v3561, %v3721
        %v3723 = vpop.f32.mrf.mxu0
        %3724 = vmatprep.mubr.bf16.mxu0 0
        %3725 = vmatmul.mubr.bf16.gmra.mxu0 %v2383
        %v3726 = vpop.f32.mrf.mxu0
        %v3727 = vadd.f32 %v3566, %v3726
        %v3728 = vpop.f32.mrf.mxu0
        %v3729 = vpop.f32.mrf.mxu0
        %v3730 = vadd.f32 %v3569, %v3729
        %v3731 = vpop.f32.mrf.mxu0
        %3732 = vmatprep.mubr.bf16.mxu0 0
        %3733 = vmatmul.mubr.bf16.gmra.mxu0 %v2384
        %v3734 = vpop.f32.mrf.mxu0
        %v3735 = vadd.f32 %v3574, %v3734
        %v3736 = vpop.f32.mrf.mxu0
        %v3737 = vpop.f32.mrf.mxu0
        %v3738 = vadd.f32 %v3577, %v3737
        %v3739 = vpop.f32.mrf.mxu0
        %3740 = vmatprep.mubr.bf16.mxu0 0
        %3741 = vmatmul.mubr.bf16.gmra.mxu0 %v2385
        %v3742 = vpop.f32.mrf.mxu0
        %v3743 = vadd.f32 %v3582, %v3742
        %v3744 = vpop.f32.mrf.mxu0
        %v3745 = vpop.f32.mrf.mxu0
        %v3746 = vadd.f32 %v3585, %v3745
        %v3747 = vpop.f32.mrf.mxu0
        %3748 = vmatprep.mubr.bf16.mxu0 0
        %3749 = vmatmul.mubr.bf16.gmra.mxu0 %v2386
        %v3750 = vpop.f32.mrf.mxu0
        %v3751 = vadd.f32 %v3590, %v3750
        %v3752 = vpop.f32.mrf.mxu0
        %v3753 = vpop.f32.mrf.mxu0
        %v3754 = vadd.f32 %v3593, %v3753
        %v3755 = vpop.f32.mrf.mxu0
        %3756 = vmatprep.mubr.bf16.mxu0 0
        %3757 = vmatmul.mubr.bf16.gmra.mxu0 %v2387
        %v3758 = vpop.f32.mrf.mxu0
        %v3759 = vadd.f32 %v3598, %v3758
        %v3760 = vpop.f32.mrf.mxu0
        %v3761 = vpop.f32.mrf.mxu0
        %v3762 = vadd.f32 %v3601, %v3761
        %v3763 = vpop.f32.mrf.mxu0
        %3764 = vmatprep.mubr.bf16.mxu0 0
        %3765 = vmatmul.mubr.bf16.gmra.mxu0 %v2388
        %v3766 = vpop.f32.mrf.mxu0
        %v3767 = vadd.f32 %v3606, %v3766
        %v3768 = vpop.f32.mrf.mxu0
        %v3769 = vpop.f32.mrf.mxu0
        %v3770 = vadd.f32 %v3609, %v3769
        %v3771 = vpop.f32.mrf.mxu0
        %3772 = vmatprep.mubr.bf16.mxu0 0
        %3773 = vmatmul.mubr.bf16.gmra.mxu0 %v2389
        %v3774 = vpop.f32.mrf.mxu0
        %v3775 = vadd.f32 %v3614, %v3774
        %v3776 = vpop.f32.mrf.mxu0
        %v3777 = vpop.f32.mrf.mxu0
        %v3778 = vadd.f32 %v3617, %v3777
        %v3779 = vpop.f32.mrf.mxu0
        %3780 = vmatprep.mubr.bf16.mxu0 0
        %3781 = vmatmul.mubr.bf16.gmra.mxu0 %v2390
        %v3782 = vpop.f32.mrf.mxu0
        %v3783 = vadd.f32 %v3622, %v3782
        %v3784 = vpop.f32.mrf.mxu0
        %v3785 = vpop.f32.mrf.mxu0
        %v3786 = vadd.f32 %v3625, %v3785
        %v3787 = vpop.f32.mrf.mxu0
        %3788 = vmatprep.mubr.bf16.mxu0 0
        %3789 = vmatmul.mubr.bf16.gmra.mxu0 %v2391
        %v3790 = vpop.f32.mrf.mxu0
        %v3791 = vadd.f32 %v3630, %v3790
        %v3792 = vpop.f32.mrf.mxu0
        %v3793 = vpop.f32.mrf.mxu0
        %v3794 = vadd.f32 %v3633, %v3793
        %v3795 = vpop.f32.mrf.mxu0
        %3796 = vmatprep.mubr.bf16.mxu0 0
        %3797 = vmatmul.mubr.bf16.gmra.mxu0 %v2392
        %v3798 = vpop.f32.mrf.mxu0
        %v3799 = vadd.f32 %v3638, %v3798
        %v3800 = vpop.f32.mrf.mxu0
        %v3801 = vpop.f32.mrf.mxu0
        %v3802 = vadd.f32 %v3641, %v3801
        %v3803 = vpop.f32.mrf.mxu0
        %3804 = vmatprep.mubr.bf16.mxu0 0
        %3805 = vmatmul.mubr.bf16.gmra.mxu0 %v2412
        %v3806 = vpop.f32.mrf.mxu0
        %v3807 = vadd.f32 %v3646, %v3806
        %v3808 = vpop.f32.mrf.mxu0
        %v3809 = vpop.f32.mrf.mxu0
        %v3810 = vadd.f32 %v3649, %v3809
        %v3811 = vpop.f32.mrf.mxu0
        %3812 = vmatprep.mubr.bf16.mxu0 0
        %3813 = vmatmul.mubr.bf16.gmra.mxu0 %v2432
        %v3814 = vpop.f32.mrf.mxu0
        %v3815 = vadd.f32 %v3654, %v3814
        %v3816 = vpop.f32.mrf.mxu0
        %v3817 = vpop.f32.mrf.mxu0
        %v3818 = vadd.f32 %v3657, %v3817
        %v3819 = vpop.f32.mrf.mxu0
        %3820 = vdwg.mxu0
        %v3821 = vmax.f32 %v3695, 0.0
        %v3822 = vmax.f32 %v3698, 0.0
        %v3823 = vmax.f32 %v3703, 0.0
        %v3824 = vmax.f32 %v3706, 0.0
        %v3825 = vmax.f32 %v3711, 0.0
        %v3826 = vmax.f32 %v3714, 0.0
        %v3827 = vmax.f32 %v3719, 0.0
        %v3828 = vmax.f32 %v3722, 0.0
        %v3829 = vmax.f32 %v3727, 0.0
        %v3830 = vmax.f32 %v3730, 0.0
        %v3831 = vmax.f32 %v3735, 0.0
        %v3832 = vmax.f32 %v3738, 0.0
        %v3833 = vmax.f32 %v3743, 0.0
        %v3834 = vmax.f32 %v3746, 0.0
        %v3835 = vmax.f32 %v3751, 0.0
        %v3836 = vmax.f32 %v3754, 0.0
        %v3837 = vmax.f32 %v3759, 0.0
        %v3838 = vmax.f32 %v3762, 0.0
        %v3839 = vmax.f32 %v3767, 0.0
        %v3840 = vmax.f32 %v3770, 0.0
        %v3841 = vmax.f32 %v3775, 0.0
        %v3842 = vmax.f32 %v3778, 0.0
        %v3843 = vmax.f32 %v3783, 0.0
        %v3844 = vmax.f32 %v3786, 0.0
        %v3845 = vmax.f32 %v3791, 0.0
        %v3846 = vmax.f32 %v3794, 0.0
        %v3847 = vmax.f32 %v3799, 0.0
        %v3848 = vmax.f32 %v3802, 0.0
        %v3849 = vmax.f32 %v3807, 0.0
        %v3850 = vmax.f32 %v3810, 0.0
        %v3851 = vmax.f32 %v3815, 0.0
        %v3852 = vmax.f32 %v3818, 0.0
        %v3853 = vpack.c.bf16 %v3822, %v3821
        %v3854 = vpack.c.bf16 %v3824, %v3823
        %v3855 = vpack.c.bf16 %v3826, %v3825
        %v3856 = vpack.c.bf16 %v3828, %v3827
        %v3857 = vpack.c.bf16 %v3830, %v3829
        %v3858 = vpack.c.bf16 %v3832, %v3831
        %v3859 = vpack.c.bf16 %v3834, %v3833
        %v3860 = vpack.c.bf16 %v3836, %v3835
        %v3861 = vpack.c.bf16 %v3838, %v3837
        %v3862 = vpack.c.bf16 %v3840, %v3839
        %v3863 = vpack.c.bf16 %v3842, %v3841
        %v3864 = vpack.c.bf16 %v3844, %v3843
        %v3865 = vpack.c.bf16 %v3846, %v3845
        %v3866 = vpack.c.bf16 %v3848, %v3847
        %v3867 = vpack.c.bf16 %v3850, %v3849
        %v3868 = vpack.c.bf16 %v3852, %v3851
        %v3869 = vld [vmem:[#allocation8] sm:$0xff]
        %v3870 = vld [vmem:[#allocation8 + $0x8] sm:$0xff]
        %v3871 = vld [vmem:[#allocation8 + $0x10] sm:$0xff]
        %v3872 = vld [vmem:[#allocation8 + $0x18] sm:$0xff]
        %v3873 = vld [vmem:[#allocation8 + $0x20] sm:$0xff]
        %v3874 = vld [vmem:[#allocation8 + $0x28] sm:$0xff]
        %v3875 = vld [vmem:[#allocation8 + $0x30] sm:$0xff]
        %v3876 = vld [vmem:[#allocation8 + $0x38] sm:$0xff]
        %v3877 = vld [vmem:[#allocation8 + $0x40] sm:$0xff]
        %v3878 = vld [vmem:[#allocation8 + $0x48] sm:$0xff]
        %v3879 = vld [vmem:[#allocation8 + $0x50] sm:$0xff]
        %v3880 = vld [vmem:[#allocation8 + $0x58] sm:$0xff]
        %v3881 = vld [vmem:[#allocation8 + $0x60] sm:$0xff]
        %v3882 = vld [vmem:[#allocation8 + $0x68] sm:$0xff]
        %v3883 = vld [vmem:[#allocation8 + $0x70] sm:$0xff]
        %v3884 = vld [vmem:[#allocation8 + $0x78] sm:$0xff]
        %v3885 = vld [vmem:[#allocation8 + $0x80] sm:$0xff]
        %v3886 = vld [vmem:[#allocation8 + $0x88] sm:$0xff]
        %v3887 = vld [vmem:[#allocation8 + $0x90] sm:$0xff]
        %v3888 = vld [vmem:[#allocation8 + $0x98] sm:$0xff]
        %v3889 = vld [vmem:[#allocation8 + $0xa0] sm:$0xff]
        %v3890 = vld [vmem:[#allocation8 + $0xa8] sm:$0xff]
        %v3891 = vld [vmem:[#allocation8 + $0xb0] sm:$0xff]
        %v3892 = vld [vmem:[#allocation8 + $0xb8] sm:$0xff]
        %v3893 = vld [vmem:[#allocation8 + $0xc0] sm:$0xff]
        %v3894 = vld [vmem:[#allocation8 + $0xc8] sm:$0xff]
        %v3895 = vld [vmem:[#allocation8 + $0xd0] sm:$0xff]
        %v3896 = vld [vmem:[#allocation8 + $0xd8] sm:$0xff]
        %v3897 = vld [vmem:[#allocation8 + $0xe0] sm:$0xff]
        %v3898 = vld [vmem:[#allocation8 + $0xe8] sm:$0xff]
        %v3899 = vld [vmem:[#allocation8 + $0xf0] sm:$0xff]
        %v3900 = vld [vmem:[#allocation8 + $0xf8] sm:$0xff]
        %v3901 = vld [vmem:[%s6] sm:$0xf]
        %v3903 = vlaneseq
        %v3904 = vshrl.u32 %v3903, 7
        %v3905 = vsub.s32 0, %v3904
        %v3906 = vrot.slane %v3901, %v3905
        %v3907 = vlaneseq
        %v3908 = vshrl.u32 %v3907, 7
        %v3909 = vsub.s32 1, %v3908
        %v3910 = vrot.slane %v3901, %v3909
        %v3911 = vlaneseq
        %v3912 = vshrl.u32 %v3911, 7
        %v3913 = vsub.s32 2, %v3912
        %v3914 = vrot.slane %v3901, %v3913
        %v3915 = vlaneseq
        %v3916 = vshrl.u32 %v3915, 7
        %v3917 = vsub.s32 3, %v3916
        %v3918 = vrot.slane %v3901, %v3917
        %v3955 = vunpack.c.l.b16 %v3869
        %v3956 = vunpack.c.h.b16 %v3869
        %v3957 = vunpack.c.l.b16 %v3870
        %v3958 = vunpack.c.h.b16 %v3870
        %v3959 = vunpack.c.l.b16 %v3871
        %v3960 = vunpack.c.h.b16 %v3871
        %v3961 = vunpack.c.l.b16 %v3872
        %v3962 = vunpack.c.h.b16 %v3872
        %v3963 = vunpack.c.l.b16 %v3873
        %v3964 = vunpack.c.h.b16 %v3873
        %v3965 = vunpack.c.l.b16 %v3874
        %v3966 = vunpack.c.h.b16 %v3874
        %v3967 = vunpack.c.l.b16 %v3875
        %v3968 = vunpack.c.h.b16 %v3875
        %v3969 = vunpack.c.l.b16 %v3876
        %v3970 = vunpack.c.h.b16 %v3876
        %v3971 = vunpack.c.l.b16 %v3877
        %v3972 = vunpack.c.h.b16 %v3877
        %v3973 = vunpack.c.l.b16 %v3878
        %v3974 = vunpack.c.h.b16 %v3878
        %v3975 = vunpack.c.l.b16 %v3879
        %v3976 = vunpack.c.h.b16 %v3879
        %v3977 = vunpack.c.l.b16 %v3880
        %v3978 = vunpack.c.h.b16 %v3880
        %v3979 = vunpack.c.l.b16 %v3881
        %v3980 = vunpack.c.h.b16 %v3881
        %v3981 = vunpack.c.l.b16 %v3882
        %v3982 = vunpack.c.h.b16 %v3882
        %v3983 = vunpack.c.l.b16 %v3883
        %v3984 = vunpack.c.h.b16 %v3883
        %v3985 = vunpack.c.l.b16 %v3884
        %v3986 = vunpack.c.h.b16 %v3884
        %v3987 = vunpack.c.l.b16 %v3885
        %v3988 = vunpack.c.h.b16 %v3885
        %v3989 = vunpack.c.l.b16 %v3886
        %v3990 = vunpack.c.h.b16 %v3886
        %v3991 = vunpack.c.l.b16 %v3887
        %v3992 = vunpack.c.h.b16 %v3887
        %v3993 = vunpack.c.l.b16 %v3888
        %v3994 = vunpack.c.h.b16 %v3888
        %v3995 = vunpack.c.l.b16 %v3889
        %v3996 = vunpack.c.h.b16 %v3889
        %v3997 = vunpack.c.l.b16 %v3890
        %v3998 = vunpack.c.h.b16 %v3890
        %v3999 = vunpack.c.l.b16 %v3891
        %v4000 = vunpack.c.h.b16 %v3891
        %v4001 = vunpack.c.l.b16 %v3892
        %v4002 = vunpack.c.h.b16 %v3892
        %v4003 = vunpack.c.l.b16 %v3893
        %v4004 = vunpack.c.h.b16 %v3893
        %v4005 = vunpack.c.l.b16 %v3894
        %v4006 = vunpack.c.h.b16 %v3894
        %v4007 = vunpack.c.l.b16 %v3895
        %v4008 = vunpack.c.h.b16 %v3895
        %v4009 = vunpack.c.l.b16 %v3896
        %v4010 = vunpack.c.h.b16 %v3896
        %v4011 = vunpack.c.l.b16 %v3897
        %v4012 = vunpack.c.h.b16 %v3897
        %v4013 = vunpack.c.l.b16 %v3898
        %v4014 = vunpack.c.h.b16 %v3898
        %v4015 = vunpack.c.l.b16 %v3899
        %v4016 = vunpack.c.h.b16 %v3899
        %v4017 = vunpack.c.l.b16 %v3900
        %v4018 = vunpack.c.h.b16 %v3900
        %v4019 = vpack.c.b16 %v3959, %v3955
        %v4020 = vpack.c.b16 %v3960, %v3956
        %v4021 = vpack.c.b16 %v3961, %v3957
        %v4022 = vpack.c.b16 %v3962, %v3958
        %v4023 = vpack.c.b16 %v3967, %v3963
        %v4024 = vpack.c.b16 %v3968, %v3964
        %v4025 = vpack.c.b16 %v3969, %v3965
        %v4026 = vpack.c.b16 %v3970, %v3966
        %v4027 = vpack.c.b16 %v3975, %v3971
        %v4028 = vpack.c.b16 %v3976, %v3972
        %v4029 = vpack.c.b16 %v3977, %v3973
        %v4030 = vpack.c.b16 %v3978, %v3974
        %v4031 = vpack.c.b16 %v3983, %v3979
        %v4032 = vpack.c.b16 %v3984, %v3980
        %v4033 = vpack.c.b16 %v3985, %v3981
        %v4034 = vpack.c.b16 %v3986, %v3982
        %v4035 = vpack.c.b16 %v3991, %v3987
        %v4036 = vpack.c.b16 %v3992, %v3988
        %v4037 = vpack.c.b16 %v3993, %v3989
        %v4038 = vpack.c.b16 %v3994, %v3990
        %v4039 = vpack.c.b16 %v3999, %v3995
        %v4040 = vpack.c.b16 %v4000, %v3996
        %v4041 = vpack.c.b16 %v4001, %v3997
        %v4042 = vpack.c.b16 %v4002, %v3998
        %v4043 = vpack.c.b16 %v4007, %v4003
        %v4044 = vpack.c.b16 %v4008, %v4004
        %v4045 = vpack.c.b16 %v4009, %v4005
        %v4046 = vpack.c.b16 %v4010, %v4006
        %v4047 = vpack.c.b16 %v4015, %v4011
        %v4048 = vpack.c.b16 %v4016, %v4012
        %v4049 = vpack.c.b16 %v4017, %v4013
        %v4050 = vpack.c.b16 %v4018, %v4014
        %4083 = vmatprep.subr.bf16.mxu0 %v4048
        %4084 = vmatpush1.bf16.msra.mxu0 %v4047
        %4085 = vmatprep.subr.bf16.mxu0 %v4044
        %4086 = vmatpush1.bf16.msra.mxu0 %v4043
        %4087 = vmatprep.subr.bf16.mxu0 %v4040
        %4088 = vmatpush1.bf16.msra.mxu0 %v4039
        %4089 = vmatprep.subr.bf16.mxu0 %v4036
        %4090 = vmatpush1.bf16.msra.mxu0 %v4035
        %4091 = vmatprep.subr.bf16.mxu0 %v4032
        %4092 = vmatpush1.bf16.msra.mxu0 %v4031
        %4093 = vmatprep.subr.bf16.mxu0 %v4028
        %4094 = vmatpush1.bf16.msra.mxu0 %v4027
        %4095 = vmatprep.subr.bf16.mxu0 %v4024
        %4096 = vmatpush1.bf16.msra.mxu0 %v4023
        %4097 = vmatprep.subr.bf16.mxu0 %v4020
        %4098 = vmatpush1.bf16.msra.mxu0 %v4019
        %4099 = vmatprep.subr.bf16.mxu0 0
        %4100 = vmatpush2.bf16.msra.mxu0 0
        %4101 = vmatprep.subr.bf16.mxu0 0
        %4102 = vmatpush2.bf16.msra.mxu0 0
        %4103 = vmatprep.subr.bf16.mxu0 0
        %4104 = vmatpush2.bf16.msra.mxu0 0
        %4105 = vmatprep.subr.bf16.mxu0 0
        %4106 = vmatpush2.bf16.msra.mxu0 0
        %4107 = vmatprep.subr.bf16.mxu0 0
        %4108 = vmatpush2.bf16.msra.mxu0 0
        %4109 = vmatprep.subr.bf16.mxu0 0
        %4110 = vmatpush2.bf16.msra.mxu0 0
        %4111 = vmatprep.subr.bf16.mxu0 0
        %4112 = vmatpush2.bf16.msra.mxu0 0
        %4113 = vmatprep.subr.bf16.mxu0 0
        %4114 = vmatpush2.bf16.msra.mxu0 0
        %4115 = vmatprep.mubr.bf16.mxu0 0
        %4116 = vmatmul.mubr.bf16.gmra.mxu0 %v3853
        %v4117 = vpop.f32.mrf.mxu0
        %v4118 = vadd.f32 %v3906, %v4117
        %v4119 = vpop.f32.mrf.mxu0
        %v4120 = vadd.f32 %v3910, %v4119
        %v4121 = vpop.f32.mrf.mxu0
        %v4122 = vadd.f32 %v3906, %v4121
        %v4123 = vpop.f32.mrf.mxu0
        %v4124 = vadd.f32 %v3910, %v4123
        %4125 = vmatprep.mubr.bf16.mxu0 0
        %4126 = vmatmul.mubr.bf16.gmra.mxu0 %v3854
        %v4127 = vpop.f32.mrf.mxu0
        %v4128 = vadd.f32 %v3906, %v4127
        %v4129 = vpop.f32.mrf.mxu0
        %v4130 = vadd.f32 %v3910, %v4129
        %v4131 = vpop.f32.mrf.mxu0
        %v4132 = vadd.f32 %v3906, %v4131
        %v4133 = vpop.f32.mrf.mxu0
        %v4134 = vadd.f32 %v3910, %v4133
        %4135 = vmatprep.mubr.bf16.mxu0 0
        %4136 = vmatmul.mubr.bf16.gmra.mxu0 %v3855
        %v4137 = vpop.f32.mrf.mxu0
        %v4138 = vadd.f32 %v3906, %v4137
        %v4139 = vpop.f32.mrf.mxu0
        %v4140 = vadd.f32 %v3910, %v4139
        %v4141 = vpop.f32.mrf.mxu0
        %v4142 = vadd.f32 %v3906, %v4141
        %v4143 = vpop.f32.mrf.mxu0
        %v4144 = vadd.f32 %v3910, %v4143
        %4145 = vmatprep.mubr.bf16.mxu0 0
        %4146 = vmatmul.mubr.bf16.gmra.mxu0 %v3856
        %v4147 = vpop.f32.mrf.mxu0
        %v4148 = vadd.f32 %v3906, %v4147
        %v4149 = vpop.f32.mrf.mxu0
        %v4150 = vadd.f32 %v3910, %v4149
        %v4151 = vpop.f32.mrf.mxu0
        %v4152 = vadd.f32 %v3906, %v4151
        %v4153 = vpop.f32.mrf.mxu0
        %v4154 = vadd.f32 %v3910, %v4153
        %4155 = vmatprep.mubr.bf16.mxu0 0
        %4156 = vmatmul.mubr.bf16.gmra.mxu0 %v3857
        %v4157 = vpop.f32.mrf.mxu0
        %v4158 = vadd.f32 %v3906, %v4157
        %v4159 = vpop.f32.mrf.mxu0
        %v4160 = vadd.f32 %v3910, %v4159
        %v4161 = vpop.f32.mrf.mxu0
        %v4162 = vadd.f32 %v3906, %v4161
        %v4163 = vpop.f32.mrf.mxu0
        %v4164 = vadd.f32 %v3910, %v4163
        %4165 = vmatprep.mubr.bf16.mxu0 0
        %4166 = vmatmul.mubr.bf16.gmra.mxu0 %v3858
        %v4167 = vpop.f32.mrf.mxu0
        %v4168 = vadd.f32 %v3906, %v4167
        %v4169 = vpop.f32.mrf.mxu0
        %v4170 = vadd.f32 %v3910, %v4169
        %v4171 = vpop.f32.mrf.mxu0
        %v4172 = vadd.f32 %v3906, %v4171
        %v4173 = vpop.f32.mrf.mxu0
        %v4174 = vadd.f32 %v3910, %v4173
        %4175 = vmatprep.mubr.bf16.mxu0 0
        %4176 = vmatmul.mubr.bf16.gmra.mxu0 %v3859
        %v4177 = vpop.f32.mrf.mxu0
        %v4178 = vadd.f32 %v3906, %v4177
        %v4179 = vpop.f32.mrf.mxu0
        %v4180 = vadd.f32 %v3910, %v4179
        %v4181 = vpop.f32.mrf.mxu0
        %v4182 = vadd.f32 %v3906, %v4181
        %v4183 = vpop.f32.mrf.mxu0
        %v4184 = vadd.f32 %v3910, %v4183
        %4185 = vmatprep.mubr.bf16.mxu0 0
        %4186 = vmatmul.mubr.bf16.gmra.mxu0 %v3860
        %v4187 = vpop.f32.mrf.mxu0
        %v4188 = vadd.f32 %v3906, %v4187
        %v4189 = vpop.f32.mrf.mxu0
        %v4190 = vadd.f32 %v3910, %v4189
        %v4191 = vpop.f32.mrf.mxu0
        %v4192 = vadd.f32 %v3906, %v4191
        %v4193 = vpop.f32.mrf.mxu0
        %v4194 = vadd.f32 %v3910, %v4193
        %4195 = vmatprep.mubr.bf16.mxu0 0
        %4196 = vmatmul.mubr.bf16.gmra.mxu0 %v3861
        %v4197 = vpop.f32.mrf.mxu0
        %v4198 = vadd.f32 %v3906, %v4197
        %v4199 = vpop.f32.mrf.mxu0
        %v4200 = vadd.f32 %v3910, %v4199
        %v4201 = vpop.f32.mrf.mxu0
        %v4202 = vadd.f32 %v3906, %v4201
        %v4203 = vpop.f32.mrf.mxu0
        %v4204 = vadd.f32 %v3910, %v4203
        %4205 = vmatprep.mubr.bf16.mxu0 0
        %4206 = vmatmul.mubr.bf16.gmra.mxu0 %v3862
        %v4207 = vpop.f32.mrf.mxu0
        %v4208 = vadd.f32 %v3906, %v4207
        %v4209 = vpop.f32.mrf.mxu0
        %v4210 = vadd.f32 %v3910, %v4209
        %v4211 = vpop.f32.mrf.mxu0
        %v4212 = vadd.f32 %v3906, %v4211
        %v4213 = vpop.f32.mrf.mxu0
        %v4214 = vadd.f32 %v3910, %v4213
        %4215 = vmatprep.mubr.bf16.mxu0 0
        %4216 = vmatmul.mubr.bf16.gmra.mxu0 %v3863
        %v4217 = vpop.f32.mrf.mxu0
        %v4218 = vadd.f32 %v3906, %v4217
        %v4219 = vpop.f32.mrf.mxu0
        %v4220 = vadd.f32 %v3910, %v4219
        %v4221 = vpop.f32.mrf.mxu0
        %v4222 = vadd.f32 %v3906, %v4221
        %v4223 = vpop.f32.mrf.mxu0
        %v4224 = vadd.f32 %v3910, %v4223
        %4225 = vmatprep.mubr.bf16.mxu0 0
        %4226 = vmatmul.mubr.bf16.gmra.mxu0 %v3864
        %v4227 = vpop.f32.mrf.mxu0
        %v4228 = vadd.f32 %v3906, %v4227
        %v4229 = vpop.f32.mrf.mxu0
        %v4230 = vadd.f32 %v3910, %v4229
        %v4231 = vpop.f32.mrf.mxu0
        %v4232 = vadd.f32 %v3906, %v4231
        %v4233 = vpop.f32.mrf.mxu0
        %v4234 = vadd.f32 %v3910, %v4233
        %4235 = vmatprep.mubr.bf16.mxu0 0
        %4236 = vmatmul.mubr.bf16.gmra.mxu0 %v3865
        %v4237 = vpop.f32.mrf.mxu0
        %v4238 = vadd.f32 %v3906, %v4237
        %v4239 = vpop.f32.mrf.mxu0
        %v4240 = vadd.f32 %v3910, %v4239
        %v4241 = vpop.f32.mrf.mxu0
        %v4242 = vadd.f32 %v3906, %v4241
        %v4243 = vpop.f32.mrf.mxu0
        %v4244 = vadd.f32 %v3910, %v4243
        %4245 = vmatprep.mubr.bf16.mxu0 0
        %4246 = vmatmul.mubr.bf16.gmra.mxu0 %v3866
        %v4247 = vpop.f32.mrf.mxu0
        %v4248 = vadd.f32 %v3906, %v4247
        %v4249 = vpop.f32.mrf.mxu0
        %v4250 = vadd.f32 %v3910, %v4249
        %v4251 = vpop.f32.mrf.mxu0
        %v4252 = vadd.f32 %v3906, %v4251
        %v4253 = vpop.f32.mrf.mxu0
        %v4254 = vadd.f32 %v3910, %v4253
        %4255 = vmatprep.mubr.bf16.mxu0 0
        %4256 = vmatmul.mubr.bf16.gmra.mxu0 %v3867
        %v4257 = vpop.f32.mrf.mxu0
        %v4258 = vadd.f32 %v3906, %v4257
        %v4259 = vpop.f32.mrf.mxu0
        %v4260 = vadd.f32 %v3910, %v4259
        %v4261 = vpop.f32.mrf.mxu0
        %v4262 = vadd.f32 %v3906, %v4261
        %v4263 = vpop.f32.mrf.mxu0
        %v4264 = vadd.f32 %v3910, %v4263
        %4265 = vmatprep.mubr.bf16.mxu0 0
        %4266 = vmatmul.mubr.bf16.gmra.mxu0 %v3868
        %v4267 = vpop.f32.mrf.mxu0
        %v4268 = vadd.f32 %v3906, %v4267
        %v4269 = vpop.f32.mrf.mxu0
        %v4270 = vadd.f32 %v3910, %v4269
        %v4271 = vpop.f32.mrf.mxu0
        %v4272 = vadd.f32 %v3906, %v4271
        %v4273 = vpop.f32.mrf.mxu0
        %v4274 = vadd.f32 %v3910, %v4273
        %4275 = vdwg.mxu0
        %4276 = vmatprep.subr.bf16.mxu0 %v4050
        %4277 = vmatpush1.bf16.msra.mxu0 %v4049
        %4278 = vmatprep.subr.bf16.mxu0 %v4046
        %4279 = vmatpush1.bf16.msra.mxu0 %v4045
        %4280 = vmatprep.subr.bf16.mxu0 %v4042
        %4281 = vmatpush1.bf16.msra.mxu0 %v4041
        %4282 = vmatprep.subr.bf16.mxu0 %v4038
        %4283 = vmatpush1.bf16.msra.mxu0 %v4037
        %4284 = vmatprep.subr.bf16.mxu0 %v4034
        %4285 = vmatpush1.bf16.msra.mxu0 %v4033
        %4286 = vmatprep.subr.bf16.mxu0 %v4030
        %4287 = vmatpush1.bf16.msra.mxu0 %v4029
        %4288 = vmatprep.subr.bf16.mxu0 %v4026
        %4289 = vmatpush1.bf16.msra.mxu0 %v4025
        %4290 = vmatprep.subr.bf16.mxu0 %v4022
        %4291 = vmatpush1.bf16.msra.mxu0 %v4021
        %4292 = vmatprep.subr.bf16.mxu0 0
        %4293 = vmatpush2.bf16.msra.mxu0 0
        %4294 = vmatprep.subr.bf16.mxu0 0
        %4295 = vmatpush2.bf16.msra.mxu0 0
        %4296 = vmatprep.subr.bf16.mxu0 0
        %4297 = vmatpush2.bf16.msra.mxu0 0
        %4298 = vmatprep.subr.bf16.mxu0 0
        %4299 = vmatpush2.bf16.msra.mxu0 0
        %4300 = vmatprep.subr.bf16.mxu0 0
        %4301 = vmatpush2.bf16.msra.mxu0 0
        %4302 = vmatprep.subr.bf16.mxu0 0
        %4303 = vmatpush2.bf16.msra.mxu0 0
        %4304 = vmatprep.subr.bf16.mxu0 0
        %4305 = vmatpush2.bf16.msra.mxu0 0
        %4306 = vmatprep.subr.bf16.mxu0 0
        %4307 = vmatpush2.bf16.msra.mxu0 0
        %4308 = vmatprep.mubr.bf16.mxu0 0
        %4309 = vmatmul.mubr.bf16.gmra.mxu0 %v3853
        %v4310 = vpop.f32.mrf.mxu0
        %v4311 = vadd.f32 %v3914, %v4310
        %v4312 = vpop.f32.mrf.mxu0
        %v4313 = vadd.f32 %v3918, %v4312
        %v4314 = vpop.f32.mrf.mxu0
        %v4315 = vadd.f32 %v3914, %v4314
        %v4316 = vpop.f32.mrf.mxu0
        %v4317 = vadd.f32 %v3918, %v4316
        %4318 = vmatprep.mubr.bf16.mxu0 0
        %4319 = vmatmul.mubr.bf16.gmra.mxu0 %v3854
        %v4320 = vpop.f32.mrf.mxu0
        %v4321 = vadd.f32 %v3914, %v4320
        %v4322 = vpop.f32.mrf.mxu0
        %v4323 = vadd.f32 %v3918, %v4322
        %v4324 = vpop.f32.mrf.mxu0
        %v4325 = vadd.f32 %v3914, %v4324
        %v4326 = vpop.f32.mrf.mxu0
        %v4327 = vadd.f32 %v3918, %v4326
        %4328 = vmatprep.mubr.bf16.mxu0 0
        %4329 = vmatmul.mubr.bf16.gmra.mxu0 %v3855
        %v4330 = vpop.f32.mrf.mxu0
        %v4331 = vadd.f32 %v3914, %v4330
        %v4332 = vpop.f32.mrf.mxu0
        %v4333 = vadd.f32 %v3918, %v4332
        %v4334 = vpop.f32.mrf.mxu0
        %v4335 = vadd.f32 %v3914, %v4334
        %v4336 = vpop.f32.mrf.mxu0
        %v4337 = vadd.f32 %v3918, %v4336
        %4338 = vmatprep.mubr.bf16.mxu0 0
        %4339 = vmatmul.mubr.bf16.gmra.mxu0 %v3856
        %v4340 = vpop.f32.mrf.mxu0
        %v4341 = vadd.f32 %v3914, %v4340
        %v4342 = vpop.f32.mrf.mxu0
        %v4343 = vadd.f32 %v3918, %v4342
        %v4344 = vpop.f32.mrf.mxu0
        %v4345 = vadd.f32 %v3914, %v4344
        %v4346 = vpop.f32.mrf.mxu0
        %v4347 = vadd.f32 %v3918, %v4346
        %4348 = vmatprep.mubr.bf16.mxu0 0
        %4349 = vmatmul.mubr.bf16.gmra.mxu0 %v3857
        %v4350 = vpop.f32.mrf.mxu0
        %v4351 = vadd.f32 %v3914, %v4350
        %v4352 = vpop.f32.mrf.mxu0
        %v4353 = vadd.f32 %v3918, %v4352
        %v4354 = vpop.f32.mrf.mxu0
        %v4355 = vadd.f32 %v3914, %v4354
        %v4356 = vpop.f32.mrf.mxu0
        %v4357 = vadd.f32 %v3918, %v4356
        %4358 = vmatprep.mubr.bf16.mxu0 0
        %4359 = vmatmul.mubr.bf16.gmra.mxu0 %v3858
        %v4360 = vpop.f32.mrf.mxu0
        %v4361 = vadd.f32 %v3914, %v4360
        %v4362 = vpop.f32.mrf.mxu0
        %v4363 = vadd.f32 %v3918, %v4362
        %v4364 = vpop.f32.mrf.mxu0
        %v4365 = vadd.f32 %v3914, %v4364
        %v4366 = vpop.f32.mrf.mxu0
        %v4367 = vadd.f32 %v3918, %v4366
        %4368 = vmatprep.mubr.bf16.mxu0 0
        %4369 = vmatmul.mubr.bf16.gmra.mxu0 %v3859
        %v4370 = vpop.f32.mrf.mxu0
        %v4371 = vadd.f32 %v3914, %v4370
        %v4372 = vpop.f32.mrf.mxu0
        %v4373 = vadd.f32 %v3918, %v4372
        %v4374 = vpop.f32.mrf.mxu0
        %v4375 = vadd.f32 %v3914, %v4374
        %v4376 = vpop.f32.mrf.mxu0
        %v4377 = vadd.f32 %v3918, %v4376
        %4378 = vmatprep.mubr.bf16.mxu0 0
        %4379 = vmatmul.mubr.bf16.gmra.mxu0 %v3860
        %v4380 = vpop.f32.mrf.mxu0
        %v4381 = vadd.f32 %v3914, %v4380
        %v4382 = vpop.f32.mrf.mxu0
        %v4383 = vadd.f32 %v3918, %v4382
        %v4384 = vpop.f32.mrf.mxu0
        %v4385 = vadd.f32 %v3914, %v4384
        %v4386 = vpop.f32.mrf.mxu0
        %v4387 = vadd.f32 %v3918, %v4386
        %4388 = vmatprep.mubr.bf16.mxu0 0
        %4389 = vmatmul.mubr.bf16.gmra.mxu0 %v3861
        %v4390 = vpop.f32.mrf.mxu0
        %v4391 = vadd.f32 %v3914, %v4390
        %v4392 = vpop.f32.mrf.mxu0
        %v4393 = vadd.f32 %v3918, %v4392
        %v4394 = vpop.f32.mrf.mxu0
        %v4395 = vadd.f32 %v3914, %v4394
        %v4396 = vpop.f32.mrf.mxu0
        %v4397 = vadd.f32 %v3918, %v4396
        %4398 = vmatprep.mubr.bf16.mxu0 0
        %4399 = vmatmul.mubr.bf16.gmra.mxu0 %v3862
        %v4400 = vpop.f32.mrf.mxu0
        %v4401 = vadd.f32 %v3914, %v4400
        %v4402 = vpop.f32.mrf.mxu0
        %v4403 = vadd.f32 %v3918, %v4402
        %v4404 = vpop.f32.mrf.mxu0
        %v4405 = vadd.f32 %v3914, %v4404
        %v4406 = vpop.f32.mrf.mxu0
        %v4407 = vadd.f32 %v3918, %v4406
        %4408 = vmatprep.mubr.bf16.mxu0 0
        %4409 = vmatmul.mubr.bf16.gmra.mxu0 %v3863
        %v4410 = vpop.f32.mrf.mxu0
        %v4411 = vadd.f32 %v3914, %v4410
        %v4412 = vpop.f32.mrf.mxu0
        %v4413 = vadd.f32 %v3918, %v4412
        %v4414 = vpop.f32.mrf.mxu0
        %v4415 = vadd.f32 %v3914, %v4414
        %v4416 = vpop.f32.mrf.mxu0
        %v4417 = vadd.f32 %v3918, %v4416
        %4418 = vmatprep.mubr.bf16.mxu0 0
        %4419 = vmatmul.mubr.bf16.gmra.mxu0 %v3864
        %v4420 = vpop.f32.mrf.mxu0
        %v4421 = vadd.f32 %v3914, %v4420
        %v4422 = vpop.f32.mrf.mxu0
        %v4423 = vadd.f32 %v3918, %v4422
        %v4424 = vpop.f32.mrf.mxu0
        %v4425 = vadd.f32 %v3914, %v4424
        %v4426 = vpop.f32.mrf.mxu0
        %v4427 = vadd.f32 %v3918, %v4426
        %4428 = vmatprep.mubr.bf16.mxu0 0
        %4429 = vmatmul.mubr.bf16.gmra.mxu0 %v3865
        %v4430 = vpop.f32.mrf.mxu0
        %v4431 = vadd.f32 %v3914, %v4430
        %v4432 = vpop.f32.mrf.mxu0
        %v4433 = vadd.f32 %v3918, %v4432
        %v4434 = vpop.f32.mrf.mxu0
        %v4435 = vadd.f32 %v3914, %v4434
        %v4436 = vpop.f32.mrf.mxu0
        %v4437 = vadd.f32 %v3918, %v4436
        %4438 = vmatprep.mubr.bf16.mxu0 0
        %4439 = vmatmul.mubr.bf16.gmra.mxu0 %v3866
        %v4440 = vpop.f32.mrf.mxu0
        %v4441 = vadd.f32 %v3914, %v4440
        %v4442 = vpop.f32.mrf.mxu0
        %v4443 = vadd.f32 %v3918, %v4442
        %v4444 = vpop.f32.mrf.mxu0
        %v4445 = vadd.f32 %v3914, %v4444
        %v4446 = vpop.f32.mrf.mxu0
        %v4447 = vadd.f32 %v3918, %v4446
        %4448 = vmatprep.mubr.bf16.mxu0 0
        %4449 = vmatmul.mubr.bf16.gmra.mxu0 %v3867
        %v4450 = vpop.f32.mrf.mxu0
        %v4451 = vadd.f32 %v3914, %v4450
        %v4452 = vpop.f32.mrf.mxu0
        %v4453 = vadd.f32 %v3918, %v4452
        %v4454 = vpop.f32.mrf.mxu0
        %v4455 = vadd.f32 %v3914, %v4454
        %v4456 = vpop.f32.mrf.mxu0
        %v4457 = vadd.f32 %v3918, %v4456
        %4458 = vmatprep.mubr.bf16.mxu0 0
        %4459 = vmatmul.mubr.bf16.gmra.mxu0 %v3868
        %v4460 = vpop.f32.mrf.mxu0
        %v4461 = vadd.f32 %v3914, %v4460
        %v4462 = vpop.f32.mrf.mxu0
        %v4463 = vadd.f32 %v3918, %v4462
        %v4464 = vpop.f32.mrf.mxu0
        %v4465 = vadd.f32 %v3914, %v4464
        %v4466 = vpop.f32.mrf.mxu0
        %v4467 = vadd.f32 %v3918, %v4466
        %4468 = vdwg.mxu0
        %v4469 = vunpack.c.l.bf16 %v369
        %v4470 = vunpack.c.h.bf16 %v369
        %v4471 = vunpack.c.l.bf16 %v370
        %v4472 = vunpack.c.h.bf16 %v370
        %v4473 = vunpack.c.l.bf16 %v371
        %v4474 = vunpack.c.h.bf16 %v371
        %v4475 = vunpack.c.l.bf16 %v372
        %v4476 = vunpack.c.h.bf16 %v372
        %v4477 = vunpack.c.l.bf16 %v373
        %v4478 = vunpack.c.h.bf16 %v373
        %v4479 = vunpack.c.l.bf16 %v374
        %v4480 = vunpack.c.h.bf16 %v374
        %v4481 = vunpack.c.l.bf16 %v375
        %v4482 = vunpack.c.h.bf16 %v375
        %v4483 = vunpack.c.l.bf16 %v376
        %v4484 = vunpack.c.h.bf16 %v376
        %v4485 = vunpack.c.l.bf16 %v377
        %v4486 = vunpack.c.h.bf16 %v377
        %v4487 = vunpack.c.l.bf16 %v378
        %v4488 = vunpack.c.h.bf16 %v378
        %v4489 = vunpack.c.l.bf16 %v379
        %v4490 = vunpack.c.h.bf16 %v379
        %v4491 = vunpack.c.l.bf16 %v380
        %v4492 = vunpack.c.h.bf16 %v380
        %v4493 = vunpack.c.l.bf16 %v381
        %v4494 = vunpack.c.h.bf16 %v381
        %v4495 = vunpack.c.l.bf16 %v382
        %v4496 = vunpack.c.h.bf16 %v382
        %v4497 = vunpack.c.l.bf16 %v383
        %v4498 = vunpack.c.h.bf16 %v383
        %v4499 = vunpack.c.l.bf16 %v384
        %v4500 = vunpack.c.h.bf16 %v384
        %v4501 = vunpack.c.l.bf16 %v385
        %v4502 = vunpack.c.h.bf16 %v385
        %v4503 = vunpack.c.l.bf16 %v386
        %v4504 = vunpack.c.h.bf16 %v386
        %v4505 = vunpack.c.l.bf16 %v387
        %v4506 = vunpack.c.h.bf16 %v387
        %v4507 = vunpack.c.l.bf16 %v388
        %v4508 = vunpack.c.h.bf16 %v388
        %v4509 = vunpack.c.l.bf16 %v389
        %v4510 = vunpack.c.h.bf16 %v389
        %v4511 = vunpack.c.l.bf16 %v390
        %v4512 = vunpack.c.h.bf16 %v390
        %v4513 = vunpack.c.l.bf16 %v391
        %v4514 = vunpack.c.h.bf16 %v391
        %v4515 = vunpack.c.l.bf16 %v392
        %v4516 = vunpack.c.h.bf16 %v392
        %v4517 = vunpack.c.l.bf16 %v393
        %v4518 = vunpack.c.h.bf16 %v393
        %v4519 = vunpack.c.l.bf16 %v394
        %v4520 = vunpack.c.h.bf16 %v394
        %v4521 = vunpack.c.l.bf16 %v395
        %v4522 = vunpack.c.h.bf16 %v395
        %v4523 = vunpack.c.l.bf16 %v396
        %v4524 = vunpack.c.h.bf16 %v396
        %v4525 = vunpack.c.l.bf16 %v397
        %v4526 = vunpack.c.h.bf16 %v397
        %v4527 = vunpack.c.l.bf16 %v398
        %v4528 = vunpack.c.h.bf16 %v398
        %v4529 = vunpack.c.l.bf16 %v399
        %v4530 = vunpack.c.h.bf16 %v399
        %v4531 = vunpack.c.l.bf16 %v400
        %v4532 = vunpack.c.h.bf16 %v400
        %v4533 = vunpack.c.l.bf16 %v401
        %v4534 = vunpack.c.h.bf16 %v401
        %v4535 = vunpack.c.l.bf16 %v402
        %v4536 = vunpack.c.h.bf16 %v402
        %v4537 = vunpack.c.l.bf16 %v403
        %v4538 = vunpack.c.h.bf16 %v403
        %v4539 = vunpack.c.l.bf16 %v404
        %v4540 = vunpack.c.h.bf16 %v404
        %v4541 = vunpack.c.l.bf16 %v405
        %v4542 = vunpack.c.h.bf16 %v405
        %v4543 = vunpack.c.l.bf16 %v406
        %v4544 = vunpack.c.h.bf16 %v406
        %v4545 = vunpack.c.l.bf16 %v407
        %v4546 = vunpack.c.h.bf16 %v407
        %v4547 = vunpack.c.l.bf16 %v408
        %v4548 = vunpack.c.h.bf16 %v408
        %v4549 = vunpack.c.l.bf16 %v409
        %v4550 = vunpack.c.h.bf16 %v409
        %v4551 = vunpack.c.l.bf16 %v410
        %v4552 = vunpack.c.h.bf16 %v410
        %v4553 = vunpack.c.l.bf16 %v411
        %v4554 = vunpack.c.h.bf16 %v411
        %v4555 = vunpack.c.l.bf16 %v412
        %v4556 = vunpack.c.h.bf16 %v412
        %v4557 = vunpack.c.l.bf16 %v413
        %v4558 = vunpack.c.h.bf16 %v413
        %v4559 = vunpack.c.l.bf16 %v414
        %v4560 = vunpack.c.h.bf16 %v414
        %v4561 = vunpack.c.l.bf16 %v415
        %v4562 = vunpack.c.h.bf16 %v415
        %v4563 = vunpack.c.l.bf16 %v416
        %v4564 = vunpack.c.h.bf16 %v416
        %v4565 = vunpack.c.l.bf16 %v417
        %v4566 = vunpack.c.h.bf16 %v417
        %v4567 = vunpack.c.l.bf16 %v418
        %v4568 = vunpack.c.h.bf16 %v418
        %v4569 = vunpack.c.l.bf16 %v419
        %v4570 = vunpack.c.h.bf16 %v419
        %v4571 = vunpack.c.l.bf16 %v420
        %v4572 = vunpack.c.h.bf16 %v420
        %v4573 = vunpack.c.l.bf16 %v421
        %v4574 = vunpack.c.h.bf16 %v421
        %v4575 = vunpack.c.l.bf16 %v422
        %v4576 = vunpack.c.h.bf16 %v422
        %v4577 = vunpack.c.l.bf16 %v423
        %v4578 = vunpack.c.h.bf16 %v423
        %v4579 = vunpack.c.l.bf16 %v424
        %v4580 = vunpack.c.h.bf16 %v424
        %v4581 = vunpack.c.l.bf16 %v425
        %v4582 = vunpack.c.h.bf16 %v425
        %v4583 = vunpack.c.l.bf16 %v426
        %v4584 = vunpack.c.h.bf16 %v426
        %v4585 = vunpack.c.l.bf16 %v427
        %v4586 = vunpack.c.h.bf16 %v427
        %v4587 = vunpack.c.l.bf16 %v428
        %v4588 = vunpack.c.h.bf16 %v428
        %v4589 = vunpack.c.l.bf16 %v429
        %v4590 = vunpack.c.h.bf16 %v429
        %v4591 = vunpack.c.l.bf16 %v430
        %v4592 = vunpack.c.h.bf16 %v430
        %v4593 = vunpack.c.l.bf16 %v431
        %v4594 = vunpack.c.h.bf16 %v431
        %v4595 = vunpack.c.l.bf16 %v432
        %v4596 = vunpack.c.h.bf16 %v432
        %v4597 = vunpack.c.l.bf16 %v433
        %v4598 = vunpack.c.h.bf16 %v433
        %v4599 = vunpack.c.l.bf16 %v434
        %v4600 = vunpack.c.h.bf16 %v434
        %v4601 = vunpack.c.l.bf16 %v435
        %v4602 = vunpack.c.h.bf16 %v435
        %v4603 = vunpack.c.l.bf16 %v436
        %v4604 = vunpack.c.h.bf16 %v436
        %v4605 = vunpack.c.l.bf16 %v437
        %v4606 = vunpack.c.h.bf16 %v437
        %v4607 = vunpack.c.l.bf16 %v438
        %v4608 = vunpack.c.h.bf16 %v438
        %v4609 = vunpack.c.l.bf16 %v439
        %v4610 = vunpack.c.h.bf16 %v439
        %v4611 = vunpack.c.l.bf16 %v440
        %v4612 = vunpack.c.h.bf16 %v440
        %v4613 = vunpack.c.l.bf16 %v441
        %v4614 = vunpack.c.h.bf16 %v441
        %v4615 = vunpack.c.l.bf16 %v442
        %v4616 = vunpack.c.h.bf16 %v442
        %v4617 = vunpack.c.l.bf16 %v443
        %v4618 = vunpack.c.h.bf16 %v443
        %v4619 = vunpack.c.l.bf16 %v444
        %v4620 = vunpack.c.h.bf16 %v444
        %v4621 = vunpack.c.l.bf16 %v445
        %v4622 = vunpack.c.h.bf16 %v445
        %v4623 = vunpack.c.l.bf16 %v446
        %v4624 = vunpack.c.h.bf16 %v446
        %v4625 = vunpack.c.l.bf16 %v447
        %v4626 = vunpack.c.h.bf16 %v447
        %v4627 = vunpack.c.l.bf16 %v448
        %v4628 = vunpack.c.h.bf16 %v448
        %v4629 = vunpack.c.l.bf16 %v449
        %v4630 = vunpack.c.h.bf16 %v449
        %v4631 = vunpack.c.l.bf16 %v450
        %v4632 = vunpack.c.h.bf16 %v450
        %v4633 = vunpack.c.l.bf16 %v451
        %v4634 = vunpack.c.h.bf16 %v451
        %v4635 = vunpack.c.l.bf16 %v452
        %v4636 = vunpack.c.h.bf16 %v452
        %v4637 = vunpack.c.l.bf16 %v453
        %v4638 = vunpack.c.h.bf16 %v453
        %v4639 = vunpack.c.l.bf16 %v454
        %v4640 = vunpack.c.h.bf16 %v454
        %v4641 = vunpack.c.l.bf16 %v455
        %v4642 = vunpack.c.h.bf16 %v455
        %v4643 = vunpack.c.l.bf16 %v456
        %v4644 = vunpack.c.h.bf16 %v456
        %v4645 = vunpack.c.l.bf16 %v457
        %v4646 = vunpack.c.h.bf16 %v457
        %v4647 = vunpack.c.l.bf16 %v458
        %v4648 = vunpack.c.h.bf16 %v458
        %v4649 = vunpack.c.l.bf16 %v459
        %v4650 = vunpack.c.h.bf16 %v459
        %v4651 = vunpack.c.l.bf16 %v460
        %v4652 = vunpack.c.h.bf16 %v460
        %v4653 = vunpack.c.l.bf16 %v461
        %v4654 = vunpack.c.h.bf16 %v461
        %v4655 = vunpack.c.l.bf16 %v462
        %v4656 = vunpack.c.h.bf16 %v462
        %v4657 = vunpack.c.l.bf16 %v463
        %v4658 = vunpack.c.h.bf16 %v463
        %v4659 = vunpack.c.l.bf16 %v464
        %v4660 = vunpack.c.h.bf16 %v464
        %v4853 = vrot.slane %v4469, 1
        %v4854 = vrot.slane %v4473, 1
        %v4855 = vsel %vm2135, %v4853, %v4854
        %v4856 = vrot.slane %v4470, 1
        %v4857 = vrot.slane %v4474, 1
        %v4858 = vsel %vm2135, %v4856, %v4857
        %v4859 = vrot.slane %v4471, 1
        %v4860 = vrot.slane %v4475, 1
        %v4861 = vsel %vm2135, %v4859, %v4860
        %v4862 = vrot.slane %v4472, 1
        %v4863 = vrot.slane %v4476, 1
        %v4864 = vsel %vm2135, %v4862, %v4863
        %v4865 = vrot.slane %v4477, 1
        %v4866 = vsel %vm2135, %v4854, %v4865
        %v4867 = vrot.slane %v4478, 1
        %v4868 = vsel %vm2135, %v4857, %v4867
        %v4869 = vrot.slane %v4479, 1
        %v4870 = vsel %vm2135, %v4860, %v4869
        %v4871 = vrot.slane %v4480, 1
        %v4872 = vsel %vm2135, %v4863, %v4871
        %v4873 = vrot.slane %v4481, 1
        %v4874 = vrot.slane %v4485, 1
        %v4875 = vsel %vm2135, %v4873, %v4874
        %v4876 = vrot.slane %v4482, 1
        %v4877 = vrot.slane %v4486, 1
        %v4878 = vsel %vm2135, %v4876, %v4877
        %v4879 = vrot.slane %v4483, 1
        %v4880 = vrot.slane %v4487, 1
        %v4881 = vsel %vm2135, %v4879, %v4880
        %v4882 = vrot.slane %v4484, 1
        %v4883 = vrot.slane %v4488, 1
        %v4884 = vsel %vm2135, %v4882, %v4883
        %v4885 = vrot.slane %v4489, 1
        %v4886 = vsel %vm2135, %v4874, %v4885
        %v4887 = vrot.slane %v4490, 1
        %v4888 = vsel %vm2135, %v4877, %v4887
        %v4889 = vrot.slane %v4491, 1
        %v4890 = vsel %vm2135, %v4880, %v4889
        %v4891 = vrot.slane %v4492, 1
        %v4892 = vsel %vm2135, %v4883, %v4891
        %v4893 = vrot.slane %v4493, 1
        %v4894 = vrot.slane %v4497, 1
        %v4895 = vsel %vm2135, %v4893, %v4894
        %v4896 = vrot.slane %v4494, 1
        %v4897 = vrot.slane %v4498, 1
        %v4898 = vsel %vm2135, %v4896, %v4897
        %v4899 = vrot.slane %v4495, 1
        %v4900 = vrot.slane %v4499, 1
        %v4901 = vsel %vm2135, %v4899, %v4900
        %v4902 = vrot.slane %v4496, 1
        %v4903 = vrot.slane %v4500, 1
        %v4904 = vsel %vm2135, %v4902, %v4903
        %v4905 = vrot.slane %v4501, 1
        %v4906 = vsel %vm2135, %v4894, %v4905
        %v4907 = vrot.slane %v4502, 1
        %v4908 = vsel %vm2135, %v4897, %v4907
        %v4909 = vrot.slane %v4503, 1
        %v4910 = vsel %vm2135, %v4900, %v4909
        %v4911 = vrot.slane %v4504, 1
        %v4912 = vsel %vm2135, %v4903, %v4911
        %v4913 = vrot.slane %v4505, 1
        %v4914 = vrot.slane %v4509, 1
        %v4915 = vsel %vm2135, %v4913, %v4914
        %v4916 = vrot.slane %v4506, 1
        %v4917 = vrot.slane %v4510, 1
        %v4918 = vsel %vm2135, %v4916, %v4917
        %v4919 = vrot.slane %v4507, 1
        %v4920 = vrot.slane %v4511, 1
        %v4921 = vsel %vm2135, %v4919, %v4920
        %v4922 = vrot.slane %v4508, 1
        %v4923 = vrot.slane %v4512, 1
        %v4924 = vsel %vm2135, %v4922, %v4923
        %v4925 = vrot.slane %v4513, 1
        %v4926 = vsel %vm2135, %v4914, %v4925
        %v4927 = vrot.slane %v4514, 1
        %v4928 = vsel %vm2135, %v4917, %v4927
        %v4929 = vrot.slane %v4515, 1
        %v4930 = vsel %vm2135, %v4920, %v4929
        %v4931 = vrot.slane %v4516, 1
        %v4932 = vsel %vm2135, %v4923, %v4931
        %v4933 = vrot.slane %v4517, 1
        %v4934 = vrot.slane %v4521, 1
        %v4935 = vsel %vm2135, %v4933, %v4934
        %v4936 = vrot.slane %v4518, 1
        %v4937 = vrot.slane %v4522, 1
        %v4938 = vsel %vm2135, %v4936, %v4937
        %v4939 = vrot.slane %v4519, 1
        %v4940 = vrot.slane %v4523, 1
        %v4941 = vsel %vm2135, %v4939, %v4940
        %v4942 = vrot.slane %v4520, 1
        %v4943 = vrot.slane %v4524, 1
        %v4944 = vsel %vm2135, %v4942, %v4943
        %v4945 = vrot.slane %v4525, 1
        %v4946 = vsel %vm2135, %v4934, %v4945
        %v4947 = vrot.slane %v4526, 1
        %v4948 = vsel %vm2135, %v4937, %v4947
        %v4949 = vrot.slane %v4527, 1
        %v4950 = vsel %vm2135, %v4940, %v4949
        %v4951 = vrot.slane %v4528, 1
        %v4952 = vsel %vm2135, %v4943, %v4951
        %v4953 = vrot.slane %v4529, 1
        %v4954 = vrot.slane %v4533, 1
        %v4955 = vsel %vm2135, %v4953, %v4954
        %v4956 = vrot.slane %v4530, 1
        %v4957 = vrot.slane %v4534, 1
        %v4958 = vsel %vm2135, %v4956, %v4957
        %v4959 = vrot.slane %v4531, 1
        %v4960 = vrot.slane %v4535, 1
        %v4961 = vsel %vm2135, %v4959, %v4960
        %v4962 = vrot.slane %v4532, 1
        %v4963 = vrot.slane %v4536, 1
        %v4964 = vsel %vm2135, %v4962, %v4963
        %v4965 = vrot.slane %v4537, 1
        %v4966 = vsel %vm2135, %v4954, %v4965
        %v4967 = vrot.slane %v4538, 1
        %v4968 = vsel %vm2135, %v4957, %v4967
        %v4969 = vrot.slane %v4539, 1
        %v4970 = vsel %vm2135, %v4960, %v4969
        %v4971 = vrot.slane %v4540, 1
        %v4972 = vsel %vm2135, %v4963, %v4971
        %v4973 = vrot.slane %v4541, 1
        %v4974 = vrot.slane %v4545, 1
        %v4975 = vsel %vm2135, %v4973, %v4974
        %v4976 = vrot.slane %v4542, 1
        %v4977 = vrot.slane %v4546, 1
        %v4978 = vsel %vm2135, %v4976, %v4977
        %v4979 = vrot.slane %v4543, 1
        %v4980 = vrot.slane %v4547, 1
        %v4981 = vsel %vm2135, %v4979, %v4980
        %v4982 = vrot.slane %v4544, 1
        %v4983 = vrot.slane %v4548, 1
        %v4984 = vsel %vm2135, %v4982, %v4983
        %v4985 = vrot.slane %v4549, 1
        %v4986 = vsel %vm2135, %v4974, %v4985
        %v4987 = vrot.slane %v4550, 1
        %v4988 = vsel %vm2135, %v4977, %v4987
        %v4989 = vrot.slane %v4551, 1
        %v4990 = vsel %vm2135, %v4980, %v4989
        %v4991 = vrot.slane %v4552, 1
        %v4992 = vsel %vm2135, %v4983, %v4991
        %v4993 = vrot.slane %v4553, 1
        %v4994 = vrot.slane %v4557, 1
        %v4995 = vsel %vm2135, %v4993, %v4994
        %v4996 = vrot.slane %v4554, 1
        %v4997 = vrot.slane %v4558, 1
        %v4998 = vsel %vm2135, %v4996, %v4997
        %v4999 = vrot.slane %v4555, 1
        %v5000 = vrot.slane %v4559, 1
        %v5001 = vsel %vm2135, %v4999, %v5000
        %v5002 = vrot.slane %v4556, 1
        %v5003 = vrot.slane %v4560, 1
        %v5004 = vsel %vm2135, %v5002, %v5003
        %v5005 = vrot.slane %v4561, 1
        %v5006 = vsel %vm2135, %v4994, %v5005
        %v5007 = vrot.slane %v4562, 1
        %v5008 = vsel %vm2135, %v4997, %v5007
        %v5009 = vrot.slane %v4563, 1
        %v5010 = vsel %vm2135, %v5000, %v5009
        %v5011 = vrot.slane %v4564, 1
        %v5012 = vsel %vm2135, %v5003, %v5011
        %v5013 = vrot.slane %v4565, 1
        %v5014 = vrot.slane %v4569, 1
        %v5015 = vsel %vm2135, %v5013, %v5014
        %v5016 = vrot.slane %v4566, 1
        %v5017 = vrot.slane %v4570, 1
        %v5018 = vsel %vm2135, %v5016, %v5017
        %v5019 = vrot.slane %v4567, 1
        %v5020 = vrot.slane %v4571, 1
        %v5021 = vsel %vm2135, %v5019, %v5020
        %v5022 = vrot.slane %v4568, 1
        %v5023 = vrot.slane %v4572, 1
        %v5024 = vsel %vm2135, %v5022, %v5023
        %v5025 = vrot.slane %v4573, 1
        %v5026 = vsel %vm2135, %v5014, %v5025
        %v5027 = vrot.slane %v4574, 1
        %v5028 = vsel %vm2135, %v5017, %v5027
        %v5029 = vrot.slane %v4575, 1
        %v5030 = vsel %vm2135, %v5020, %v5029
        %v5031 = vrot.slane %v4576, 1
        %v5032 = vsel %vm2135, %v5023, %v5031
        %v5033 = vrot.slane %v4577, 1
        %v5034 = vrot.slane %v4581, 1
        %v5035 = vsel %vm2135, %v5033, %v5034
        %v5036 = vrot.slane %v4578, 1
        %v5037 = vrot.slane %v4582, 1
        %v5038 = vsel %vm2135, %v5036, %v5037
        %v5039 = vrot.slane %v4579, 1
        %v5040 = vrot.slane %v4583, 1
        %v5041 = vsel %vm2135, %v5039, %v5040
        %v5042 = vrot.slane %v4580, 1
        %v5043 = vrot.slane %v4584, 1
        %v5044 = vsel %vm2135, %v5042, %v5043
        %v5045 = vrot.slane %v4585, 1
        %v5046 = vsel %vm2135, %v5034, %v5045
        %v5047 = vrot.slane %v4586, 1
        %v5048 = vsel %vm2135, %v5037, %v5047
        %v5049 = vrot.slane %v4587, 1
        %v5050 = vsel %vm2135, %v5040, %v5049
        %v5051 = vrot.slane %v4588, 1
        %v5052 = vsel %vm2135, %v5043, %v5051
        %v5053 = vrot.slane %v4589, 1
        %v5054 = vrot.slane %v4593, 1
        %v5055 = vsel %vm2135, %v5053, %v5054
        %v5056 = vrot.slane %v4590, 1
        %v5057 = vrot.slane %v4594, 1
        %v5058 = vsel %vm2135, %v5056, %v5057
        %v5059 = vrot.slane %v4591, 1
        %v5060 = vrot.slane %v4595, 1
        %v5061 = vsel %vm2135, %v5059, %v5060
        %v5062 = vrot.slane %v4592, 1
        %v5063 = vrot.slane %v4596, 1
        %v5064 = vsel %vm2135, %v5062, %v5063
        %v5065 = vrot.slane %v4597, 1
        %v5066 = vsel %vm2135, %v5054, %v5065
        %v5067 = vrot.slane %v4598, 1
        %v5068 = vsel %vm2135, %v5057, %v5067
        %v5069 = vrot.slane %v4599, 1
        %v5070 = vsel %vm2135, %v5060, %v5069
        %v5071 = vrot.slane %v4600, 1
        %v5072 = vsel %vm2135, %v5063, %v5071
        %v5073 = vrot.slane %v4601, 1
        %v5074 = vrot.slane %v4605, 1
        %v5075 = vsel %vm2135, %v5073, %v5074
        %v5076 = vrot.slane %v4602, 1
        %v5077 = vrot.slane %v4606, 1
        %v5078 = vsel %vm2135, %v5076, %v5077
        %v5079 = vrot.slane %v4603, 1
        %v5080 = vrot.slane %v4607, 1
        %v5081 = vsel %vm2135, %v5079, %v5080
        %v5082 = vrot.slane %v4604, 1
        %v5083 = vrot.slane %v4608, 1
        %v5084 = vsel %vm2135, %v5082, %v5083
        %v5085 = vrot.slane %v4609, 1
        %v5086 = vsel %vm2135, %v5074, %v5085
        %v5087 = vrot.slane %v4610, 1
        %v5088 = vsel %vm2135, %v5077, %v5087
        %v5089 = vrot.slane %v4611, 1
        %v5090 = vsel %vm2135, %v5080, %v5089
        %v5091 = vrot.slane %v4612, 1
        %v5092 = vsel %vm2135, %v5083, %v5091
        %v5093 = vrot.slane %v4613, 1
        %v5094 = vrot.slane %v4617, 1
        %v5095 = vsel %vm2135, %v5093, %v5094
        %v5096 = vrot.slane %v4614, 1
        %v5097 = vrot.slane %v4618, 1
        %v5098 = vsel %vm2135, %v5096, %v5097
        %v5099 = vrot.slane %v4615, 1
        %v5100 = vrot.slane %v4619, 1
        %v5101 = vsel %vm2135, %v5099, %v5100
        %v5102 = vrot.slane %v4616, 1
        %v5103 = vrot.slane %v4620, 1
        %v5104 = vsel %vm2135, %v5102, %v5103
        %v5105 = vrot.slane %v4621, 1
        %v5106 = vsel %vm2135, %v5094, %v5105
        %v5107 = vrot.slane %v4622, 1
        %v5108 = vsel %vm2135, %v5097, %v5107
        %v5109 = vrot.slane %v4623, 1
        %v5110 = vsel %vm2135, %v5100, %v5109
        %v5111 = vrot.slane %v4624, 1
        %v5112 = vsel %vm2135, %v5103, %v5111
        %v5113 = vrot.slane %v4625, 1
        %v5114 = vrot.slane %v4629, 1
        %v5115 = vsel %vm2135, %v5113, %v5114
        %v5116 = vrot.slane %v4626, 1
        %v5117 = vrot.slane %v4630, 1
        %v5118 = vsel %vm2135, %v5116, %v5117
        %v5119 = vrot.slane %v4627, 1
        %v5120 = vrot.slane %v4631, 1
        %v5121 = vsel %vm2135, %v5119, %v5120
        %v5122 = vrot.slane %v4628, 1
        %v5123 = vrot.slane %v4632, 1
        %v5124 = vsel %vm2135, %v5122, %v5123
        %v5125 = vrot.slane %v4633, 1
        %v5126 = vsel %vm2135, %v5114, %v5125
        %v5127 = vrot.slane %v4634, 1
        %v5128 = vsel %vm2135, %v5117, %v5127
        %v5129 = vrot.slane %v4635, 1
        %v5130 = vsel %vm2135, %v5120, %v5129
        %v5131 = vrot.slane %v4636, 1
        %v5132 = vsel %vm2135, %v5123, %v5131
        %v5133 = vrot.slane %v4637, 1
        %v5134 = vrot.slane %v4641, 1
        %v5135 = vsel %vm2135, %v5133, %v5134
        %v5136 = vrot.slane %v4638, 1
        %v5137 = vrot.slane %v4642, 1
        %v5138 = vsel %vm2135, %v5136, %v5137
        %v5139 = vrot.slane %v4639, 1
        %v5140 = vrot.slane %v4643, 1
        %v5141 = vsel %vm2135, %v5139, %v5140
        %v5142 = vrot.slane %v4640, 1
        %v5143 = vrot.slane %v4644, 1
        %v5144 = vsel %vm2135, %v5142, %v5143
        %v5145 = vrot.slane %v4645, 1
        %v5146 = vsel %vm2135, %v5134, %v5145
        %v5147 = vrot.slane %v4646, 1
        %v5148 = vsel %vm2135, %v5137, %v5147
        %v5149 = vrot.slane %v4647, 1
        %v5150 = vsel %vm2135, %v5140, %v5149
        %v5151 = vrot.slane %v4648, 1
        %v5152 = vsel %vm2135, %v5143, %v5151
        %v5153 = vrot.slane %v4649, 1
        %v5154 = vrot.slane %v4653, 1
        %v5155 = vsel %vm2135, %v5153, %v5154
        %v5156 = vrot.slane %v4650, 1
        %v5157 = vrot.slane %v4654, 1
        %v5158 = vsel %vm2135, %v5156, %v5157
        %v5159 = vrot.slane %v4651, 1
        %v5160 = vrot.slane %v4655, 1
        %v5161 = vsel %vm2135, %v5159, %v5160
        %v5162 = vrot.slane %v4652, 1
        %v5163 = vrot.slane %v4656, 1
        %v5164 = vsel %vm2135, %v5162, %v5163
        %v5165 = vrot.slane %v4657, 1
        %v5166 = vsel %vm2135, %v5154, %v5165
        %v5167 = vrot.slane %v4658, 1
        %v5168 = vsel %vm2135, %v5157, %v5167
        %v5169 = vrot.slane %v4659, 1
        %v5170 = vsel %vm2135, %v5160, %v5169
        %v5171 = vrot.slane %v4660, 1
        %v5172 = vsel %vm2135, %v5163, %v5171
        %v5301 = vadd.f32 %v4118, %v4855
        %v5302 = vadd.f32 %v4120, %v4858
        %v5303 = vadd.f32 %v4311, %v4861
        %v5304 = vadd.f32 %v4313, %v4864
        %v5305 = vadd.f32 %v4122, %v4866
        %v5306 = vadd.f32 %v4124, %v4868
        %v5307 = vadd.f32 %v4315, %v4870
        %v5308 = vadd.f32 %v4317, %v4872
        %v5309 = vadd.f32 %v4128, %v4875
        %v5310 = vadd.f32 %v4130, %v4878
        %v5311 = vadd.f32 %v4321, %v4881
        %v5312 = vadd.f32 %v4323, %v4884
        %v5313 = vadd.f32 %v4132, %v4886
        %v5314 = vadd.f32 %v4134, %v4888
        %v5315 = vadd.f32 %v4325, %v4890
        %v5316 = vadd.f32 %v4327, %v4892
        %v5317 = vadd.f32 %v4138, %v4895
        %v5318 = vadd.f32 %v4140, %v4898
        %v5319 = vadd.f32 %v4331, %v4901
        %v5320 = vadd.f32 %v4333, %v4904
        %v5321 = vadd.f32 %v4142, %v4906
        %v5322 = vadd.f32 %v4144, %v4908
        %v5323 = vadd.f32 %v4335, %v4910
        %v5324 = vadd.f32 %v4337, %v4912
        %v5325 = vadd.f32 %v4148, %v4915
        %v5326 = vadd.f32 %v4150, %v4918
        %v5327 = vadd.f32 %v4341, %v4921
        %v5328 = vadd.f32 %v4343, %v4924
        %v5329 = vadd.f32 %v4152, %v4926
        %v5330 = vadd.f32 %v4154, %v4928
        %v5331 = vadd.f32 %v4345, %v4930
        %v5332 = vadd.f32 %v4347, %v4932
        %v5333 = vadd.f32 %v4158, %v4935
        %v5334 = vadd.f32 %v4160, %v4938
        %v5335 = vadd.f32 %v4351, %v4941
        %v5336 = vadd.f32 %v4353, %v4944
        %v5337 = vadd.f32 %v4162, %v4946
        %v5338 = vadd.f32 %v4164, %v4948
        %v5339 = vadd.f32 %v4355, %v4950
        %v5340 = vadd.f32 %v4357, %v4952
        %v5341 = vadd.f32 %v4168, %v4955
        %v5342 = vadd.f32 %v4170, %v4958
        %v5343 = vadd.f32 %v4361, %v4961
        %v5344 = vadd.f32 %v4363, %v4964
        %v5345 = vadd.f32 %v4172, %v4966
        %v5346 = vadd.f32 %v4174, %v4968
        %v5347 = vadd.f32 %v4365, %v4970
        %v5348 = vadd.f32 %v4367, %v4972
        %v5349 = vadd.f32 %v4178, %v4975
        %v5350 = vadd.f32 %v4180, %v4978
        %v5351 = vadd.f32 %v4371, %v4981
        %v5352 = vadd.f32 %v4373, %v4984
        %v5353 = vadd.f32 %v4182, %v4986
        %v5354 = vadd.f32 %v4184, %v4988
        %v5355 = vadd.f32 %v4375, %v4990
        %v5356 = vadd.f32 %v4377, %v4992
        %v5357 = vadd.f32 %v4188, %v4995
        %v5358 = vadd.f32 %v4190, %v4998
        %v5359 = vadd.f32 %v4381, %v5001
        %v5360 = vadd.f32 %v4383, %v5004
        %v5361 = vadd.f32 %v4192, %v5006
        %v5362 = vadd.f32 %v4194, %v5008
        %v5363 = vadd.f32 %v4385, %v5010
        %v5364 = vadd.f32 %v4387, %v5012
        %v5365 = vadd.f32 %v4198, %v5015
        %v5366 = vadd.f32 %v4200, %v5018
        %v5367 = vadd.f32 %v4391, %v5021
        %v5368 = vadd.f32 %v4393, %v5024
        %v5369 = vadd.f32 %v4202, %v5026
        %v5370 = vadd.f32 %v4204, %v5028
        %v5371 = vadd.f32 %v4395, %v5030
        %v5372 = vadd.f32 %v4397, %v5032
        %v5373 = vadd.f32 %v4208, %v5035
        %v5374 = vadd.f32 %v4210, %v5038
        %v5375 = vadd.f32 %v4401, %v5041
        %v5376 = vadd.f32 %v4403, %v5044
        %v5377 = vadd.f32 %v4212, %v5046
        %v5378 = vadd.f32 %v4214, %v5048
        %v5379 = vadd.f32 %v4405, %v5050
        %v5380 = vadd.f32 %v4407, %v5052
        %v5381 = vadd.f32 %v4218, %v5055
        %v5382 = vadd.f32 %v4220, %v5058
        %v5383 = vadd.f32 %v4411, %v5061
        %v5384 = vadd.f32 %v4413, %v5064
        %v5385 = vadd.f32 %v4222, %v5066
        %v5386 = vadd.f32 %v4224, %v5068
        %v5387 = vadd.f32 %v4415, %v5070
        %v5388 = vadd.f32 %v4417, %v5072
        %v5389 = vadd.f32 %v4228, %v5075
        %v5390 = vadd.f32 %v4230, %v5078
        %v5391 = vadd.f32 %v4421, %v5081
        %v5392 = vadd.f32 %v4423, %v5084
        %v5393 = vadd.f32 %v4232, %v5086
        %v5394 = vadd.f32 %v4234, %v5088
        %v5395 = vadd.f32 %v4425, %v5090
        %v5396 = vadd.f32 %v4427, %v5092
        %v5397 = vadd.f32 %v4238, %v5095
        %v5398 = vadd.f32 %v4240, %v5098
        %v5399 = vadd.f32 %v4431, %v5101
        %v5400 = vadd.f32 %v4433, %v5104
        %v5401 = vadd.f32 %v4242, %v5106
        %v5402 = vadd.f32 %v4244, %v5108
        %v5403 = vadd.f32 %v4435, %v5110
        %v5404 = vadd.f32 %v4437, %v5112
        %v5405 = vadd.f32 %v4248, %v5115
        %v5406 = vadd.f32 %v4250, %v5118
        %v5407 = vadd.f32 %v4441, %v5121
        %v5408 = vadd.f32 %v4443, %v5124
        %v5409 = vadd.f32 %v4252, %v5126
        %v5410 = vadd.f32 %v4254, %v5128
        %v5411 = vadd.f32 %v4445, %v5130
        %v5412 = vadd.f32 %v4447, %v5132
        %v5413 = vadd.f32 %v4258, %v5135
        %v5414 = vadd.f32 %v4260, %v5138
        %v5415 = vadd.f32 %v4451, %v5141
        %v5416 = vadd.f32 %v4453, %v5144
        %v5417 = vadd.f32 %v4262, %v5146
        %v5418 = vadd.f32 %v4264, %v5148
        %v5419 = vadd.f32 %v4455, %v5150
        %v5420 = vadd.f32 %v4457, %v5152
        %v5421 = vadd.f32 %v4268, %v5155
        %v5422 = vadd.f32 %v4270, %v5158
        %v5423 = vadd.f32 %v4461, %v5161
        %v5424 = vadd.f32 %v4463, %v5164
        %v5425 = vadd.f32 %v4272, %v5166
        %v5426 = vadd.f32 %v4274, %v5168
        %v5427 = vadd.f32 %v4465, %v5170
        %v5428 = vadd.f32 %v4467, %v5172
        %v5429 = vmax.f32 %v5301, 0.0
        %v5430 = vmax.f32 %v5302, 0.0
        %v5431 = vmax.f32 %v5303, 0.0
        %v5432 = vmax.f32 %v5304, 0.0
        %v5433 = vmax.f32 %v5305, 0.0
        %v5434 = vmax.f32 %v5306, 0.0
        %v5435 = vmax.f32 %v5307, 0.0
        %v5436 = vmax.f32 %v5308, 0.0
        %v5437 = vmax.f32 %v5309, 0.0
        %v5438 = vmax.f32 %v5310, 0.0
        %v5439 = vmax.f32 %v5311, 0.0
        %v5440 = vmax.f32 %v5312, 0.0
        %v5441 = vmax.f32 %v5313, 0.0
        %v5442 = vmax.f32 %v5314, 0.0
        %v5443 = vmax.f32 %v5315, 0.0
        %v5444 = vmax.f32 %v5316, 0.0
        %v5445 = vmax.f32 %v5317, 0.0
        %v5446 = vmax.f32 %v5318, 0.0
        %v5447 = vmax.f32 %v5319, 0.0
        %v5448 = vmax.f32 %v5320, 0.0
        %v5449 = vmax.f32 %v5321, 0.0
        %v5450 = vmax.f32 %v5322, 0.0
        %v5451 = vmax.f32 %v5323, 0.0
        %v5452 = vmax.f32 %v5324, 0.0
        %v5453 = vmax.f32 %v5325, 0.0
        %v5454 = vmax.f32 %v5326, 0.0
        %v5455 = vmax.f32 %v5327, 0.0
        %v5456 = vmax.f32 %v5328, 0.0
        %v5457 = vmax.f32 %v5329, 0.0
        %v5458 = vmax.f32 %v5330, 0.0
        %v5459 = vmax.f32 %v5331, 0.0
        %v5460 = vmax.f32 %v5332, 0.0
        %v5461 = vmax.f32 %v5333, 0.0
        %v5462 = vmax.f32 %v5334, 0.0
        %v5463 = vmax.f32 %v5335, 0.0
        %v5464 = vmax.f32 %v5336, 0.0
        %v5465 = vmax.f32 %v5337, 0.0
        %v5466 = vmax.f32 %v5338, 0.0
        %v5467 = vmax.f32 %v5339, 0.0
        %v5468 = vmax.f32 %v5340, 0.0
        %v5469 = vmax.f32 %v5341, 0.0
        %v5470 = vmax.f32 %v5342, 0.0
        %v5471 = vmax.f32 %v5343, 0.0
        %v5472 = vmax.f32 %v5344, 0.0
        %v5473 = vmax.f32 %v5345, 0.0
        %v5474 = vmax.f32 %v5346, 0.0
        %v5475 = vmax.f32 %v5347, 0.0
        %v5476 = vmax.f32 %v5348, 0.0
        %v5477 = vmax.f32 %v5349, 0.0
        %v5478 = vmax.f32 %v5350, 0.0
        %v5479 = vmax.f32 %v5351, 0.0
        %v5480 = vmax.f32 %v5352, 0.0
        %v5481 = vmax.f32 %v5353, 0.0
        %v5482 = vmax.f32 %v5354, 0.0
        %v5483 = vmax.f32 %v5355, 0.0
        %v5484 = vmax.f32 %v5356, 0.0
        %v5485 = vmax.f32 %v5357, 0.0
        %v5486 = vmax.f32 %v5358, 0.0
        %v5487 = vmax.f32 %v5359, 0.0
        %v5488 = vmax.f32 %v5360, 0.0
        %v5489 = vmax.f32 %v5361, 0.0
        %v5490 = vmax.f32 %v5362, 0.0
        %v5491 = vmax.f32 %v5363, 0.0
        %v5492 = vmax.f32 %v5364, 0.0
        %v5493 = vmax.f32 %v5365, 0.0
        %v5494 = vmax.f32 %v5366, 0.0
        %v5495 = vmax.f32 %v5367, 0.0
        %v5496 = vmax.f32 %v5368, 0.0
        %v5497 = vmax.f32 %v5369, 0.0
        %v5498 = vmax.f32 %v5370, 0.0
        %v5499 = vmax.f32 %v5371, 0.0
        %v5500 = vmax.f32 %v5372, 0.0
        %v5501 = vmax.f32 %v5373, 0.0
        %v5502 = vmax.f32 %v5374, 0.0
        %v5503 = vmax.f32 %v5375, 0.0
        %v5504 = vmax.f32 %v5376, 0.0
        %v5505 = vmax.f32 %v5377, 0.0
        %v5506 = vmax.f32 %v5378, 0.0
        %v5507 = vmax.f32 %v5379, 0.0
        %v5508 = vmax.f32 %v5380, 0.0
        %v5509 = vmax.f32 %v5381, 0.0
        %v5510 = vmax.f32 %v5382, 0.0
        %v5511 = vmax.f32 %v5383, 0.0
        %v5512 = vmax.f32 %v5384, 0.0
        %v5513 = vmax.f32 %v5385, 0.0
        %v5514 = vmax.f32 %v5386, 0.0
        %v5515 = vmax.f32 %v5387, 0.0
        %v5516 = vmax.f32 %v5388, 0.0
        %v5517 = vmax.f32 %v5389, 0.0
        %v5518 = vmax.f32 %v5390, 0.0
        %v5519 = vmax.f32 %v5391, 0.0
        %v5520 = vmax.f32 %v5392, 0.0
        %v5521 = vmax.f32 %v5393, 0.0
        %v5522 = vmax.f32 %v5394, 0.0
        %v5523 = vmax.f32 %v5395, 0.0
        %v5524 = vmax.f32 %v5396, 0.0
        %v5525 = vmax.f32 %v5397, 0.0
        %v5526 = vmax.f32 %v5398, 0.0
        %v5527 = vmax.f32 %v5399, 0.0
        %v5528 = vmax.f32 %v5400, 0.0
        %v5529 = vmax.f32 %v5401, 0.0
        %v5530 = vmax.f32 %v5402, 0.0
        %v5531 = vmax.f32 %v5403, 0.0
        %v5532 = vmax.f32 %v5404, 0.0
        %v5533 = vmax.f32 %v5405, 0.0
        %v5534 = vmax.f32 %v5406, 0.0
        %v5535 = vmax.f32 %v5407, 0.0
        %v5536 = vmax.f32 %v5408, 0.0
        %v5537 = vmax.f32 %v5409, 0.0
        %v5538 = vmax.f32 %v5410, 0.0
        %v5539 = vmax.f32 %v5411, 0.0
        %v5540 = vmax.f32 %v5412, 0.0
        %v5541 = vmax.f32 %v5413, 0.0
        %v5542 = vmax.f32 %v5414, 0.0
        %v5543 = vmax.f32 %v5415, 0.0
        %v5544 = vmax.f32 %v5416, 0.0
        %v5545 = vmax.f32 %v5417, 0.0
        %v5546 = vmax.f32 %v5418, 0.0
        %v5547 = vmax.f32 %v5419, 0.0
        %v5548 = vmax.f32 %v5420, 0.0
        %v5549 = vmax.f32 %v5421, 0.0
        %v5550 = vmax.f32 %v5422, 0.0
        %v5551 = vmax.f32 %v5423, 0.0
        %v5552 = vmax.f32 %v5424, 0.0
        %v5553 = vmax.f32 %v5425, 0.0
        %v5554 = vmax.f32 %v5426, 0.0
        %v5555 = vmax.f32 %v5427, 0.0
        %v5556 = vmax.f32 %v5428, 0.0
        %5557 = vst [vmem:[%s354] sm:$0xff] %v5429
        %5558 = vst [vmem:[%s354 + $0x8] sm:$0xff] %v5430
        %5559 = vst [vmem:[%s354 + $0x10] sm:$0xff] %v5431
        %5560 = vst [vmem:[%s354 + $0x18] sm:$0xff] %v5432
        %5561 = vst [vmem:[%s354 + $0x20] sm:$0xff] %v5433
        %5562 = vst [vmem:[%s354 + $0x28] sm:$0xff] %v5434
        %5563 = vst [vmem:[%s354 + $0x30] sm:$0xff] %v5435
        %5564 = vst [vmem:[%s354 + $0x38] sm:$0xff] %v5436
        %5565 = vst [vmem:[%s354 + $0x40] sm:$0xff] %v5437
        %5566 = vst [vmem:[%s354 + $0x48] sm:$0xff] %v5438
        %5567 = vst [vmem:[%s354 + $0x50] sm:$0xff] %v5439
        %5568 = vst [vmem:[%s354 + $0x58] sm:$0xff] %v5440
        %5569 = vst [vmem:[%s354 + $0x60] sm:$0xff] %v5441
        %5570 = vst [vmem:[%s354 + $0x68] sm:$0xff] %v5442
        %5571 = vst [vmem:[%s354 + $0x70] sm:$0xff] %v5443
        %5572 = vst [vmem:[%s354 + $0x78] sm:$0xff] %v5444
        %5573 = vst [vmem:[%s354 + $0x80] sm:$0xff] %v5445
        %5574 = vst [vmem:[%s354 + $0x88] sm:$0xff] %v5446
        %5575 = vst [vmem:[%s354 + $0x90] sm:$0xff] %v5447
        %5576 = vst [vmem:[%s354 + $0x98] sm:$0xff] %v5448
        %5577 = vst [vmem:[%s354 + $0xa0] sm:$0xff] %v5449
        %5578 = vst [vmem:[%s354 + $0xa8] sm:$0xff] %v5450
        %5579 = vst [vmem:[%s354 + $0xb0] sm:$0xff] %v5451
        %5580 = vst [vmem:[%s354 + $0xb8] sm:$0xff] %v5452
        %5581 = vst [vmem:[%s354 + $0xc0] sm:$0xff] %v5453
        %5582 = vst [vmem:[%s354 + $0xc8] sm:$0xff] %v5454
        %5583 = vst [vmem:[%s354 + $0xd0] sm:$0xff] %v5455
        %5584 = vst [vmem:[%s354 + $0xd8] sm:$0xff] %v5456
        %5585 = vst [vmem:[%s354 + $0xe0] sm:$0xff] %v5457
        %5586 = vst [vmem:[%s354 + $0xe8] sm:$0xff] %v5458
        %5587 = vst [vmem:[%s354 + $0xf0] sm:$0xff] %v5459
        %5588 = vst [vmem:[%s354 + $0xf8] sm:$0xff] %v5460
        %5589 = vst [vmem:[%s354 + $0x100] sm:$0xff] %v5461
        %5590 = vst [vmem:[%s354 + $0x108] sm:$0xff] %v5462
        %5591 = vst [vmem:[%s354 + $0x110] sm:$0xff] %v5463
        %5592 = vst [vmem:[%s354 + $0x118] sm:$0xff] %v5464
        %5593 = vst [vmem:[%s354 + $0x120] sm:$0xff] %v5465
        %5594 = vst [vmem:[%s354 + $0x128] sm:$0xff] %v5466
        %5595 = vst [vmem:[%s354 + $0x130] sm:$0xff] %v5467
        %5596 = vst [vmem:[%s354 + $0x138] sm:$0xff] %v5468
        %5597 = vst [vmem:[%s354 + $0x140] sm:$0xff] %v5469
        %5598 = vst [vmem:[%s354 + $0x148] sm:$0xff] %v5470
        %5599 = vst [vmem:[%s354 + $0x150] sm:$0xff] %v5471
        %5600 = vst [vmem:[%s354 + $0x158] sm:$0xff] %v5472
        %5601 = vst [vmem:[%s354 + $0x160] sm:$0xff] %v5473
        %5602 = vst [vmem:[%s354 + $0x168] sm:$0xff] %v5474
        %5603 = vst [vmem:[%s354 + $0x170] sm:$0xff] %v5475
        %5604 = vst [vmem:[%s354 + $0x178] sm:$0xff] %v5476
        %5605 = vst [vmem:[%s354 + $0x180] sm:$0xff] %v5477
        %5606 = vst [vmem:[%s354 + $0x188] sm:$0xff] %v5478
        %5607 = vst [vmem:[%s354 + $0x190] sm:$0xff] %v5479
        %5608 = vst [vmem:[%s354 + $0x198] sm:$0xff] %v5480
        %5609 = vst [vmem:[%s354 + $0x1a0] sm:$0xff] %v5481
        %5610 = vst [vmem:[%s354 + $0x1a8] sm:$0xff] %v5482
        %5611 = vst [vmem:[%s354 + $0x1b0] sm:$0xff] %v5483
        %5612 = vst [vmem:[%s354 + $0x1b8] sm:$0xff] %v5484
        %5613 = vst [vmem:[%s354 + $0x1c0] sm:$0xff] %v5485
        %5614 = vst [vmem:[%s354 + $0x1c8] sm:$0xff] %v5486
        %5615 = vst [vmem:[%s354 + $0x1d0] sm:$0xff] %v5487
        %5616 = vst [vmem:[%s354 + $0x1d8] sm:$0xff] %v5488
        %5617 = vst [vmem:[%s354 + $0x1e0] sm:$0xff] %v5489
        %5618 = vst [vmem:[%s354 + $0x1e8] sm:$0xff] %v5490
        %5619 = vst [vmem:[%s354 + $0x1f0] sm:$0xff] %v5491
        %5620 = vst [vmem:[%s354 + $0x1f8] sm:$0xff] %v5492
        %5621 = vst [vmem:[%s354 + $0x200] sm:$0xff] %v5493
        %5622 = vst [vmem:[%s354 + $0x208] sm:$0xff] %v5494
        %5623 = vst [vmem:[%s354 + $0x210] sm:$0xff] %v5495
        %5624 = vst [vmem:[%s354 + $0x218] sm:$0xff] %v5496
        %5625 = vst [vmem:[%s354 + $0x220] sm:$0xff] %v5497
        %5626 = vst [vmem:[%s354 + $0x228] sm:$0xff] %v5498
        %5627 = vst [vmem:[%s354 + $0x230] sm:$0xff] %v5499
        %5628 = vst [vmem:[%s354 + $0x238] sm:$0xff] %v5500
        %5629 = vst [vmem:[%s354 + $0x240] sm:$0xff] %v5501
        %5630 = vst [vmem:[%s354 + $0x248] sm:$0xff] %v5502
        %5631 = vst [vmem:[%s354 + $0x250] sm:$0xff] %v5503
        %5632 = vst [vmem:[%s354 + $0x258] sm:$0xff] %v5504
        %5633 = vst [vmem:[%s354 + $0x260] sm:$0xff] %v5505
        %5634 = vst [vmem:[%s354 + $0x268] sm:$0xff] %v5506
        %5635 = vst [vmem:[%s354 + $0x270] sm:$0xff] %v5507
        %5636 = vst [vmem:[%s354 + $0x278] sm:$0xff] %v5508
        %5637 = vst [vmem:[%s354 + $0x280] sm:$0xff] %v5509
        %5638 = vst [vmem:[%s354 + $0x288] sm:$0xff] %v5510
        %5639 = vst [vmem:[%s354 + $0x290] sm:$0xff] %v5511
        %5640 = vst [vmem:[%s354 + $0x298] sm:$0xff] %v5512
        %5641 = vst [vmem:[%s354 + $0x2a0] sm:$0xff] %v5513
        %5642 = vst [vmem:[%s354 + $0x2a8] sm:$0xff] %v5514
        %5643 = vst [vmem:[%s354 + $0x2b0] sm:$0xff] %v5515
        %5644 = vst [vmem:[%s354 + $0x2b8] sm:$0xff] %v5516
        %5645 = vst [vmem:[%s354 + $0x2c0] sm:$0xff] %v5517
        %5646 = vst [vmem:[%s354 + $0x2c8] sm:$0xff] %v5518
        %5647 = vst [vmem:[%s354 + $0x2d0] sm:$0xff] %v5519
        %5648 = vst [vmem:[%s354 + $0x2d8] sm:$0xff] %v5520
        %5649 = vst [vmem:[%s354 + $0x2e0] sm:$0xff] %v5521
        %5650 = vst [vmem:[%s354 + $0x2e8] sm:$0xff] %v5522
        %5651 = vst [vmem:[%s354 + $0x2f0] sm:$0xff] %v5523
        %5652 = vst [vmem:[%s354 + $0x2f8] sm:$0xff] %v5524
        %5653 = vst [vmem:[%s354 + $0x300] sm:$0xff] %v5525
        %5654 = vst [vmem:[%s354 + $0x308] sm:$0xff] %v5526
        %5655 = vst [vmem:[%s354 + $0x310] sm:$0xff] %v5527
        %5656 = vst [vmem:[%s354 + $0x318] sm:$0xff] %v5528
        %5657 = vst [vmem:[%s354 + $0x320] sm:$0xff] %v5529
        %5658 = vst [vmem:[%s354 + $0x328] sm:$0xff] %v5530
        %5659 = vst [vmem:[%s354 + $0x330] sm:$0xff] %v5531
        %5660 = vst [vmem:[%s354 + $0x338] sm:$0xff] %v5532
        %5661 = vst [vmem:[%s354 + $0x340] sm:$0xff] %v5533
        %5662 = vst [vmem:[%s354 + $0x348] sm:$0xff] %v5534
        %5663 = vst [vmem:[%s354 + $0x350] sm:$0xff] %v5535
        %5664 = vst [vmem:[%s354 + $0x358] sm:$0xff] %v5536
        %5665 = vst [vmem:[%s354 + $0x360] sm:$0xff] %v5537
        %5666 = vst [vmem:[%s354 + $0x368] sm:$0xff] %v5538
        %5667 = vst [vmem:[%s354 + $0x370] sm:$0xff] %v5539
        %5668 = vst [vmem:[%s354 + $0x378] sm:$0xff] %v5540
        %5669 = vst [vmem:[%s354 + $0x380] sm:$0xff] %v5541
        %5670 = vst [vmem:[%s354 + $0x388] sm:$0xff] %v5542
        %5671 = vst [vmem:[%s354 + $0x390] sm:$0xff] %v5543
        %5672 = vst [vmem:[%s354 + $0x398] sm:$0xff] %v5544
        %5673 = vst [vmem:[%s354 + $0x3a0] sm:$0xff] %v5545
        %5674 = vst [vmem:[%s354 + $0x3a8] sm:$0xff] %v5546
        %5675 = vst [vmem:[%s354 + $0x3b0] sm:$0xff] %v5547
        %5676 = vst [vmem:[%s354 + $0x3b8] sm:$0xff] %v5548
        %5677 = vst [vmem:[%s354 + $0x3c0] sm:$0xff] %v5549
        %5678 = vst [vmem:[%s354 + $0x3c8] sm:$0xff] %v5550
        %5679 = vst [vmem:[%s354 + $0x3d0] sm:$0xff] %v5551
        %5680 = vst [vmem:[%s354 + $0x3d8] sm:$0xff] %v5552
        %5681 = vst [vmem:[%s354 + $0x3e0] sm:$0xff] %v5553
        %5682 = vst [vmem:[%s354 + $0x3e8] sm:$0xff] %v5554
        %5683 = vst [vmem:[%s354 + $0x3f0] sm:$0xff] %v5555
        %5684 = vst [vmem:[%s354 + $0x3f8] sm:$0xff] %v5556
        %s5685 = sand.u32 %s200, 1
        %s5686 = scalar_lea.sflag [#allocation4], %s5685
        %s5687 = sand.u32 %s200, 1
        %s5688 = smul.addr %s5687, 1024
        %s5689 = scalar_lea.vmem [#allocation10], %s5688
        // Predicated region
        $region65: #{tpu_custom_call.1} parent=47 // pred_check
          %p5690 = pneg %p210
        $region66: #{tpu_custom_call.1} parent=47 // pred_check_branch
          %5692 = sbr.rel (%p5690) target = $region68
        $region67: #{tpu_custom_call.1} parent=47 // pred_region
          %s5693 = smul.u32 16, %s31
          %s5695 = ssub.s32 16384, 16384
          %5696 = vsyncadd %s5686, %s5695
          %s5697 = smul.addr %s5693, 8
          %s5698 = smul.addr %s30, 128
          %s5699 = sadd.s32 %s5697, %s5698
          %s5700 = smul.addr %s5699, 128
          %s5701 = scalar_lea.hbm %s7, %s5700
          %s5702 = sshll.u32 %s5689, 4
          %s5703 = int_to_ptr.vmem [resolvable:$true] %s5702
          %5708 = dma.vmem_to_hbm [thread:$0]  %s5703, 16384, %s5701, %s5686, 512, 512, 32
        $region68: #{tpu_custom_call.1} parent=47 // pred_fallthru
          _
      $region48: #{tpu_custom_call.1} parent=5 // pred_fallthru
        _
      %p5709 = scmp.le.s32.totalorder 2, %s21
      // Predicated region
      $region69: #{tpu_custom_call.1} parent=5 // pred_check
        %p5710 = pneg %p5709
      $region70: #{tpu_custom_call.1} parent=5 // pred_check_branch
        %5712 = sbr.rel (%p5710) target = $region72
      $region71: #{tpu_custom_call.1} parent=5 // pred_region
        %s5713 = ssub.s32 %s21, 2
        // Predicated region
        $region73: #{tpu_custom_call.1} parent=71 // pred_check
          %p5714 = pneg %p216
        $region74: #{tpu_custom_call.1} parent=71 // pred_check_branch
          %5716 = sbr.rel (%p5714) target = $region76
        $region75: #{tpu_custom_call.1} parent=71 // pred_region
          %s5717 = sand.u32 %s201, 1
          %s5718 = scalar_lea.sflag [#allocation4], %s5717
          %s5719 = sand.u32 %s201, 1
          %s5720 = smul.addr %s5719, 1024
          %s5721 = scalar_lea.vmem [#allocation10], %s5720
          %5722 = dma.done %s5718, 16384
        $region76: #{tpu_custom_call.1} parent=71 // pred_fallthru
          _
      $region72: #{tpu_custom_call.1} parent=5 // pred_fallthru
        _
    $region6: #{tpu_custom_call.1} parent=1 // loop_footer
      %s25 = sadd.s32 1, %s21
    $region7: #{tpu_custom_call.1} parent=1 // loop_footer_branch
      %20 = sbr.rel target = $region3
    $region8: #{tpu_custom_call.1} parent=1 // loop_exit
      _
    %5723 = vsyncpa [#allocation3], 1
    %s5724 = scalar_lea.sflag [#allocation3], 1
    %5725 = vsyncpa %s5724, 1
    %5726 = vsyncpa [#allocation6], 1
    %5727 = vsyncpa [#allocation9], 1
    %5728 = vsyncpa [#allocation4], 1
    %s5729 = scalar_lea.sflag [#allocation4], 1
    %5730 = vsyncpa %s5729, 1

</llo_original>
